<compile_context>
chip_gen: v7x
topology: tpu7x:2x2x1
jax: 0.10.0
libtpu: 0.0.40
codegen_flags: <defaults>
</compile_context>

<pallas_src>
from functools import partial

import jax
import jax.numpy as jnp
from jax.experimental import pallas as pl
from jax.experimental.pallas import tpu as pltpu


def metanext_block_kernel(x_ref, xc_ref, w_sq_ref, w_bw_ref, w_bh_ref,
                          w1i_ref, w1c_ref, b1_ref, w2_ref, b2_ref, o_ref,
                          *, tile_h, W, c_id, sq_k, band_k, mm_dtype):
    """One (batch, H-tile) per grid step.

    x_ref  : (1, tile_h*W, C)           channels-last, un-padded (identity / residual / fc1)
    xc_ref : (1, tile_h+2p, W+2p, Cc)   zero-padded conv-branch slab (Cc = 3*gc)
    """
    f32 = jnp.float32
    pb = band_k // 2
    Cc = w1c_ref.shape[0]

    # --- token mixer: depthwise taps as static window reads on the padded slab ---
    conv = jnp.zeros((tile_h, W, Cc), f32)
    off = pb - sq_k // 2
    for kh in range(sq_k):                                   # dwconv_hw: k x k
        for kw in range(sq_k):
            win = xc_ref[0, off + kh:off + kh + tile_h, off + kw:off + kw + W, :]
            conv = conv + w_sq_ref[kh * sq_k + kw] * win.astype(f32)
    for kw in range(band_k):                                 # dwconv_w: 1 x K
        win = xc_ref[0, pb:pb + tile_h, kw:kw + W, :]
        conv = conv + w_bw_ref[kw] * win.astype(f32)
    for kh in range(band_k):                                 # dwconv_h: K x 1
        win = xc_ref[0, kh:kh + tile_h, pb:pb + W, :]
        conv = conv + w_bh_ref[kh] * win.astype(f32)
    conv2 = conv.reshape(tile_h * W, Cc)

    # --- ConvMlp fc1 (BatchNorm + branch biases folded into weights / bias) ------
    x_id = x_ref[0, :, :c_id]
    h = (jnp.dot(x_id.astype(mm_dtype), w1i_ref[...], preferred_element_type=f32)
         + jnp.dot(conv2.astype(mm_dtype), w1c_ref[...], preferred_element_type=f32)
         + b1_ref[...])

    # exact-erf GELU (nn.GELU() semantics); tanh-approx would offload to the EUP.
    h = 0.5 * h * (1.0 + jax.lax.erf(h * jnp.float32(0.7071067811865476)))

    # --- fc2 (layer-scale folded into weights / bias) + residual -----------------
    y = jnp.dot(h.astype(mm_dtype), w2_ref[...], preferred_element_type=f32) + b2_ref[...]
    o_ref[0] = (y + x_ref[0].astype(f32)).astype(o_ref.dtype)


def _pick_tile_h(H, W, C, hidden, itemsize=4, budget=4 * 1024 * 1024):
    """Largest divisor of H whose per-tile intermediates fit ~budget (fallback: H)."""
    per_row = max(1, W * (hidden + 2 * C) * itemsize)
    max_rows = max(1, budget // per_row)
    for th in range(min(H, max_rows), 0, -1):
        if H % th == 0 and ((th * W) % 8 == 0 or th == H):
            return th
    return H


def metanext_block(x_nchw,
                   dw_hw_w, dw_hw_b, dw_w_w, dw_w_b, dw_h_w, dw_h_b,
                   bn_w, bn_b, bn_rm, bn_rv,
                   fc1_w, fc1_b, fc2_w, fc2_b, ls_gamma,
                   *, branch_ratio=0.125, bn_eps=1e-5,
                   square_kernel_size=3, band_kernel_size=11,
                   tile_h=None, mm_dtype=jnp.bfloat16):
    B, C, H, W = x_nchw.shape
    gc = int(C * branch_ratio)
    assert gc >= 1, "need C * branch_ratio >= 1"
    c_id = C - 3 * gc
    assert c_id >= 1, "kernel assumes at least one identity channel"
    Cc = 3 * gc
    hidden = fc1_w.shape[0]
    sq_k, band_k = square_kernel_size, band_kernel_size
    pb = band_k // 2
    f32 = jnp.float32

    if tile_h is None:
        tile_h = _pick_tile_h(H, W, C, hidden)
    assert H % tile_h == 0, "tile_h must divide H"
    nT = H // tile_h
    TM = tile_h * W
    assert TM % 8 == 0 or nT == 1, "tile_h*W must be a multiple of 8 (or a single tile)"

    # ---- layout prep (pure glue, outside the kernel) --------------------------------
    x_nhwc = jnp.transpose(x_nchw, (0, 2, 3, 1))               # (B, H, W, C) lane-dense C
    x_flat = x_nhwc.reshape(B, H * W, C)

    # Zero-padded conv-branch slab, pre-tiled with halo rows (pb on each side).
    xc_pad = jnp.pad(x_nhwc[..., c_id:], ((0, 0), (pb, pb), (pb, pb), (0, 0)))
    xc_tiles = jnp.stack(
        [xc_pad[:, t * tile_h: t * tile_h + tile_h + 2 * pb] for t in range(nT)],
        axis=1).reshape(B * nT, tile_h + 2 * pb, W + 2 * pb, Cc)

    # Tap weights, masked per branch inside the Cc-wide slab (rank-matched for broadcast).
    w_sq = jnp.zeros((sq_k * sq_k, 1, 1, Cc), f32).at[:, 0, 0, :gc].set(
        jnp.transpose(dw_hw_w[:, 0], (1, 2, 0)).reshape(sq_k * sq_k, gc))
    w_bw = jnp.zeros((band_k, 1, 1, Cc), f32).at[:, 0, 0, gc:2 * gc].set(
        jnp.transpose(dw_w_w[:, 0, 0], (1, 0)))
    w_bh = jnp.zeros((band_k, 1, 1, Cc), f32).at[:, 0, 0, 2 * gc:3 * gc].set(
        jnp.transpose(dw_h_w[:, 0, :, 0], (1, 0)))

    # Fold BatchNorm (running stats), branch biases and layer-scale into fc1/fc2.
    inv_std = 1.0 / jnp.sqrt(bn_rv.astype(f32) + bn_eps)
    bn_s = bn_w.astype(f32) * inv_std                          # (C,)
    bn_t = bn_b.astype(f32) - bn_rm.astype(f32) * bn_s         # (C,)
    b_br = jnp.concatenate([dw_hw_b, dw_w_b, dw_h_b]).astype(f32)   # (Cc,)

    w1 = jnp.transpose(fc1_w[:, :, 0, 0], (1, 0)).astype(f32)  # (C, hidden)
    w1_id = (bn_s[:c_id, None] * w1[:c_id]).astype(mm_dtype)   # (c_id, hidden)
    w1_cv = (bn_s[c_id:, None] * w1[c_id:]).astype(mm_dtype)   # (Cc, hidden)
    b1_eff = (fc1_b.astype(f32)
              + bn_t[:c_id] @ w1[:c_id]
              + (bn_t[c_id:] + b_br * bn_s[c_id:]) @ w1[c_id:]).reshape(1, hidden)

    ls = ls_gamma.astype(f32)
    w2 = jnp.transpose(fc2_w[:, :, 0, 0], (1, 0)).astype(f32)  # (hidden, C)
    w2_eff = (w2 * ls[None, :]).astype(mm_dtype)
    b2_eff = (fc2_b.astype(f32) * ls).reshape(1, C)

    # Generation-aware VMEM limit (128 MiB physical on v5e/v6e, 64 MiB on v7x).
    try:
        vmem_cap = pltpu.get_tpu_info().vmem_capacity_bytes
    except Exception:
        vmem_cap = 64 * 1024 * 1024
    vmem_limit = min(int(0.75 * vmem_cap), 100 * 1024 * 1024)

    const2 = lambda b, t: (0, 0)
    const4 = lambda b, t: (0, 0, 0, 0)
    out = pl.pallas_call(
        partial(metanext_block_kernel, tile_h=tile_h, W=W, c_id=c_id,
                sq_k=sq_k, band_k=band_k, mm_dtype=mm_dtype),
        out_shape=jax.ShapeDtypeStruct((B, H * W, C), x_nchw.dtype),
        grid=(B, nT),
        in_specs=[
            pl.BlockSpec((1, TM, C), lambda b, t: (b, t, 0)),                  # x tile
            pl.BlockSpec((1, tile_h + 2 * pb, W + 2 * pb, Cc),
                         lambda b, t: (b * nT + t, 0, 0, 0)),                  # padded conv slab
            pl.BlockSpec((sq_k * sq_k, 1, 1, Cc), const4),                     # 3x3 taps
            pl.BlockSpec((band_k, 1, 1, Cc), const4),                          # 1xK taps
            pl.BlockSpec((band_k, 1, 1, Cc), const4),                          # Kx1 taps
            pl.BlockSpec((c_id, hidden), const2),                              # fc1 (identity rows)
            pl.BlockSpec((Cc, hidden), const2),                                # fc1 (conv rows)
            pl.BlockSpec((1, hidden), const2),                                 # fc1 bias (folded)
            pl.BlockSpec((hidden, C), const2),                                 # fc2 weight (ls folded)
            pl.BlockSpec((1, C), const2),                                      # fc2 bias (ls folded)
        ],
        out_specs=pl.BlockSpec((1, TM, C), lambda b, t: (b, t, 0)),
        compiler_params=pltpu.CompilerParams(
            dimension_semantics=("parallel", "parallel"),
            vmem_limit_bytes=vmem_limit),
    )(x_flat, xc_tiles, w_sq, w_bw, w_bh, w1_id, w1_cv, b1_eff, w2_eff, b2_eff)

    return jnp.transpose(out.reshape(B, H, W, C), (0, 3, 1, 2))


def metanext_block_ref(x, dw_hw_w, dw_hw_b, dw_w_w, dw_w_b, dw_h_w, dw_h_b,
                       bn_w, bn_b, bn_rm, bn_rv,
                       fc1_w, fc1_b, fc2_w, fc2_b, ls_gamma,
                       *, branch_ratio=0.125, bn_eps=1e-5):
    """Pure-JAX fp32 reference matching the PyTorch forward (eval mode)."""
    B, C, H, W = x.shape
    gc = int(C * branch_ratio)
    c_id = C - 3 * gc
    hp = jax.lax.Precision.HIGHEST

    x_id = x[:, :c_id]
    x_hw = x[:, c_id:c_id + gc]
    x_w = x[:, c_id + gc:c_id + 2 * gc]
    x_h = x[:, c_id + 2 * gc:c_id + 3 * gc]

    def dwconv(v, w, b, pad):
        out = jax.lax.conv_general_dilated(
            v, w, window_strides=(1, 1), padding=pad,
            dimension_numbers=("NCHW", "OIHW", "NCHW"),
            feature_group_count=gc, precision=hp)
        return out + b.reshape(1, -1, 1, 1)

    m = jnp.concatenate([
        x_id,
        dwconv(x_hw, dw_hw_w, dw_hw_b, ((1, 1), (1, 1))),
        dwconv(x_w, dw_w_w, dw_w_b, ((0, 0), (5, 5))),
        dwconv(x_h, dw_h_w, dw_h_b, ((5, 5), (0, 0))),
    ], axis=1)

    xn = ((m - bn_rm.reshape(1, -1, 1, 1))
          / jnp.sqrt(bn_rv.reshape(1, -1, 1, 1) + bn_eps)
          * bn_w.reshape(1, -1, 1, 1) + bn_b.reshape(1, -1, 1, 1))

    h = jnp.einsum("bchw,kc->bkhw", xn, fc1_w[:, :, 0, 0], precision=hp)
    h = h + fc1_b.reshape(1, -1, 1, 1)
    h = 0.5 * h * (1.0 + jax.lax.erf(h / jnp.sqrt(jnp.float32(2.0))))
    y = jnp.einsum("bkhw,ck->bchw", h, fc2_w[:, :, 0, 0], precision=hp)
    y = y + fc2_b.reshape(1, -1, 1, 1)
    return y * ls_gamma.reshape(1, -1, 1, 1) + x


if __name__ == "__main__":
    f32 = jnp.float32

    def make_params(key, dim, hidden, gc):
        ks = jax.random.split(key, 15)
        return dict(
            dw_hw_w=0.2 * jax.random.normal(ks[0], (gc, 1, 3, 3), f32),
            dw_hw_b=0.1 * jax.random.normal(ks[1], (gc,), f32),
            dw_w_w=0.2 * jax.random.normal(ks[2], (gc, 1, 1, 11), f32),
            dw_w_b=0.1 * jax.random.normal(ks[3], (gc,), f32),
            dw_h_w=0.2 * jax.random.normal(ks[4], (gc, 1, 11, 1), f32),
            dw_h_b=0.1 * jax.random.normal(ks[5], (gc,), f32),
            bn_w=1.0 + 0.1 * jax.random.normal(ks[6], (dim,), f32),
            bn_b=0.1 * jax.random.normal(ks[7], (dim,), f32),
            bn_rm=0.1 * jax.random.normal(ks[8], (dim,), f32),
            bn_rv=jax.random.uniform(ks[9], (dim,), f32, 0.5, 1.5),
            fc1_w=0.1 * jax.random.normal(ks[10], (hidden, dim, 1, 1), f32),
            fc1_b=0.1 * jax.random.normal(ks[11], (hidden,), f32),
            fc2_w=0.1 * jax.random.normal(ks[12], (dim, hidden, 1, 1), f32),
            fc2_b=0.1 * jax.random.normal(ks[13], (dim,), f32),
            # "trained" layer-scale so the MLP branch contributes meaningfully
            ls_gamma=0.5 + 0.1 * jax.random.normal(ks[14], (dim,), f32),
        )

    def run_case(name, key, B, dim, H, W, tile_h):
        hidden = 4 * dim
        gc = int(dim * 0.125)
        kx, kp = jax.random.split(key)
        x = jax.random.normal(kx, (B, dim, H, W), f32)
        p = make_params(kp, dim, hidden, gc)
        out = jax.block_until_ready(metanext_block(x, **p, tile_h=tile_h))
        ref = metanext_block_ref(x, **p)
        assert out.shape == x.shape
        err = float(jnp.max(jnp.abs(out - ref)))
        # bf16 matmuls (f32 accumulation) vs fp32/exact-erf reference -> loose tolerance
        assert jnp.allclose(out, ref, atol=2e-2, rtol=2e-2), f"{name}: max |err| = {err}"

    # Case 1: batch=2, dim=16 (gc=2, split 10/2/2/2), 16x16, 2 H-tiles.
    run_case("case1", jax.random.PRNGKey(0), B=2, dim=16, H=16, W=16, tile_h=8)
    # Case 2: batch=1, dim=32 (gc=4), non-square 12x24, 3 H-tiles (halo + B=1 path).
    run_case("case2", jax.random.PRNGKey(1), B=1, dim=32, H=12, W=24, tile_h=4)

    print("KERNEL_OK")
</pallas_src>

<mosaic_0001>
module attributes {stable_mosaic.version = 11 : i64} {
  func.func @metanext_block_kernel(%arg0: i32, %arg1: i32, %arg2: memref<1x128x16xf32, #tpu.memory_space<vmem>>, %arg3: memref<1x18x26x6xf32, #tpu.memory_space<vmem>>, %arg4: memref<9x1x1x6xf32, #tpu.memory_space<vmem>>, %arg5: memref<11x1x1x6xf32, #tpu.memory_space<vmem>>, %arg6: memref<11x1x1x6xf32, #tpu.memory_space<vmem>>, %arg7: memref<10x64xbf16, #tpu.memory_space<vmem>>, %arg8: memref<6x64xbf16, #tpu.memory_space<vmem>>, %arg9: memref<1x64xf32, #tpu.memory_space<vmem>>, %arg10: memref<64x16xbf16, #tpu.memory_space<vmem>>, %arg11: memref<1x16xf32, #tpu.memory_space<vmem>>, %arg12: memref<1x128x16xf32, #tpu.memory_space<vmem>>) attributes {dimension_semantics = [#tpu.dimension_semantics<parallel>, #tpu.dimension_semantics<parallel>], iteration_bounds = array<i64: 2, 2>, scalar_prefetch = 0 : i64, scratch_operands = 0 : i64, tpu.core_type = #tpu.core_type<tc>, window_params = [{transform_indices = @transform_0, window_bounds = array<i64: 1, 128, 16>}, {transform_indices = @transform_1, window_bounds = array<i64: 1, 18, 26, 6>}, {pipeline_mode = #tpu.pipeline_mode<synchronous>, transform_indices = @transform_2, window_bounds = array<i64: 9, 1, 1, 6>}, {pipeline_mode = #tpu.pipeline_mode<synchronous>, transform_indices = @transform_3, window_bounds = array<i64: 11, 1, 1, 6>}, {pipeline_mode = #tpu.pipeline_mode<synchronous>, transform_indices = @transform_4, window_bounds = array<i64: 11, 1, 1, 6>}, {pipeline_mode = #tpu.pipeline_mode<synchronous>, transform_indices = @transform_5, window_bounds = array<i64: 10, 64>}, {pipeline_mode = #tpu.pipeline_mode<synchronous>, transform_indices = @transform_6, window_bounds = array<i64: 6, 64>}, {pipeline_mode = #tpu.pipeline_mode<synchronous>, transform_indices = @transform_7, window_bounds = array<i64: 1, 64>}, {pipeline_mode = #tpu.pipeline_mode<synchronous>, transform_indices = @transform_8, window_bounds = array<i64: 64, 16>}, {pipeline_mode = #tpu.pipeline_mode<synchronous>, transform_indices = @transform_9, window_bounds = array<i64: 1, 16>}, {transform_indices = @transform_10, window_bounds = array<i64: 1, 128, 16>}]} {
    %cst = arith.constant 0.000000e+00 : f32
    %0 = vector.broadcast %cst : f32 to vector<8x16x6xf32>
    %c0 = arith.constant 0 : index
    %c4 = arith.constant 4 : index
    %c4_0 = arith.constant 4 : index
    %c0_1 = arith.constant 0 : index
    %1 = vector.load %arg3[%c0, %c4, %c4_0, %c0_1] : memref<1x18x26x6xf32, #tpu.memory_space<vmem>>, vector<1x8x16x6xf32>
    %2 = vector.shape_cast %1 : vector<1x8x16x6xf32> to vector<8x16x6xf32>
    %c0_2 = arith.constant 0 : index
    %c0_3 = arith.constant 0 : index
    %c0_4 = arith.constant 0 : index
    %c0_5 = arith.constant 0 : index
    %3 = vector.load %arg4[%c0_2, %c0_3, %c0_4, %c0_5] : memref<9x1x1x6xf32, #tpu.memory_space<vmem>>, vector<1x1x1x6xf32>
    %4 = vector.shape_cast %3 : vector<1x1x1x6xf32> to vector<1x1x6xf32>
    %5 = vector.broadcast %4 : vector<1x1x6xf32> to vector<8x16x6xf32>
    %6 = arith.mulf %5, %2 : vector<8x16x6xf32>
    %7 = arith.addf %0, %6 : vector<8x16x6xf32>
    %c0_6 = arith.constant 0 : index
    %c4_7 = arith.constant 4 : index
    %c5 = arith.constant 5 : index
    %c0_8 = arith.constant 0 : index
    %8 = vector.load %arg3[%c0_6, %c4_7, %c5, %c0_8] : memref<1x18x26x6xf32, #tpu.memory_space<vmem>>, vector<1x8x16x6xf32>
    %9 = vector.shape_cast %8 : vector<1x8x16x6xf32> to vector<8x16x6xf32>
    %c1 = arith.constant 1 : index
    %c0_9 = arith.constant 0 : index
    %c0_10 = arith.constant 0 : index
    %c0_11 = arith.constant 0 : index
    %10 = vector.load %arg4[%c1, %c0_9, %c0_10, %c0_11] : memref<9x1x1x6xf32, #tpu.memory_space<vmem>>, vector<1x1x1x6xf32>
    %11 = vector.shape_cast %10 : vector<1x1x1x6xf32> to vector<1x1x6xf32>
    %12 = vector.broadcast %11 : vector<1x1x6xf32> to vector<8x16x6xf32>
    %13 = arith.mulf %12, %9 : vector<8x16x6xf32>
    %14 = arith.addf %7, %13 : vector<8x16x6xf32>
    %c0_12 = arith.constant 0 : index
    %c4_13 = arith.constant 4 : index
    %c6 = arith.constant 6 : index
    %c0_14 = arith.constant 0 : index
    %15 = vector.load %arg3[%c0_12, %c4_13, %c6, %c0_14] : memref<1x18x26x6xf32, #tpu.memory_space<vmem>>, vector<1x8x16x6xf32>
    %16 = vector.shape_cast %15 : vector<1x8x16x6xf32> to vector<8x16x6xf32>
    %c2 = arith.constant 2 : index
    %c0_15 = arith.constant 0 : index
    %c0_16 = arith.constant 0 : index
    %c0_17 = arith.constant 0 : index
    %17 = vector.load %arg4[%c2, %c0_15, %c0_16, %c0_17] : memref<9x1x1x6xf32, #tpu.memory_space<vmem>>, vector<1x1x1x6xf32>
    %18 = vector.shape_cast %17 : vector<1x1x1x6xf32> to vector<1x1x6xf32>
    %19 = vector.broadcast %18 : vector<1x1x6xf32> to vector<8x16x6xf32>
    %20 = arith.mulf %19, %16 : vector<8x16x6xf32>
    %21 = arith.addf %14, %20 : vector<8x16x6xf32>
    %c0_18 = arith.constant 0 : index
    %c5_19 = arith.constant 5 : index
    %c4_20 = arith.constant 4 : index
    %c0_21 = arith.constant 0 : index
    %22 = vector.load %arg3[%c0_18, %c5_19, %c4_20, %c0_21] : memref<1x18x26x6xf32, #tpu.memory_space<vmem>>, vector<1x8x16x6xf32>
    %23 = vector.shape_cast %22 : vector<1x8x16x6xf32> to vector<8x16x6xf32>
    %c3 = arith.constant 3 : index
    %c0_22 = arith.constant 0 : index
    %c0_23 = arith.constant 0 : index
    %c0_24 = arith.constant 0 : index
    %24 = vector.load %arg4[%c3, %c0_22, %c0_23, %c0_24] : memref<9x1x1x6xf32, #tpu.memory_space<vmem>>, vector<1x1x1x6xf32>
    %25 = vector.shape_cast %24 : vector<1x1x1x6xf32> to vector<1x1x6xf32>
    %26 = vector.broadcast %25 : vector<1x1x6xf32> to vector<8x16x6xf32>
    %27 = arith.mulf %26, %23 : vector<8x16x6xf32>
    %28 = arith.addf %21, %27 : vector<8x16x6xf32>
    %c0_25 = arith.constant 0 : index
    %c5_26 = arith.constant 5 : index
    %c5_27 = arith.constant 5 : index
    %c0_28 = arith.constant 0 : index
    %29 = vector.load %arg3[%c0_25, %c5_26, %c5_27, %c0_28] : memref<1x18x26x6xf32, #tpu.memory_space<vmem>>, vector<1x8x16x6xf32>
    %30 = vector.shape_cast %29 : vector<1x8x16x6xf32> to vector<8x16x6xf32>
    %c4_29 = arith.constant 4 : index
    %c0_30 = arith.constant 0 : index
    %c0_31 = arith.constant 0 : index
    %c0_32 = arith.constant 0 : index
    %31 = vector.load %arg4[%c4_29, %c0_30, %c0_31, %c0_32] : memref<9x1x1x6xf32, #tpu.memory_space<vmem>>, vector<1x1x1x6xf32>
    %32 = vector.shape_cast %31 : vector<1x1x1x6xf32> to vector<1x1x6xf32>
    %33 = vector.broadcast %32 : vector<1x1x6xf32> to vector<8x16x6xf32>
    %34 = arith.mulf %33, %30 : vector<8x16x6xf32>
    %35 = arith.addf %28, %34 : vector<8x16x6xf32>
    %c0_33 = arith.constant 0 : index
    %c5_34 = arith.constant 5 : index
    %c6_35 = arith.constant 6 : index
    %c0_36 = arith.constant 0 : index
    %36 = vector.load %arg3[%c0_33, %c5_34, %c6_35, %c0_36] : memref<1x18x26x6xf32, #tpu.memory_space<vmem>>, vector<1x8x16x6xf32>
    %37 = vector.shape_cast %36 : vector<1x8x16x6xf32> to vector<8x16x6xf32>
    %c5_37 = arith.constant 5 : index
    %c0_38 = arith.constant 0 : index
    %c0_39 = arith.constant 0 : index
    %c0_40 = arith.constant 0 : index
    %38 = vector.load %arg4[%c5_37, %c0_38, %c0_39, %c0_40] : memref<9x1x1x6xf32, #tpu.memory_space<vmem>>, vector<1x1x1x6xf32>
    %39 = vector.shape_cast %38 : vector<1x1x1x6xf32> to vector<1x1x6xf32>
    %40 = vector.broadcast %39 : vector<1x1x6xf32> to vector<8x16x6xf32>
    %41 = arith.mulf %40, %37 : vector<8x16x6xf32>
    %42 = arith.addf %35, %41 : vector<8x16x6xf32>
    %c0_41 = arith.constant 0 : index
    %c6_42 = arith.constant 6 : index
    %c4_43 = arith.constant 4 : index
    %c0_44 = arith.constant 0 : index
    %43 = vector.load %arg3[%c0_41, %c6_42, %c4_43, %c0_44] : memref<1x18x26x6xf32, #tpu.memory_space<vmem>>, vector<1x8x16x6xf32>
    %44 = vector.shape_cast %43 : vector<1x8x16x6xf32> to vector<8x16x6xf32>
    %c6_45 = arith.constant 6 : index
    %c0_46 = arith.constant 0 : index
    %c0_47 = arith.constant 0 : index
    %c0_48 = arith.constant 0 : index
    %45 = vector.load %arg4[%c6_45, %c0_46, %c0_47, %c0_48] : memref<9x1x1x6xf32, #tpu.memory_space<vmem>>, vector<1x1x1x6xf32>
    %46 = vector.shape_cast %45 : vector<1x1x1x6xf32> to vector<1x1x6xf32>
    %47 = vector.broadcast %46 : vector<1x1x6xf32> to vector<8x16x6xf32>
    %48 = arith.mulf %47, %44 : vector<8x16x6xf32>
    %49 = arith.addf %42, %48 : vector<8x16x6xf32>
    %c0_49 = arith.constant 0 : index
    %c6_50 = arith.constant 6 : index
    %c5_51 = arith.constant 5 : index
    %c0_52 = arith.constant 0 : index
    %50 = vector.load %arg3[%c0_49, %c6_50, %c5_51, %c0_52] : memref<1x18x26x6xf32, #tpu.memory_space<vmem>>, vector<1x8x16x6xf32>
    %51 = vector.shape_cast %50 : vector<1x8x16x6xf32> to vector<8x16x6xf32>
    %c7 = arith.constant 7 : index
    %c0_53 = arith.constant 0 : index
    %c0_54 = arith.constant 0 : index
    %c0_55 = arith.constant 0 : index
    %52 = vector.load %arg4[%c7, %c0_53, %c0_54, %c0_55] : memref<9x1x1x6xf32, #tpu.memory_space<vmem>>, vector<1x1x1x6xf32>
    %53 = vector.shape_cast %52 : vector<1x1x1x6xf32> to vector<1x1x6xf32>
    %54 = vector.broadcast %53 : vector<1x1x6xf32> to vector<8x16x6xf32>
    %55 = arith.mulf %54, %51 : vector<8x16x6xf32>
    %56 = arith.addf %49, %55 : vector<8x16x6xf32>
    %c0_56 = arith.constant 0 : index
    %c6_57 = arith.constant 6 : index
    %c6_58 = arith.constant 6 : index
    %c0_59 = arith.constant 0 : index
    %57 = vector.load %arg3[%c0_56, %c6_57, %c6_58, %c0_59] : memref<1x18x26x6xf32, #tpu.memory_space<vmem>>, vector<1x8x16x6xf32>
    %58 = vector.shape_cast %57 : vector<1x8x16x6xf32> to vector<8x16x6xf32>
    %c8 = arith.constant 8 : index
    %c0_60 = arith.constant 0 : index
    %c0_61 = arith.constant 0 : index
    %c0_62 = arith.constant 0 : index
    %59 = vector.load %arg4[%c8, %c0_60, %c0_61, %c0_62] : memref<9x1x1x6xf32, #tpu.memory_space<vmem>>, vector<1x1x1x6xf32>
    %60 = vector.shape_cast %59 : vector<1x1x1x6xf32> to vector<1x1x6xf32>
    %61 = vector.broadcast %60 : vector<1x1x6xf32> to vector<8x16x6xf32>
    %62 = arith.mulf %61, %58 : vector<8x16x6xf32>
    %63 = arith.addf %56, %62 : vector<8x16x6xf32>
    %c0_63 = arith.constant 0 : index
    %c5_64 = arith.constant 5 : index
    %c0_65 = arith.constant 0 : index
    %c0_66 = arith.constant 0 : index
    %64 = vector.load %arg3[%c0_63, %c5_64, %c0_65, %c0_66] : memref<1x18x26x6xf32, #tpu.memory_space<vmem>>, vector<1x8x16x6xf32>
    %65 = vector.shape_cast %64 : vector<1x8x16x6xf32> to vector<8x16x6xf32>
    %c0_67 = arith.constant 0 : index
    %c0_68 = arith.constant 0 : index
    %c0_69 = arith.constant 0 : index
    %c0_70 = arith.constant 0 : index
    %66 = vector.load %arg5[%c0_67, %c0_68, %c0_69, %c0_70] : memref<11x1x1x6xf32, #tpu.memory_space<vmem>>, vector<1x1x1x6xf32>
    %67 = vector.shape_cast %66 : vector<1x1x1x6xf32> to vector<1x1x6xf32>
    %68 = vector.broadcast %67 : vector<1x1x6xf32> to vector<8x16x6xf32>
    %69 = arith.mulf %68, %65 : vector<8x16x6xf32>
    %70 = arith.addf %63, %69 : vector<8x16x6xf32>
    %c0_71 = arith.constant 0 : index
    %c5_72 = arith.constant 5 : index
    %c1_73 = arith.constant 1 : index
    %c0_74 = arith.constant 0 : index
    %71 = vector.load %arg3[%c0_71, %c5_72, %c1_73, %c0_74] : memref<1x18x26x6xf32, #tpu.memory_space<vmem>>, vector<1x8x16x6xf32>
    %72 = vector.shape_cast %71 : vector<1x8x16x6xf32> to vector<8x16x6xf32>
    %c1_75 = arith.constant 1 : index
    %c0_76 = arith.constant 0 : index
    %c0_77 = arith.constant 0 : index
    %c0_78 = arith.constant 0 : index
    %73 = vector.load %arg5[%c1_75, %c0_76, %c0_77, %c0_78] : memref<11x1x1x6xf32, #tpu.memory_space<vmem>>, vector<1x1x1x6xf32>
    %74 = vector.shape_cast %73 : vector<1x1x1x6xf32> to vector<1x1x6xf32>
    %75 = vector.broadcast %74 : vector<1x1x6xf32> to vector<8x16x6xf32>
    %76 = arith.mulf %75, %72 : vector<8x16x6xf32>
    %77 = arith.addf %70, %76 : vector<8x16x6xf32>
    %c0_79 = arith.constant 0 : index
    %c5_80 = arith.constant 5 : index
    %c2_81 = arith.constant 2 : index
    %c0_82 = arith.constant 0 : index
    %78 = vector.load %arg3[%c0_79, %c5_80, %c2_81, %c0_82] : memref<1x18x26x6xf32, #tpu.memory_space<vmem>>, vector<1x8x16x6xf32>
    %79 = vector.shape_cast %78 : vector<1x8x16x6xf32> to vector<8x16x6xf32>
    %c2_83 = arith.constant 2 : index
    %c0_84 = arith.constant 0 : index
    %c0_85 = arith.constant 0 : index
    %c0_86 = arith.constant 0 : index
    %80 = vector.load %arg5[%c2_83, %c0_84, %c0_85, %c0_86] : memref<11x1x1x6xf32, #tpu.memory_space<vmem>>, vector<1x1x1x6xf32>
    %81 = vector.shape_cast %80 : vector<1x1x1x6xf32> to vector<1x1x6xf32>
    %82 = vector.broadcast %81 : vector<1x1x6xf32> to vector<8x16x6xf32>
    %83 = arith.mulf %82, %79 : vector<8x16x6xf32>
    %84 = arith.addf %77, %83 : vector<8x16x6xf32>
    %c0_87 = arith.constant 0 : index
    %c5_88 = arith.constant 5 : index
    %c3_89 = arith.constant 3 : index
    %c0_90 = arith.constant 0 : index
    %85 = vector.load %arg3[%c0_87, %c5_88, %c3_89, %c0_90] : memref<1x18x26x6xf32, #tpu.memory_space<vmem>>, vector<1x8x16x6xf32>
    %86 = vector.shape_cast %85 : vector<1x8x16x6xf32> to vector<8x16x6xf32>
    %c3_91 = arith.constant 3 : index
    %c0_92 = arith.constant 0 : index
    %c0_93 = arith.constant 0 : index
    %c0_94 = arith.constant 0 : index
    %87 = vector.load %arg5[%c3_91, %c0_92, %c0_93, %c0_94] : memref<11x1x1x6xf32, #tpu.memory_space<vmem>>, vector<1x1x1x6xf32>
    %88 = vector.shape_cast %87 : vector<1x1x1x6xf32> to vector<1x1x6xf32>
    %89 = vector.broadcast %88 : vector<1x1x6xf32> to vector<8x16x6xf32>
    %90 = arith.mulf %89, %86 : vector<8x16x6xf32>
    %91 = arith.addf %84, %90 : vector<8x16x6xf32>
    %c0_95 = arith.constant 0 : index
    %c5_96 = arith.constant 5 : index
    %c4_97 = arith.constant 4 : index
    %c0_98 = arith.constant 0 : index
    %92 = vector.load %arg3[%c0_95, %c5_96, %c4_97, %c0_98] : memref<1x18x26x6xf32, #tpu.memory_space<vmem>>, vector<1x8x16x6xf32>
    %93 = vector.shape_cast %92 : vector<1x8x16x6xf32> to vector<8x16x6xf32>
    %c4_99 = arith.constant 4 : index
    %c0_100 = arith.constant 0 : index
    %c0_101 = arith.constant 0 : index
    %c0_102 = arith.constant 0 : index
    %94 = vector.load %arg5[%c4_99, %c0_100, %c0_101, %c0_102] : memref<11x1x1x6xf32, #tpu.memory_space<vmem>>, vector<1x1x1x6xf32>
    %95 = vector.shape_cast %94 : vector<1x1x1x6xf32> to vector<1x1x6xf32>
    %96 = vector.broadcast %95 : vector<1x1x6xf32> to vector<8x16x6xf32>
    %97 = arith.mulf %96, %93 : vector<8x16x6xf32>
    %98 = arith.addf %91, %97 : vector<8x16x6xf32>
    %c0_103 = arith.constant 0 : index
    %c5_104 = arith.constant 5 : index
    %c5_105 = arith.constant 5 : index
    %c0_106 = arith.constant 0 : index
    %99 = vector.load %arg3[%c0_103, %c5_104, %c5_105, %c0_106] : memref<1x18x26x6xf32, #tpu.memory_space<vmem>>, vector<1x8x16x6xf32>
    %100 = vector.shape_cast %99 : vector<1x8x16x6xf32> to vector<8x16x6xf32>
    %c5_107 = arith.constant 5 : index
    %c0_108 = arith.constant 0 : index
    %c0_109 = arith.constant 0 : index
    %c0_110 = arith.constant 0 : index
    %101 = vector.load %arg5[%c5_107, %c0_108, %c0_109, %c0_110] : memref<11x1x1x6xf32, #tpu.memory_space<vmem>>, vector<1x1x1x6xf32>
    %102 = vector.shape_cast %101 : vector<1x1x1x6xf32> to vector<1x1x6xf32>
    %103 = vector.broadcast %102 : vector<1x1x6xf32> to vector<8x16x6xf32>
    %104 = arith.mulf %103, %100 : vector<8x16x6xf32>
    %105 = arith.addf %98, %104 : vector<8x16x6xf32>
    %c0_111 = arith.constant 0 : index
    %c5_112 = arith.constant 5 : index
    %c6_113 = arith.constant 6 : index
    %c0_114 = arith.constant 0 : index
    %106 = vector.load %arg3[%c0_111, %c5_112, %c6_113, %c0_114] : memref<1x18x26x6xf32, #tpu.memory_space<vmem>>, vector<1x8x16x6xf32>
    %107 = vector.shape_cast %106 : vector<1x8x16x6xf32> to vector<8x16x6xf32>
    %c6_115 = arith.constant 6 : index
    %c0_116 = arith.constant 0 : index
    %c0_117 = arith.constant 0 : index
    %c0_118 = arith.constant 0 : index
    %108 = vector.load %arg5[%c6_115, %c0_116, %c0_117, %c0_118] : memref<11x1x1x6xf32, #tpu.memory_space<vmem>>, vector<1x1x1x6xf32>
    %109 = vector.shape_cast %108 : vector<1x1x1x6xf32> to vector<1x1x6xf32>
    %110 = vector.broadcast %109 : vector<1x1x6xf32> to vector<8x16x6xf32>
    %111 = arith.mulf %110, %107 : vector<8x16x6xf32>
    %112 = arith.addf %105, %111 : vector<8x16x6xf32>
    %c0_119 = arith.constant 0 : index
    %c5_120 = arith.constant 5 : index
    %c7_121 = arith.constant 7 : index
    %c0_122 = arith.constant 0 : index
    %113 = vector.load %arg3[%c0_119, %c5_120, %c7_121, %c0_122] : memref<1x18x26x6xf32, #tpu.memory_space<vmem>>, vector<1x8x16x6xf32>
    %114 = vector.shape_cast %113 : vector<1x8x16x6xf32> to vector<8x16x6xf32>
    %c7_123 = arith.constant 7 : index
    %c0_124 = arith.constant 0 : index
    %c0_125 = arith.constant 0 : index
    %c0_126 = arith.constant 0 : index
    %115 = vector.load %arg5[%c7_123, %c0_124, %c0_125, %c0_126] : memref<11x1x1x6xf32, #tpu.memory_space<vmem>>, vector<1x1x1x6xf32>
    %116 = vector.shape_cast %115 : vector<1x1x1x6xf32> to vector<1x1x6xf32>
    %117 = vector.broadcast %116 : vector<1x1x6xf32> to vector<8x16x6xf32>
    %118 = arith.mulf %117, %114 : vector<8x16x6xf32>
    %119 = arith.addf %112, %118 : vector<8x16x6xf32>
    %c0_127 = arith.constant 0 : index
    %c5_128 = arith.constant 5 : index
    %c8_129 = arith.constant 8 : index
    %c0_130 = arith.constant 0 : index
    %120 = vector.load %arg3[%c0_127, %c5_128, %c8_129, %c0_130] : memref<1x18x26x6xf32, #tpu.memory_space<vmem>>, vector<1x8x16x6xf32>
    %121 = vector.shape_cast %120 : vector<1x8x16x6xf32> to vector<8x16x6xf32>
    %c8_131 = arith.constant 8 : index
    %c0_132 = arith.constant 0 : index
    %c0_133 = arith.constant 0 : index
    %c0_134 = arith.constant 0 : index
    %122 = vector.load %arg5[%c8_131, %c0_132, %c0_133, %c0_134] : memref<11x1x1x6xf32, #tpu.memory_space<vmem>>, vector<1x1x1x6xf32>
    %123 = vector.shape_cast %122 : vector<1x1x1x6xf32> to vector<1x1x6xf32>
    %124 = vector.broadcast %123 : vector<1x1x6xf32> to vector<8x16x6xf32>
    %125 = arith.mulf %124, %121 : vector<8x16x6xf32>
    %126 = arith.addf %119, %125 : vector<8x16x6xf32>
    %c0_135 = arith.constant 0 : index
    %c5_136 = arith.constant 5 : index
    %c9 = arith.constant 9 : index
    %c0_137 = arith.constant 0 : index
    %127 = vector.load %arg3[%c0_135, %c5_136, %c9, %c0_137] : memref<1x18x26x6xf32, #tpu.memory_space<vmem>>, vector<1x8x16x6xf32>
    %128 = vector.shape_cast %127 : vector<1x8x16x6xf32> to vector<8x16x6xf32>
    %c9_138 = arith.constant 9 : index
    %c0_139 = arith.constant 0 : index
    %c0_140 = arith.constant 0 : index
    %c0_141 = arith.constant 0 : index
    %129 = vector.load %arg5[%c9_138, %c0_139, %c0_140, %c0_141] : memref<11x1x1x6xf32, #tpu.memory_space<vmem>>, vector<1x1x1x6xf32>
    %130 = vector.shape_cast %129 : vector<1x1x1x6xf32> to vector<1x1x6xf32>
    %131 = vector.broadcast %130 : vector<1x1x6xf32> to vector<8x16x6xf32>
    %132 = arith.mulf %131, %128 : vector<8x16x6xf32>
    %133 = arith.addf %126, %132 : vector<8x16x6xf32>
    %c0_142 = arith.constant 0 : index
    %c5_143 = arith.constant 5 : index
    %c10 = arith.constant 10 : index
    %c0_144 = arith.constant 0 : index
    %134 = vector.load %arg3[%c0_142, %c5_143, %c10, %c0_144] : memref<1x18x26x6xf32, #tpu.memory_space<vmem>>, vector<1x8x16x6xf32>
    %135 = vector.shape_cast %134 : vector<1x8x16x6xf32> to vector<8x16x6xf32>
    %c10_145 = arith.constant 10 : index
    %c0_146 = arith.constant 0 : index
    %c0_147 = arith.constant 0 : index
    %c0_148 = arith.constant 0 : index
    %136 = vector.load %arg5[%c10_145, %c0_146, %c0_147, %c0_148] : memref<11x1x1x6xf32, #tpu.memory_space<vmem>>, vector<1x1x1x6xf32>
    %137 = vector.shape_cast %136 : vector<1x1x1x6xf32> to vector<1x1x6xf32>
    %138 = vector.broadcast %137 : vector<1x1x6xf32> to vector<8x16x6xf32>
    %139 = arith.mulf %138, %135 : vector<8x16x6xf32>
    %140 = arith.addf %133, %139 : vector<8x16x6xf32>
    %c0_149 = arith.constant 0 : index
    %c0_150 = arith.constant 0 : index
    %c5_151 = arith.constant 5 : index
    %c0_152 = arith.constant 0 : index
    %141 = vector.load %arg3[%c0_149, %c0_150, %c5_151, %c0_152] : memref<1x18x26x6xf32, #tpu.memory_space<vmem>>, vector<1x8x16x6xf32>
    %142 = vector.shape_cast %141 : vector<1x8x16x6xf32> to vector<8x16x6xf32>
    %c0_153 = arith.constant 0 : index
    %c0_154 = arith.constant 0 : index
    %c0_155 = arith.constant 0 : index
    %c0_156 = arith.constant 0 : index
    %143 = vector.load %arg6[%c0_153, %c0_154, %c0_155, %c0_156] : memref<11x1x1x6xf32, #tpu.memory_space<vmem>>, vector<1x1x1x6xf32>
    %144 = vector.shape_cast %143 : vector<1x1x1x6xf32> to vector<1x1x6xf32>
    %145 = vector.broadcast %144 : vector<1x1x6xf32> to vector<8x16x6xf32>
    %146 = arith.mulf %145, %142 : vector<8x16x6xf32>
    %147 = arith.addf %140, %146 : vector<8x16x6xf32>
    %c0_157 = arith.constant 0 : index
    %c1_158 = arith.constant 1 : index
    %c5_159 = arith.constant 5 : index
    %c0_160 = arith.constant 0 : index
    %148 = vector.load %arg3[%c0_157, %c1_158, %c5_159, %c0_160] : memref<1x18x26x6xf32, #tpu.memory_space<vmem>>, vector<1x8x16x6xf32>
    %149 = vector.shape_cast %148 : vector<1x8x16x6xf32> to vector<8x16x6xf32>
    %c1_161 = arith.constant 1 : index
    %c0_162 = arith.constant 0 : index
    %c0_163 = arith.constant 0 : index
    %c0_164 = arith.constant 0 : index
    %150 = vector.load %arg6[%c1_161, %c0_162, %c0_163, %c0_164] : memref<11x1x1x6xf32, #tpu.memory_space<vmem>>, vector<1x1x1x6xf32>
    %151 = vector.shape_cast %150 : vector<1x1x1x6xf32> to vector<1x1x6xf32>
    %152 = vector.broadcast %151 : vector<1x1x6xf32> to vector<8x16x6xf32>
    %153 = arith.mulf %152, %149 : vector<8x16x6xf32>
    %154 = arith.addf %147, %153 : vector<8x16x6xf32>
    %c0_165 = arith.constant 0 : index
    %c2_166 = arith.constant 2 : index
    %c5_167 = arith.constant 5 : index
    %c0_168 = arith.constant 0 : index
    %155 = vector.load %arg3[%c0_165, %c2_166, %c5_167, %c0_168] : memref<1x18x26x6xf32, #tpu.memory_space<vmem>>, vector<1x8x16x6xf32>
    %156 = vector.shape_cast %155 : vector<1x8x16x6xf32> to vector<8x16x6xf32>
    %c2_169 = arith.constant 2 : index
    %c0_170 = arith.constant 0 : index
    %c0_171 = arith.constant 0 : index
    %c0_172 = arith.constant 0 : index
    %157 = vector.load %arg6[%c2_169, %c0_170, %c0_171, %c0_172] : memref<11x1x1x6xf32, #tpu.memory_space<vmem>>, vector<1x1x1x6xf32>
    %158 = vector.shape_cast %157 : vector<1x1x1x6xf32> to vector<1x1x6xf32>
    %159 = vector.broadcast %158 : vector<1x1x6xf32> to vector<8x16x6xf32>
    %160 = arith.mulf %159, %156 : vector<8x16x6xf32>
    %161 = arith.addf %154, %160 : vector<8x16x6xf32>
    %c0_173 = arith.constant 0 : index
    %c3_174 = arith.constant 3 : index
    %c5_175 = arith.constant 5 : index
    %c0_176 = arith.constant 0 : index
    %162 = vector.load %arg3[%c0_173, %c3_174, %c5_175, %c0_176] : memref<1x18x26x6xf32, #tpu.memory_space<vmem>>, vector<1x8x16x6xf32>
    %163 = vector.shape_cast %162 : vector<1x8x16x6xf32> to vector<8x16x6xf32>
    %c3_177 = arith.constant 3 : index
    %c0_178 = arith.constant 0 : index
    %c0_179 = arith.constant 0 : index
    %c0_180 = arith.constant 0 : index
    %164 = vector.load %arg6[%c3_177, %c0_178, %c0_179, %c0_180] : memref<11x1x1x6xf32, #tpu.memory_space<vmem>>, vector<1x1x1x6xf32>
    %165 = vector.shape_cast %164 : vector<1x1x1x6xf32> to vector<1x1x6xf32>
    %166 = vector.broadcast %165 : vector<1x1x6xf32> to vector<8x16x6xf32>
    %167 = arith.mulf %166, %163 : vector<8x16x6xf32>
    %168 = arith.addf %161, %167 : vector<8x16x6xf32>
    %c0_181 = arith.constant 0 : index
    %c4_182 = arith.constant 4 : index
    %c5_183 = arith.constant 5 : index
    %c0_184 = arith.constant 0 : index
    %169 = vector.load %arg3[%c0_181, %c4_182, %c5_183, %c0_184] : memref<1x18x26x6xf32, #tpu.memory_space<vmem>>, vector<1x8x16x6xf32>
    %170 = vector.shape_cast %169 : vector<1x8x16x6xf32> to vector<8x16x6xf32>
    %c4_185 = arith.constant 4 : index
    %c0_186 = arith.constant 0 : index
    %c0_187 = arith.constant 0 : index
    %c0_188 = arith.constant 0 : index
    %171 = vector.load %arg6[%c4_185, %c0_186, %c0_187, %c0_188] : memref<11x1x1x6xf32, #tpu.memory_space<vmem>>, vector<1x1x1x6xf32>
    %172 = vector.shape_cast %171 : vector<1x1x1x6xf32> to vector<1x1x6xf32>
    %173 = vector.broadcast %172 : vector<1x1x6xf32> to vector<8x16x6xf32>
    %174 = arith.mulf %173, %170 : vector<8x16x6xf32>
    %175 = arith.addf %168, %174 : vector<8x16x6xf32>
    %c0_189 = arith.constant 0 : index
    %c5_190 = arith.constant 5 : index
    %c5_191 = arith.constant 5 : index
    %c0_192 = arith.constant 0 : index
    %176 = vector.load %arg3[%c0_189, %c5_190, %c5_191, %c0_192] : memref<1x18x26x6xf32, #tpu.memory_space<vmem>>, vector<1x8x16x6xf32>
    %177 = vector.shape_cast %176 : vector<1x8x16x6xf32> to vector<8x16x6xf32>
    %c5_193 = arith.constant 5 : index
    %c0_194 = arith.constant 0 : index
    %c0_195 = arith.constant 0 : index
    %c0_196 = arith.constant 0 : index
    %178 = vector.load %arg6[%c5_193, %c0_194, %c0_195, %c0_196] : memref<11x1x1x6xf32, #tpu.memory_space<vmem>>, vector<1x1x1x6xf32>
    %179 = vector.shape_cast %178 : vector<1x1x1x6xf32> to vector<1x1x6xf32>
    %180 = vector.broadcast %179 : vector<1x1x6xf32> to vector<8x16x6xf32>
    %181 = arith.mulf %180, %177 : vector<8x16x6xf32>
    %182 = arith.addf %175, %181 : vector<8x16x6xf32>
    %c0_197 = arith.constant 0 : index
    %c6_198 = arith.constant 6 : index
    %c5_199 = arith.constant 5 : index
    %c0_200 = arith.constant 0 : index
    %183 = vector.load %arg3[%c0_197, %c6_198, %c5_199, %c0_200] : memref<1x18x26x6xf32, #tpu.memory_space<vmem>>, vector<1x8x16x6xf32>
    %184 = vector.shape_cast %183 : vector<1x8x16x6xf32> to vector<8x16x6xf32>
    %c6_201 = arith.constant 6 : index
    %c0_202 = arith.constant 0 : index
    %c0_203 = arith.constant 0 : index
    %c0_204 = arith.constant 0 : index
    %185 = vector.load %arg6[%c6_201, %c0_202, %c0_203, %c0_204] : memref<11x1x1x6xf32, #tpu.memory_space<vmem>>, vector<1x1x1x6xf32>
    %186 = vector.shape_cast %185 : vector<1x1x1x6xf32> to vector<1x1x6xf32>
    %187 = vector.broadcast %186 : vector<1x1x6xf32> to vector<8x16x6xf32>
    %188 = arith.mulf %187, %184 : vector<8x16x6xf32>
    %189 = arith.addf %182, %188 : vector<8x16x6xf32>
    %c0_205 = arith.constant 0 : index
    %c7_206 = arith.constant 7 : index
    %c5_207 = arith.constant 5 : index
    %c0_208 = arith.constant 0 : index
    %190 = vector.load %arg3[%c0_205, %c7_206, %c5_207, %c0_208] : memref<1x18x26x6xf32, #tpu.memory_space<vmem>>, vector<1x8x16x6xf32>
    %191 = vector.shape_cast %190 : vector<1x8x16x6xf32> to vector<8x16x6xf32>
    %c7_209 = arith.constant 7 : index
    %c0_210 = arith.constant 0 : index
    %c0_211 = arith.constant 0 : index
    %c0_212 = arith.constant 0 : index
    %192 = vector.load %arg6[%c7_209, %c0_210, %c0_211, %c0_212] : memref<11x1x1x6xf32, #tpu.memory_space<vmem>>, vector<1x1x1x6xf32>
    %193 = vector.shape_cast %192 : vector<1x1x1x6xf32> to vector<1x1x6xf32>
    %194 = vector.broadcast %193 : vector<1x1x6xf32> to vector<8x16x6xf32>
    %195 = arith.mulf %194, %191 : vector<8x16x6xf32>
    %196 = arith.addf %189, %195 : vector<8x16x6xf32>
    %c0_213 = arith.constant 0 : index
    %c8_214 = arith.constant 8 : index
    %c5_215 = arith.constant 5 : index
    %c0_216 = arith.constant 0 : index
    %197 = vector.load %arg3[%c0_213, %c8_214, %c5_215, %c0_216] : memref<1x18x26x6xf32, #tpu.memory_space<vmem>>, vector<1x8x16x6xf32>
    %198 = vector.shape_cast %197 : vector<1x8x16x6xf32> to vector<8x16x6xf32>
    %c8_217 = arith.constant 8 : index
    %c0_218 = arith.constant 0 : index
    %c0_219 = arith.constant 0 : index
    %c0_220 = arith.constant 0 : index
    %199 = vector.load %arg6[%c8_217, %c0_218, %c0_219, %c0_220] : memref<11x1x1x6xf32, #tpu.memory_space<vmem>>, vector<1x1x1x6xf32>
    %200 = vector.shape_cast %199 : vector<1x1x1x6xf32> to vector<1x1x6xf32>
    %201 = vector.broadcast %200 : vector<1x1x6xf32> to vector<8x16x6xf32>
    %202 = arith.mulf %201, %198 : vector<8x16x6xf32>
    %203 = arith.addf %196, %202 : vector<8x16x6xf32>
    %c0_221 = arith.constant 0 : index
    %c9_222 = arith.constant 9 : index
    %c5_223 = arith.constant 5 : index
    %c0_224 = arith.constant 0 : index
    %204 = vector.load %arg3[%c0_221, %c9_222, %c5_223, %c0_224] : memref<1x18x26x6xf32, #tpu.memory_space<vmem>>, vector<1x8x16x6xf32>
    %205 = vector.shape_cast %204 : vector<1x8x16x6xf32> to vector<8x16x6xf32>
    %c9_225 = arith.constant 9 : index
    %c0_226 = arith.constant 0 : index
    %c0_227 = arith.constant 0 : index
    %c0_228 = arith.constant 0 : index
    %206 = vector.load %arg6[%c9_225, %c0_226, %c0_227, %c0_228] : memref<11x1x1x6xf32, #tpu.memory_space<vmem>>, vector<1x1x1x6xf32>
    %207 = vector.shape_cast %206 : vector<1x1x1x6xf32> to vector<1x1x6xf32>
    %208 = vector.broadcast %207 : vector<1x1x6xf32> to vector<8x16x6xf32>
    %209 = arith.mulf %208, %205 : vector<8x16x6xf32>
    %210 = arith.addf %203, %209 : vector<8x16x6xf32>
    %c0_229 = arith.constant 0 : index
    %c10_230 = arith.constant 10 : index
    %c5_231 = arith.constant 5 : index
    %c0_232 = arith.constant 0 : index
    %211 = vector.load %arg3[%c0_229, %c10_230, %c5_231, %c0_232] : memref<1x18x26x6xf32, #tpu.memory_space<vmem>>, vector<1x8x16x6xf32>
    %212 = vector.shape_cast %211 : vector<1x8x16x6xf32> to vector<8x16x6xf32>
    %c10_233 = arith.constant 10 : index
    %c0_234 = arith.constant 0 : index
    %c0_235 = arith.constant 0 : index
    %c0_236 = arith.constant 0 : index
    %213 = vector.load %arg6[%c10_233, %c0_234, %c0_235, %c0_236] : memref<11x1x1x6xf32, #tpu.memory_space<vmem>>, vector<1x1x1x6xf32>
    %214 = vector.shape_cast %213 : vector<1x1x1x6xf32> to vector<1x1x6xf32>
    %215 = vector.broadcast %214 : vector<1x1x6xf32> to vector<8x16x6xf32>
    %216 = arith.mulf %215, %212 : vector<8x16x6xf32>
    %217 = arith.addf %210, %216 : vector<8x16x6xf32>
    %218 = vector.shape_cast %217 : vector<8x16x6xf32> to vector<128x6xf32>
    %c0_237 = arith.constant 0 : index
    %c0_238 = arith.constant 0 : index
    %c0_239 = arith.constant 0 : index
    %219 = vector.load %arg2[%c0_237, %c0_238, %c0_239] : memref<1x128x16xf32, #tpu.memory_space<vmem>>, vector<1x128x10xf32>
    %220 = vector.shape_cast %219 : vector<1x128x10xf32> to vector<128x10xf32>
    %221 = arith.truncf %220 : vector<128x10xf32> to vector<128x10xbf16>
    %c0_240 = arith.constant 0 : index
    %c0_241 = arith.constant 0 : index
    %222 = vector.load %arg7[%c0_240, %c0_241] : memref<10x64xbf16, #tpu.memory_space<vmem>>, vector<10x64xbf16>
    %cst_242 = arith.constant dense<0.000000e+00> : vector<128x64xf32>
    %223 = tpu.matmul %221, %222, %cst_242 {dimension_numbers = #tpu.dot_dimension_numbers<[1], [0], [0], [1], [0, 0, 1, 1], [], []>} : vector<128x10xbf16>, vector<10x64xbf16>, vector<128x64xf32> -> vector<128x64xf32>
    %224 = arith.truncf %218 : vector<128x6xf32> to vector<128x6xbf16>
    %c0_243 = arith.constant 0 : index
    %c0_244 = arith.constant 0 : index
    %225 = vector.load %arg8[%c0_243, %c0_244] : memref<6x64xbf16, #tpu.memory_space<vmem>>, vector<6x64xbf16>
    %cst_245 = arith.constant dense<0.000000e+00> : vector<128x64xf32>
    %226 = tpu.matmul %224, %225, %cst_245 {dimension_numbers = #tpu.dot_dimension_numbers<[1], [0], [0], [1], [0, 0, 1, 1], [], []>} : vector<128x6xbf16>, vector<6x64xbf16>, vector<128x64xf32> -> vector<128x64xf32>
    %227 = arith.addf %223, %226 : vector<128x64xf32>
    %c0_246 = arith.constant 0 : index
    %c0_247 = arith.constant 0 : index
    %228 = vector.load %arg9[%c0_246, %c0_247] : memref<1x64xf32, #tpu.memory_space<vmem>>, vector<1x64xf32>
    %229 = vector.broadcast %228 : vector<1x64xf32> to vector<128x64xf32>
    %230 = arith.addf %227, %229 : vector<128x64xf32>
    %cst_248 = arith.constant 5.000000e-01 : f32
    %231 = vector.broadcast %cst_248 : f32 to vector<128x64xf32>
    %232 = arith.mulf %231, %230 : vector<128x64xf32>
    %cst_249 = arith.constant 0.707106769 : f32
    %233 = vector.broadcast %cst_249 : f32 to vector<128x64xf32>
    %234 = arith.mulf %230, %233 : vector<128x64xf32>
    %235 = math.erf %234 : vector<128x64xf32>
    %cst_250 = arith.constant 1.000000e+00 : f32
    %236 = vector.broadcast %cst_250 : f32 to vector<128x64xf32>
    %237 = arith.addf %236, %235 : vector<128x64xf32>
    %238 = arith.mulf %232, %237 : vector<128x64xf32>
    %239 = arith.truncf %238 : vector<128x64xf32> to vector<128x64xbf16>
    %c0_251 = arith.constant 0 : index
    %c0_252 = arith.constant 0 : index
    %240 = vector.load %arg10[%c0_251, %c0_252] : memref<64x16xbf16, #tpu.memory_space<vmem>>, vector<64x16xbf16>
    %cst_253 = arith.constant dense<0.000000e+00> : vector<128x16xf32>
    %241 = tpu.matmul %239, %240, %cst_253 {dimension_numbers = #tpu.dot_dimension_numbers<[1], [0], [0], [1], [0, 0, 1, 1], [], []>} : vector<128x64xbf16>, vector<64x16xbf16>, vector<128x16xf32> -> vector<128x16xf32>
    %c0_254 = arith.constant 0 : index
    %c0_255 = arith.constant 0 : index
    %242 = vector.load %arg11[%c0_254, %c0_255] : memref<1x16xf32, #tpu.memory_space<vmem>>, vector<1x16xf32>
    %243 = vector.broadcast %242 : vector<1x16xf32> to vector<128x16xf32>
    %244 = arith.addf %241, %243 : vector<128x16xf32>
    %c0_256 = arith.constant 0 : index
    %c0_257 = arith.constant 0 : index
    %c0_258 = arith.constant 0 : index
    %245 = vector.load %arg2[%c0_256, %c0_257, %c0_258] : memref<1x128x16xf32, #tpu.memory_space<vmem>>, vector<1x128x16xf32>
    %246 = vector.shape_cast %245 : vector<1x128x16xf32> to vector<128x16xf32>
    %247 = arith.addf %244, %246 : vector<128x16xf32>
    %c0_259 = arith.constant 0 : index
    %c0_260 = arith.constant 0 : index
    %c0_261 = arith.constant 0 : index
    %248 = vector.load %arg12[%c0_259, %c0_260, %c0_261] : memref<1x128x16xf32, #tpu.memory_space<vmem>>, vector<1x128x16xf32>
    %249 = vector.shape_cast %248 : vector<1x128x16xf32> to vector<128x16xf32>
    %250 = vector.shape_cast %247 : vector<128x16xf32> to vector<1x128x16xf32>
    tpu.vector_store %arg12[%c0_259, %c0_260, %c0_261], %250 {strides = array<i32>} : memref<1x128x16xf32, #tpu.memory_space<vmem>>, vector<1x128x16xf32>,
    return
  }
  func.func @transform_0(%arg0: i32, %arg1: i32) -> (i32, i32, i32) {
    %c0_i32 = arith.constant 0 : i32
    %c0_i32_0 = arith.constant 0 : i32
    return %arg0, %arg1, %c0_i32 : i32, i32, i32
  }
  func.func @transform_1(%arg0: i32, %arg1: i32) -> (i32, i32, i32, i32) {
    %c2_i32 = arith.constant 2 : i32
    %0 = arith.muli %arg0, %c2_i32 : i32
    %1 = arith.addi %0, %arg1 : i32
    %c0_i32 = arith.constant 0 : i32
    %c0_i32_0 = arith.constant 0 : i32
    %c0_i32_1 = arith.constant 0 : i32
    %c0_i32_2 = arith.constant 0 : i32
    return %1, %c0_i32, %c0_i32_0, %c0_i32_1 : i32, i32, i32, i32
  }
  func.func @transform_2(%arg0: i32, %arg1: i32) -> (i32, i32, i32, i32) {
    %c0_i32 = arith.constant 0 : i32
    %c0_i32_0 = arith.constant 0 : i32
    %c0_i32_1 = arith.constant 0 : i32
    %c0_i32_2 = arith.constant 0 : i32
    %c0_i32_3 = arith.constant 0 : i32
    return %c0_i32, %c0_i32_0, %c0_i32_1, %c0_i32_2 : i32, i32, i32, i32
  }
  func.func @transform_3(%arg0: i32, %arg1: i32) -> (i32, i32, i32, i32) {
    %c0_i32 = arith.constant 0 : i32
    %c0_i32_0 = arith.constant 0 : i32
    %c0_i32_1 = arith.constant 0 : i32
    %c0_i32_2 = arith.constant 0 : i32
    %c0_i32_3 = arith.constant 0 : i32
    return %c0_i32, %c0_i32_0, %c0_i32_1, %c0_i32_2 : i32, i32, i32, i32
  }
  func.func @transform_4(%arg0: i32, %arg1: i32) -> (i32, i32, i32, i32) {
    %c0_i32 = arith.constant 0 : i32
    %c0_i32_0 = arith.constant 0 : i32
    %c0_i32_1 = arith.constant 0 : i32
    %c0_i32_2 = arith.constant 0 : i32
    %c0_i32_3 = arith.constant 0 : i32
    return %c0_i32, %c0_i32_0, %c0_i32_1, %c0_i32_2 : i32, i32, i32, i32
  }
  func.func @transform_5(%arg0: i32, %arg1: i32) -> (i32, i32) {
    %c0_i32 = arith.constant 0 : i32
    %c0_i32_0 = arith.constant 0 : i32
    %c0_i32_1 = arith.constant 0 : i32
    return %c0_i32, %c0_i32_0 : i32, i32
  }
  func.func @transform_6(%arg0: i32, %arg1: i32) -> (i32, i32) {
    %c0_i32 = arith.constant 0 : i32
    %c0_i32_0 = arith.constant 0 : i32
    %c0_i32_1 = arith.constant 0 : i32
    return %c0_i32, %c0_i32_0 : i32, i32
  }
  func.func @transform_7(%arg0: i32, %arg1: i32) -> (i32, i32) {
    %c0_i32 = arith.constant 0 : i32
    %c0_i32_0 = arith.constant 0 : i32
    %c0_i32_1 = arith.constant 0 : i32
    return %c0_i32, %c0_i32_0 : i32, i32
  }
  func.func @transform_8(%arg0: i32, %arg1: i32) -> (i32, i32) {
    %c0_i32 = arith.constant 0 : i32
    %c0_i32_0 = arith.constant 0 : i32
    %c0_i32_1 = arith.constant 0 : i32
    return %c0_i32, %c0_i32_0 : i32, i32
  }
  func.func @transform_9(%arg0: i32, %arg1: i32) -> (i32, i32) {
    %c0_i32 = arith.constant 0 : i32
    %c0_i32_0 = arith.constant 0 : i32
    %c0_i32_1 = arith.constant 0 : i32
    return %c0_i32, %c0_i32_0 : i32, i32
  }
  func.func @transform_10(%arg0: i32, %arg1: i32) -> (i32, i32, i32) {
    %c0_i32 = arith.constant 0 : i32
    %c0_i32_0 = arith.constant 0 : i32
    return %arg0, %arg1, %c0_i32 : i32, i32, i32
  }
}

</mosaic_0001>

<llo_original>
// kernel: tpu_custom_call.1
$region0: #{tpu_custom_call.1}
  #allocation0 [shape = 'u32[]', space=smem, size = 0x4, offset = 0x4, fixed_abs, tag = 'smem constant byte address 0x4 - core index']
  #allocation1 [shape = 'u32[144,128]{1,0:T(1,128)}', space=vmem, size = 0x12000, scoped, tag = 'internal scratch']
  %s0 = inlined_call_operand.vmem [shape: f32[2,256,16], index: 0, kind: input, shape index: {}]
  %s1 = inlined_call_operand.vmem [shape: f32[4,18,26,6], index: 1, kind: input, shape index: {}]
  %s2 = inlined_call_operand.vmem [shape: f32[9,1,1,6], index: 2, kind: input, shape index: {}]
  %s3 = inlined_call_operand.vmem [shape: f32[11,1,1,6], index: 3, kind: input, shape index: {}]
  %s4 = inlined_call_operand.vmem [shape: f32[11,1,1,6], index: 4, kind: input, shape index: {}]
  %s5 = inlined_call_operand.vmem [shape: bf16[10,64], index: 5, kind: input, shape index: {}]
  %s6 = inlined_call_operand.vmem [shape: bf16[6,64], index: 6, kind: input, shape index: {}]
  %s7 = inlined_call_operand.vmem [shape: f32[1,64], index: 7, kind: input, shape index: {}]
  %s8 = inlined_call_operand.vmem [shape: bf16[64,16], index: 8, kind: input, shape index: {}]
  %s9 = inlined_call_operand.vmem [shape: f32[1,16], index: 9, kind: input, shape index: {}]
  %s10 = inlined_call_operand.vmem [shape: f32[2,256,16], index: 10, kind: output, shape index: {}]
  %s11 = sld [smem:[#allocation0]]
  $region73: #{tpu_custom_call.1} parent=0
    _
  %s13 = ssub.s32 1, %s11
  %s14 = scalar_select 0, %s13, %s11
  loop: start=0, step=1, limit=6
  $region2: #{tpu_custom_call.1} parent=0 // loop_pre_header
    _
  $region3: #{tpu_custom_call.1} parent=0 // loop_header
    %s16 = sphi 0, %s20
    %p17 = scmp.ge.s32.totalorder %s16, 6
    %s23 = sphi 0, %s35
    %s24 = sphi 0, %s31
    %s25 = sphi 0, %s23
    %s26 = sphi 0, %s24
    %s27 = sphi 0, %s25
    %s28 = sphi 0, %s26
    %s40 = sphi 0, %s42
    %s43 = sphi 0, %s40
    %s44 = sphi 0, %s43
    %s60 = sphi 0, %s44
    %s70 = sphi 0, %s72
    %s73 = sphi 0, %s70
    %s74 = sphi 0, %s73
    %s90 = sphi 0, %s74
    %s94 = sphi 0, %s94
    %s96 = sphi 0, %s94
    %s97 = sphi 0, %s96
    %s111 = sphi 0, %s97
    %s115 = sphi 0, %s115
    %s117 = sphi 0, %s115
    %s118 = sphi 0, %s117
    %s132 = sphi 0, %s118
    %s136 = sphi 0, %s136
    %s138 = sphi 0, %s136
    %s139 = sphi 0, %s138
    %s153 = sphi 0, %s139
    %s157 = sphi 0, %s157
    %s159 = sphi 0, %s157
    %s160 = sphi 0, %s159
    %s174 = sphi 0, %s160
    %s178 = sphi 0, %s178
    %s180 = sphi 0, %s178
    %s181 = sphi 0, %s180
    %s195 = sphi 0, %s181
    %s199 = sphi 0, %s199
    %s201 = sphi 0, %s199
    %s202 = sphi 0, %s201
    %s216 = sphi 0, %s202
    %s220 = sphi 0, %s220
    %s222 = sphi 0, %s220
    %s223 = sphi 0, %s222
    %s237 = sphi 0, %s223
    %s241 = sphi 0, %s241
    %s243 = sphi 0, %s241
    %s244 = sphi 0, %s243
    %s258 = sphi 0, %s244
    %s266 = sphi 0, %s268
    %s269 = sphi 0, %s266
    %s270 = sphi 0, %s269
    %s286 = sphi 0, %s270
  $region4: #{tpu_custom_call.1} parent=0 // loop_header_branch
    %19 = sbr.rel (%p17) target = $region8
  $region5: #{tpu_custom_call.1} parent=0 // loop_body
    %s21 = ssub.s32 %s16, 1
    %s22 = ssub.s32 %s16, 2
    %s29 = sadd.s32 1, %s24
    %p30 = scmp.ge.s32.totalorder %s29, 2
    %s31 = scalar_select %p30, 0, %s29
    %s32 = sadd.s32 1, %s23
    %s33 = scalar_select %p30, %s32, %s23
    %p34 = scmp.ge.s32.totalorder %s33, 2
    %s35 = scalar_select %p34, 0, %s33
    %s36 = ssub.s32 %s23, %s35
    %s37 = ssub.s32 %s24, %s31
    %s38 = sor.u32 %s36, %s37
    %p39 = scmp.eq.s32.totalorder %s38, 0
    %s41 = sadd.s32 %s40, 1
    %s42 = scalar_select %p39, %s40, %s41
    %p45 = pneg %p39
    %p46 = scmp.eq.s32.totalorder %s16, 3
    %p47 = por %p45, %p46
    %p48 = scmp.ne.s32.totalorder %s40, %s43
    %p49 = scmp.eq.s32.totalorder %s16, 0
    %p50 = por %p48, %p49
    %p51 = scmp.ne.s32.totalorder %s40, %s43
    %p52 = scmp.eq.s32.totalorder %s21, 3
    %p53 = por %p51, %p52
    %p54 = scmp.ne.s32.totalorder %s43, %s44
    %p55 = scmp.eq.s32.totalorder %s21, 0
    %p56 = por %p54, %p55
    %p57 = scmp.ne.s32.totalorder %s43, %s44
    %p58 = scmp.eq.s32.totalorder %s22, 3
    %p59 = por %p57, %p58
    %p61 = scmp.ne.s32.totalorder %s44, %s60
    %p62 = scmp.eq.s32.totalorder %s22, 0
    %p63 = por %p61, %p62
    %s64 = smul.u32 %s23, 2
    %s65 = sadd.s32 %s64, %s24
    %s66 = smul.u32 %s35, 2
    %s67 = sadd.s32 %s66, %s31
    %s68 = ssub.s32 %s65, %s67
    %p69 = scmp.eq.s32.totalorder %s68, 0
    %s71 = sadd.s32 %s70, 1
    %s72 = scalar_select %p69, %s70, %s71
    %p75 = pneg %p69
    %p76 = scmp.eq.s32.totalorder %s16, 3
    %p77 = por %p75, %p76
    %p78 = scmp.ne.s32.totalorder %s70, %s73
    %p79 = scmp.eq.s32.totalorder %s16, 0
    %p80 = por %p78, %p79
    %p81 = scmp.ne.s32.totalorder %s70, %s73
    %p82 = scmp.eq.s32.totalorder %s21, 3
    %p83 = por %p81, %p82
    %p84 = scmp.ne.s32.totalorder %s73, %s74
    %p85 = scmp.eq.s32.totalorder %s21, 0
    %p86 = por %p84, %p85
    %p87 = scmp.ne.s32.totalorder %s73, %s74
    %p88 = scmp.eq.s32.totalorder %s22, 3
    %p89 = por %p87, %p88
    %p91 = scmp.ne.s32.totalorder %s74, %s90
    %p92 = scmp.eq.s32.totalorder %s22, 0
    %p93 = por %p91, %p92
    %s95 = sadd.s32 %s94, 1
    %p98 = scmp.eq.s32.totalorder %s16, 3
    %p99 = scmp.ne.s32.totalorder %s94, %s96
    %p100 = scmp.eq.s32.totalorder %s16, 0
    %p101 = por %p99, %p100
    %p102 = scmp.ne.s32.totalorder %s94, %s96
    %p103 = scmp.eq.s32.totalorder %s21, 3
    %p104 = por %p102, %p103
    %p105 = scmp.ne.s32.totalorder %s96, %s97
    %p106 = scmp.eq.s32.totalorder %s21, 0
    %p107 = por %p105, %p106
    %p108 = scmp.ne.s32.totalorder %s96, %s97
    %p109 = scmp.eq.s32.totalorder %s22, 3
    %p110 = por %p108, %p109
    %p112 = scmp.ne.s32.totalorder %s97, %s111
    %p113 = scmp.eq.s32.totalorder %s22, 0
    %p114 = por %p112, %p113
    %s116 = sadd.s32 %s115, 1
    %p119 = scmp.eq.s32.totalorder %s16, 3
    %p120 = scmp.ne.s32.totalorder %s115, %s117
    %p121 = scmp.eq.s32.totalorder %s16, 0
    %p122 = por %p120, %p121
    %p123 = scmp.ne.s32.totalorder %s115, %s117
    %p124 = scmp.eq.s32.totalorder %s21, 3
    %p125 = por %p123, %p124
    %p126 = scmp.ne.s32.totalorder %s117, %s118
    %p127 = scmp.eq.s32.totalorder %s21, 0
    %p128 = por %p126, %p127
    %p129 = scmp.ne.s32.totalorder %s117, %s118
    %p130 = scmp.eq.s32.totalorder %s22, 3
    %p131 = por %p129, %p130
    %p133 = scmp.ne.s32.totalorder %s118, %s132
    %p134 = scmp.eq.s32.totalorder %s22, 0
    %p135 = por %p133, %p134
    %s137 = sadd.s32 %s136, 1
    %p140 = scmp.eq.s32.totalorder %s16, 3
    %p141 = scmp.ne.s32.totalorder %s136, %s138
    %p142 = scmp.eq.s32.totalorder %s16, 0
    %p143 = por %p141, %p142
    %p144 = scmp.ne.s32.totalorder %s136, %s138
    %p145 = scmp.eq.s32.totalorder %s21, 3
    %p146 = por %p144, %p145
    %p147 = scmp.ne.s32.totalorder %s138, %s139
    %p148 = scmp.eq.s32.totalorder %s21, 0
    %p149 = por %p147, %p148
    %p150 = scmp.ne.s32.totalorder %s138, %s139
    %p151 = scmp.eq.s32.totalorder %s22, 3
    %p152 = por %p150, %p151
    %p154 = scmp.ne.s32.totalorder %s139, %s153
    %p155 = scmp.eq.s32.totalorder %s22, 0
    %p156 = por %p154, %p155
    %s158 = sadd.s32 %s157, 1
    %p161 = scmp.eq.s32.totalorder %s16, 3
    %p162 = scmp.ne.s32.totalorder %s157, %s159
    %p163 = scmp.eq.s32.totalorder %s16, 0
    %p164 = por %p162, %p163
    %p165 = scmp.ne.s32.totalorder %s157, %s159
    %p166 = scmp.eq.s32.totalorder %s21, 3
    %p167 = por %p165, %p166
    %p168 = scmp.ne.s32.totalorder %s159, %s160
    %p169 = scmp.eq.s32.totalorder %s21, 0
    %p170 = por %p168, %p169
    %p171 = scmp.ne.s32.totalorder %s159, %s160
    %p172 = scmp.eq.s32.totalorder %s22, 3
    %p173 = por %p171, %p172
    %p175 = scmp.ne.s32.totalorder %s160, %s174
    %p176 = scmp.eq.s32.totalorder %s22, 0
    %p177 = por %p175, %p176
    %s179 = sadd.s32 %s178, 1
    %p182 = scmp.eq.s32.totalorder %s16, 3
    %p183 = scmp.ne.s32.totalorder %s178, %s180
    %p184 = scmp.eq.s32.totalorder %s16, 0
    %p185 = por %p183, %p184
    %p186 = scmp.ne.s32.totalorder %s178, %s180
    %p187 = scmp.eq.s32.totalorder %s21, 3
    %p188 = por %p186, %p187
    %p189 = scmp.ne.s32.totalorder %s180, %s181
    %p190 = scmp.eq.s32.totalorder %s21, 0
    %p191 = por %p189, %p190
    %p192 = scmp.ne.s32.totalorder %s180, %s181
    %p193 = scmp.eq.s32.totalorder %s22, 3
    %p194 = por %p192, %p193
    %p196 = scmp.ne.s32.totalorder %s181, %s195
    %p197 = scmp.eq.s32.totalorder %s22, 0
    %p198 = por %p196, %p197
    %s200 = sadd.s32 %s199, 1
    %p203 = scmp.eq.s32.totalorder %s16, 3
    %p204 = scmp.ne.s32.totalorder %s199, %s201
    %p205 = scmp.eq.s32.totalorder %s16, 0
    %p206 = por %p204, %p205
    %p207 = scmp.ne.s32.totalorder %s199, %s201
    %p208 = scmp.eq.s32.totalorder %s21, 3
    %p209 = por %p207, %p208
    %p210 = scmp.ne.s32.totalorder %s201, %s202
    %p211 = scmp.eq.s32.totalorder %s21, 0
    %p212 = por %p210, %p211
    %p213 = scmp.ne.s32.totalorder %s201, %s202
    %p214 = scmp.eq.s32.totalorder %s22, 3
    %p215 = por %p213, %p214
    %p217 = scmp.ne.s32.totalorder %s202, %s216
    %p218 = scmp.eq.s32.totalorder %s22, 0
    %p219 = por %p217, %p218
    %s221 = sadd.s32 %s220, 1
    %p224 = scmp.eq.s32.totalorder %s16, 3
    %p225 = scmp.ne.s32.totalorder %s220, %s222
    %p226 = scmp.eq.s32.totalorder %s16, 0
    %p227 = por %p225, %p226
    %p228 = scmp.ne.s32.totalorder %s220, %s222
    %p229 = scmp.eq.s32.totalorder %s21, 3
    %p230 = por %p228, %p229
    %p231 = scmp.ne.s32.totalorder %s222, %s223
    %p232 = scmp.eq.s32.totalorder %s21, 0
    %p233 = por %p231, %p232
    %p234 = scmp.ne.s32.totalorder %s222, %s223
    %p235 = scmp.eq.s32.totalorder %s22, 3
    %p236 = por %p234, %p235
    %p238 = scmp.ne.s32.totalorder %s223, %s237
    %p239 = scmp.eq.s32.totalorder %s22, 0
    %p240 = por %p238, %p239
    %s242 = sadd.s32 %s241, 1
    %p245 = scmp.eq.s32.totalorder %s16, 3
    %p246 = scmp.ne.s32.totalorder %s241, %s243
    %p247 = scmp.eq.s32.totalorder %s16, 0
    %p248 = por %p246, %p247
    %p249 = scmp.ne.s32.totalorder %s241, %s243
    %p250 = scmp.eq.s32.totalorder %s21, 3
    %p251 = por %p249, %p250
    %p252 = scmp.ne.s32.totalorder %s243, %s244
    %p253 = scmp.eq.s32.totalorder %s21, 0
    %p254 = por %p252, %p253
    %p255 = scmp.ne.s32.totalorder %s243, %s244
    %p256 = scmp.eq.s32.totalorder %s22, 3
    %p257 = por %p255, %p256
    %p259 = scmp.ne.s32.totalorder %s244, %s258
    %p260 = scmp.eq.s32.totalorder %s22, 0
    %p261 = por %p259, %p260
    %s262 = ssub.s32 %s23, %s35
    %s263 = ssub.s32 %s24, %s31
    %s264 = sor.u32 %s262, %s263
    %p265 = scmp.eq.s32.totalorder %s264, 0
    %s267 = sadd.s32 %s266, 1
    %s268 = scalar_select %p265, %s266, %s267
    %p271 = pneg %p265
    %p272 = scmp.eq.s32.totalorder %s16, 3
    %p273 = por %p271, %p272
    %p274 = scmp.ne.s32.totalorder %s266, %s269
    %p275 = scmp.eq.s32.totalorder %s16, 0
    %p276 = por %p274, %p275
    %p277 = scmp.ne.s32.totalorder %s266, %s269
    %p278 = scmp.eq.s32.totalorder %s21, 3
    %p279 = por %p277, %p278
    %p280 = scmp.ne.s32.totalorder %s269, %s270
    %p281 = scmp.eq.s32.totalorder %s21, 0
    %p282 = por %p280, %p281
    %p283 = scmp.ne.s32.totalorder %s269, %s270
    %p284 = scmp.eq.s32.totalorder %s22, 3
    %p285 = por %p283, %p284
    %p287 = scmp.ne.s32.totalorder %s270, %s286
    %p288 = scmp.eq.s32.totalorder %s22, 0
    %p289 = por %p287, %p288
    %p290 = scmp.le.s32.totalorder 1, %s16
    %p291 = scmp.lt.s32.totalorder %s16, 5
    %p292 = pnand %p290, %p291
    %p293 = pneg %p292
    // Predicated region
    $region9: #{tpu_custom_call.1} parent=5 // pred_check
      _
    $region10: #{tpu_custom_call.1} parent=5 // pred_check_branch
      %295 = sbr.rel (%p292) target = $region12
    $region11: #{tpu_custom_call.1} parent=5 // pred_region
      %s296 = ssub.s32 %s16, 1
      // Predicated region
      $region13: #{tpu_custom_call.1} parent=11 // pred_check
        %p297 = pneg %p107
      $region14: #{tpu_custom_call.1} parent=11 // pred_check_branch
        %299 = sbr.rel (%p297) target = $region16
      $region15: #{tpu_custom_call.1} parent=11 // pred_region
        _
      $region16: #{tpu_custom_call.1} parent=11 // pred_fallthru
        _
      // Predicated region
      $region17: #{tpu_custom_call.1} parent=11 // pred_check
        %p300 = pneg %p128
      $region18: #{tpu_custom_call.1} parent=11 // pred_check_branch
        %302 = sbr.rel (%p300) target = $region20
      $region19: #{tpu_custom_call.1} parent=11 // pred_region
        _
      $region20: #{tpu_custom_call.1} parent=11 // pred_fallthru
        _
      // Predicated region
      $region21: #{tpu_custom_call.1} parent=11 // pred_check
        %p303 = pneg %p149
      $region22: #{tpu_custom_call.1} parent=11 // pred_check_branch
        %305 = sbr.rel (%p303) target = $region24
      $region23: #{tpu_custom_call.1} parent=11 // pred_region
        _
      $region24: #{tpu_custom_call.1} parent=11 // pred_fallthru
        _
      // Predicated region
      $region25: #{tpu_custom_call.1} parent=11 // pred_check
        %p306 = pneg %p170
      $region26: #{tpu_custom_call.1} parent=11 // pred_check_branch
        %308 = sbr.rel (%p306) target = $region28
      $region27: #{tpu_custom_call.1} parent=11 // pred_region
        _
      $region28: #{tpu_custom_call.1} parent=11 // pred_fallthru
        _
      // Predicated region
      $region29: #{tpu_custom_call.1} parent=11 // pred_check
        %p309 = pneg %p191
      $region30: #{tpu_custom_call.1} parent=11 // pred_check_branch
        %311 = sbr.rel (%p309) target = $region32
      $region31: #{tpu_custom_call.1} parent=11 // pred_region
        _
      $region32: #{tpu_custom_call.1} parent=11 // pred_fallthru
        _
      // Predicated region
      $region33: #{tpu_custom_call.1} parent=11 // pred_check
        %p312 = pneg %p212
      $region34: #{tpu_custom_call.1} parent=11 // pred_check_branch
        %314 = sbr.rel (%p312) target = $region36
      $region35: #{tpu_custom_call.1} parent=11 // pred_region
        _
      $region36: #{tpu_custom_call.1} parent=11 // pred_fallthru
        _
      // Predicated region
      $region37: #{tpu_custom_call.1} parent=11 // pred_check
        %p315 = pneg %p233
      $region38: #{tpu_custom_call.1} parent=11 // pred_check_branch
        %317 = sbr.rel (%p315) target = $region40
      $region39: #{tpu_custom_call.1} parent=11 // pred_region
        _
      $region40: #{tpu_custom_call.1} parent=11 // pred_fallthru
        _
      // Predicated region
      $region41: #{tpu_custom_call.1} parent=11 // pred_check
        %p318 = pneg %p254
      $region42: #{tpu_custom_call.1} parent=11 // pred_check_branch
        %320 = sbr.rel (%p318) target = $region44
      $region43: #{tpu_custom_call.1} parent=11 // pred_region
        _
      $region44: #{tpu_custom_call.1} parent=11 // pred_fallthru
        _
    $region12: #{tpu_custom_call.1} parent=5 // pred_fallthru
      _
    %p321 = scmp.lt.s32.totalorder %s16, 4
    // Predicated region
    $region45: #{tpu_custom_call.1} parent=5 // pred_check
      %p322 = pneg %p321
    $region46: #{tpu_custom_call.1} parent=5 // pred_check_branch
      %324 = sbr.rel (%p322) target = $region48
    $region47: #{tpu_custom_call.1} parent=5 // pred_region
      // Predicated region
      $region49: #{tpu_custom_call.1} parent=47 // pred_check
        %p325 = pneg %p50
      $region50: #{tpu_custom_call.1} parent=47 // pred_check_branch
        %327 = sbr.rel (%p325) target = $region52
      $region51: #{tpu_custom_call.1} parent=47 // pred_region
        %s328 = smul.u32 16, %s24
        %p329 = scmp.lt.s32.totalorder %s23, 1
        %s330 = scalar_select %p329, %s23, 1
        %p331 = scmp.lt.s32.totalorder %s328, 31
        %s332 = scalar_select %p331, %s328, 31
        %s333 = smul.addr %s330, 32
        %s334 = sadd.s32 %s332, %s333
        %s335 = smul.addr %s334, 8
        %s336 = scalar_lea.vmem %s0, %s335
        %s337 = smul.u32 16, %s24
      $region52: #{tpu_custom_call.1} parent=47 // pred_fallthru
        _
      // Predicated region
      $region53: #{tpu_custom_call.1} parent=47 // pred_check
        %p338 = pneg %p80
      $region54: #{tpu_custom_call.1} parent=47 // pred_check_branch
        %340 = sbr.rel (%p338) target = $region56
      $region55: #{tpu_custom_call.1} parent=47 // pred_region
        %s341 = smul.u32 %s23, 2
        %s342 = sadd.s32 %s341, %s24
        %p343 = scmp.lt.s32.totalorder %s342, 3
        %s344 = scalar_select %p343, %s342, 3
        %s345 = smul.addr %s344, 72
        %s346 = smul.addr %s345, 8
        %s347 = scalar_lea.vmem %s1, %s346
        %s348 = smul.u32 %s23, 2
        %s349 = sadd.s32 %s348, %s24
      $region56: #{tpu_custom_call.1} parent=47 // pred_fallthru
        _
    $region48: #{tpu_custom_call.1} parent=5 // pred_fallthru
      _
    %p350 = scmp.le.s32.totalorder 1, %s16
    %p351 = scmp.lt.s32.totalorder %s16, 5
    %p352 = pnand %p350, %p351
    %p353 = pneg %p352
    // Predicated region
    $region57: #{tpu_custom_call.1} parent=5 // pred_check
      _
    $region58: #{tpu_custom_call.1} parent=5 // pred_check_branch
      %355 = sbr.rel (%p352) target = $region60
    $region59: #{tpu_custom_call.1} parent=5 // pred_region
      %s356 = ssub.s32 %s16, 1
      %s357 = smul.u32 16, %s26
      %p358 = scmp.lt.s32.totalorder %s25, 1
      %s359 = scalar_select %p358, %s25, 1
      %p360 = scmp.lt.s32.totalorder %s357, 31
      %s361 = scalar_select %p360, %s357, 31
      %s362 = smul.addr %s359, 32
      %s363 = sadd.s32 %s361, %s362
      %s364 = smul.addr %s363, 8
      %s365 = scalar_lea.vmem %s0, %s364
      %p366 = pneg %p56
      %p367 = pneg %p53
      %s368 = smul.u32 %s25, 2
      %s369 = sadd.s32 %s368, %s26
      %p370 = scmp.lt.s32.totalorder %s369, 3
      %s371 = scalar_select %p370, %s369, 3
      %s372 = smul.addr %s371, 72
      %s373 = smul.addr %s372, 8
      %s374 = scalar_lea.vmem %s1, %s373
      %p375 = pneg %p86
      %p376 = pneg %p83
      %p377 = pneg %p107
      %p378 = pneg %p104
      %p379 = pneg %p128
      %p380 = pneg %p125
      %p381 = pneg %p149
      %p382 = pneg %p146
      %p383 = pneg %p170
      %p384 = pneg %p167
      %p385 = pneg %p191
      %p386 = pneg %p188
      %p387 = pneg %p212
      %p388 = pneg %p209
      %p389 = pneg %p233
      %p390 = pneg %p230
      %p391 = pneg %p254
      %p392 = pneg %p251
      %p393 = pneg %p282
      %p394 = pneg %p279
      %s395 = smul.u32 16, %s26
      %p396 = scmp.lt.s32.totalorder %s25, 1
      %s397 = scalar_select %p396, %s25, 1
      %p398 = scmp.lt.s32.totalorder %s395, 31
      %s399 = scalar_select %p398, %s395, 31
      %s400 = smul.addr %s397, 32
      %s401 = sadd.s32 %s399, %s400
      %s402 = smul.addr %s401, 8
      %s403 = scalar_lea.vmem %s10, %s402
      %s404 = smul.u32 16, %s26
      %p405 = scmp.lt.s32.totalorder %s25, 1
      %s406 = scalar_select %p405, %s25, 1
      %p407 = scmp.lt.s32.totalorder %s404, 31
      %s408 = scalar_select %p407, %s404, 31
      %s409 = smul.addr %s406, 32
      %s410 = sadd.s32 %s408, %s409
      %s411 = smul.addr %s410, 8
      %s412 = scalar_lea.vmem %s0, %s411
      %s413 = smul.u32 16, %s26
      %s414 = smul.u32 %s25, 2
      %s415 = sadd.s32 %s414, %s26
      %p416 = scmp.lt.s32.totalorder %s415, 3
      %s417 = scalar_select %p416, %s415, 3
      %s418 = smul.addr %s417, 72
      %s419 = smul.addr %s418, 8
      %s420 = scalar_lea.vmem %s1, %s419
      %s421 = smul.u32 %s25, 2
      %s422 = sadd.s32 %s421, %s26
      %s423 = smul.u32 16, %s26
      %p424 = scmp.lt.s32.totalorder %s25, 1
      %s425 = scalar_select %p424, %s25, 1
      %p426 = scmp.lt.s32.totalorder %s423, 31
      %s427 = scalar_select %p426, %s423, 31
      %s428 = smul.addr %s425, 32
      %s429 = sadd.s32 %s427, %s428
      %s430 = smul.addr %s429, 8
      %s431 = scalar_lea.vmem %s10, %s430
      %s432 = smul.u32 16, %s26
      %s434 = scalar_lea.vmem %s420, 128
      %v435 = vld [vmem:[%s434 + $0x4] sm:$0xff]
      %v436 = vld [vmem:[%s434 + $0xc] sm:$0xff]
      %v437 = vld [vmem:[%s434 + $0x24] sm:$0xff]
      %v438 = vld [vmem:[%s434 + $0x2c] sm:$0xff]
      %v439 = vld [vmem:[%s434 + $0x44] sm:$0xff]
      %v440 = vld [vmem:[%s434 + $0x4c] sm:$0xff]
      %v441 = vld [vmem:[%s434 + $0x64] sm:$0xff]
      %v442 = vld [vmem:[%s434 + $0x6c] sm:$0xff]
      %v443 = vld [vmem:[%s434 + $0x84] sm:$0xff]
      %v444 = vld [vmem:[%s434 + $0x8c] sm:$0xff]
      %v445 = vld [vmem:[%s434 + $0xa4] sm:$0xff]
      %v446 = vld [vmem:[%s434 + $0xac] sm:$0xff]
      %v447 = vld [vmem:[%s434 + $0xc4] sm:$0xff]
      %v448 = vld [vmem:[%s434 + $0xcc] sm:$0xff]
      %v449 = vld [vmem:[%s434 + $0xe4] sm:$0xff]
      %v450 = vld [vmem:[%s434 + $0xec] sm:$0xff]
      %v451 = vld [vmem:[%s2] sm:$0x1]
      %v453 = vlaneseq
      %v454 = vshrl.u32 %v453, 7
      %v455 = vsub.s32 0, %v454
      %v456 = vrot.slane %v451, %v455
      %v458 = vmul.f32 %v456, %v435
      %v459 = vmul.f32 %v456, %v436
      %v460 = vmul.f32 %v456, %v437
      %v461 = vmul.f32 %v456, %v438
      %v462 = vmul.f32 %v456, %v439
      %v463 = vmul.f32 %v456, %v440
      %v464 = vmul.f32 %v456, %v441
      %v465 = vmul.f32 %v456, %v442
      %v466 = vmul.f32 %v456, %v443
      %v467 = vmul.f32 %v456, %v444
      %v468 = vmul.f32 %v456, %v445
      %v469 = vmul.f32 %v456, %v446
      %v470 = vmul.f32 %v456, %v447
      %v471 = vmul.f32 %v456, %v448
      %v472 = vmul.f32 %v456, %v449
      %v473 = vmul.f32 %v456, %v450
      %v474 = vadd.f32 %v458, 0.0
      %v475 = vadd.f32 %v459, 0.0
      %v476 = vadd.f32 %v460, 0.0
      %v477 = vadd.f32 %v461, 0.0
      %v478 = vadd.f32 %v462, 0.0
      %v479 = vadd.f32 %v463, 0.0
      %v480 = vadd.f32 %v464, 0.0
      %v481 = vadd.f32 %v465, 0.0
      %v482 = vadd.f32 %v466, 0.0
      %v483 = vadd.f32 %v467, 0.0
      %v484 = vadd.f32 %v468, 0.0
      %v485 = vadd.f32 %v469, 0.0
      %v486 = vadd.f32 %v470, 0.0
      %v487 = vadd.f32 %v471, 0.0
      %v488 = vadd.f32 %v472, 0.0
      %v489 = vadd.f32 %v473, 0.0
      %v490 = vld [vmem:[%s434 + $0x5] sm:$0xff]
      %v491 = vld [vmem:[%s434 + $0xd] sm:$0xff]
      %v492 = vld [vmem:[%s434 + $0x25] sm:$0xff]
      %v493 = vld [vmem:[%s434 + $0x2d] sm:$0xff]
      %v494 = vld [vmem:[%s434 + $0x45] sm:$0xff]
      %v495 = vld [vmem:[%s434 + $0x4d] sm:$0xff]
      %v496 = vld [vmem:[%s434 + $0x65] sm:$0xff]
      %v497 = vld [vmem:[%s434 + $0x6d] sm:$0xff]
      %v498 = vld [vmem:[%s434 + $0x85] sm:$0xff]
      %v499 = vld [vmem:[%s434 + $0x8d] sm:$0xff]
      %v500 = vld [vmem:[%s434 + $0xa5] sm:$0xff]
      %v501 = vld [vmem:[%s434 + $0xad] sm:$0xff]
      %v502 = vld [vmem:[%s434 + $0xc5] sm:$0xff]
      %v503 = vld [vmem:[%s434 + $0xcd] sm:$0xff]
      %v504 = vld [vmem:[%s434 + $0xe5] sm:$0xff]
      %v505 = vld [vmem:[%s434 + $0xed] sm:$0xff]
      %s506 = scalar_lea.vmem %s2, 1
      %v507 = vld [vmem:[%s506] sm:$0x1]
      %v509 = vlaneseq
      %v510 = vshrl.u32 %v509, 7
      %v511 = vsub.s32 0, %v510
      %v512 = vrot.slane %v507, %v511
      %v514 = vmul.f32 %v512, %v490
      %v515 = vmul.f32 %v512, %v491
      %v516 = vmul.f32 %v512, %v492
      %v517 = vmul.f32 %v512, %v493
      %v518 = vmul.f32 %v512, %v494
      %v519 = vmul.f32 %v512, %v495
      %v520 = vmul.f32 %v512, %v496
      %v521 = vmul.f32 %v512, %v497
      %v522 = vmul.f32 %v512, %v498
      %v523 = vmul.f32 %v512, %v499
      %v524 = vmul.f32 %v512, %v500
      %v525 = vmul.f32 %v512, %v501
      %v526 = vmul.f32 %v512, %v502
      %v527 = vmul.f32 %v512, %v503
      %v528 = vmul.f32 %v512, %v504
      %v529 = vmul.f32 %v512, %v505
      %v530 = vadd.f32 %v474, %v514
      %v531 = vadd.f32 %v475, %v515
      %v532 = vadd.f32 %v476, %v516
      %v533 = vadd.f32 %v477, %v517
      %v534 = vadd.f32 %v478, %v518
      %v535 = vadd.f32 %v479, %v519
      %v536 = vadd.f32 %v480, %v520
      %v537 = vadd.f32 %v481, %v521
      %v538 = vadd.f32 %v482, %v522
      %v539 = vadd.f32 %v483, %v523
      %v540 = vadd.f32 %v484, %v524
      %v541 = vadd.f32 %v485, %v525
      %v542 = vadd.f32 %v486, %v526
      %v543 = vadd.f32 %v487, %v527
      %v544 = vadd.f32 %v488, %v528
      %v545 = vadd.f32 %v489, %v529
      %v546 = vld [vmem:[%s434 + $0x6] sm:$0xff]
      %v547 = vld [vmem:[%s434 + $0xe] sm:$0xff]
      %v548 = vld [vmem:[%s434 + $0x26] sm:$0xff]
      %v549 = vld [vmem:[%s434 + $0x2e] sm:$0xff]
      %v550 = vld [vmem:[%s434 + $0x46] sm:$0xff]
      %v551 = vld [vmem:[%s434 + $0x4e] sm:$0xff]
      %v552 = vld [vmem:[%s434 + $0x66] sm:$0xff]
      %v553 = vld [vmem:[%s434 + $0x6e] sm:$0xff]
      %v554 = vld [vmem:[%s434 + $0x86] sm:$0xff]
      %v555 = vld [vmem:[%s434 + $0x8e] sm:$0xff]
      %v556 = vld [vmem:[%s434 + $0xa6] sm:$0xff]
      %v557 = vld [vmem:[%s434 + $0xae] sm:$0xff]
      %v558 = vld [vmem:[%s434 + $0xc6] sm:$0xff]
      %v559 = vld [vmem:[%s434 + $0xce] sm:$0xff]
      %v560 = vld [vmem:[%s434 + $0xe6] sm:$0xff]
      %v561 = vld [vmem:[%s434 + $0xee] sm:$0xff]
      %s562 = scalar_lea.vmem %s2, 2
      %v563 = vld [vmem:[%s562] sm:$0x1]
      %v565 = vlaneseq
      %v566 = vshrl.u32 %v565, 7
      %v567 = vsub.s32 0, %v566
      %v568 = vrot.slane %v563, %v567
      %v570 = vmul.f32 %v568, %v546
      %v571 = vmul.f32 %v568, %v547
      %v572 = vmul.f32 %v568, %v548
      %v573 = vmul.f32 %v568, %v549
      %v574 = vmul.f32 %v568, %v550
      %v575 = vmul.f32 %v568, %v551
      %v576 = vmul.f32 %v568, %v552
      %v577 = vmul.f32 %v568, %v553
      %v578 = vmul.f32 %v568, %v554
      %v579 = vmul.f32 %v568, %v555
      %v580 = vmul.f32 %v568, %v556
      %v581 = vmul.f32 %v568, %v557
      %v582 = vmul.f32 %v568, %v558
      %v583 = vmul.f32 %v568, %v559
      %v584 = vmul.f32 %v568, %v560
      %v585 = vmul.f32 %v568, %v561
      %v586 = vadd.f32 %v530, %v570
      %v587 = vadd.f32 %v531, %v571
      %v588 = vadd.f32 %v532, %v572
      %v589 = vadd.f32 %v533, %v573
      %v590 = vadd.f32 %v534, %v574
      %v591 = vadd.f32 %v535, %v575
      %v592 = vadd.f32 %v536, %v576
      %v593 = vadd.f32 %v537, %v577
      %v594 = vadd.f32 %v538, %v578
      %v595 = vadd.f32 %v539, %v579
      %v596 = vadd.f32 %v540, %v580
      %v597 = vadd.f32 %v541, %v581
      %v598 = vadd.f32 %v542, %v582
      %v599 = vadd.f32 %v543, %v583
      %v600 = vadd.f32 %v544, %v584
      %v601 = vadd.f32 %v545, %v585
      %s602 = scalar_lea.vmem %s420, 160
      %v603 = vld [vmem:[%s602 + $0x4] sm:$0xff]
      %v604 = vld [vmem:[%s602 + $0xc] sm:$0xff]
      %v605 = vld [vmem:[%s602 + $0x24] sm:$0xff]
      %v606 = vld [vmem:[%s602 + $0x2c] sm:$0xff]
      %v607 = vld [vmem:[%s602 + $0x44] sm:$0xff]
      %v608 = vld [vmem:[%s602 + $0x4c] sm:$0xff]
      %v609 = vld [vmem:[%s602 + $0x64] sm:$0xff]
      %v610 = vld [vmem:[%s602 + $0x6c] sm:$0xff]
      %v611 = vld [vmem:[%s602 + $0x84] sm:$0xff]
      %v612 = vld [vmem:[%s602 + $0x8c] sm:$0xff]
      %v613 = vld [vmem:[%s602 + $0xa4] sm:$0xff]
      %v614 = vld [vmem:[%s602 + $0xac] sm:$0xff]
      %v615 = vld [vmem:[%s602 + $0xc4] sm:$0xff]
      %v616 = vld [vmem:[%s602 + $0xcc] sm:$0xff]
      %v617 = vld [vmem:[%s602 + $0xe4] sm:$0xff]
      %v618 = vld [vmem:[%s602 + $0xec] sm:$0xff]
      %s619 = scalar_lea.vmem %s2, 3
      %v620 = vld [vmem:[%s619] sm:$0x1]
      %v622 = vlaneseq
      %v623 = vshrl.u32 %v622, 7
      %v624 = vsub.s32 0, %v623
      %v625 = vrot.slane %v620, %v624
      %v627 = vmul.f32 %v625, %v603
      %v628 = vmul.f32 %v625, %v604
      %v629 = vmul.f32 %v625, %v605
      %v630 = vmul.f32 %v625, %v606
      %v631 = vmul.f32 %v625, %v607
      %v632 = vmul.f32 %v625, %v608
      %v633 = vmul.f32 %v625, %v609
      %v634 = vmul.f32 %v625, %v610
      %v635 = vmul.f32 %v625, %v611
      %v636 = vmul.f32 %v625, %v612
      %v637 = vmul.f32 %v625, %v613
      %v638 = vmul.f32 %v625, %v614
      %v639 = vmul.f32 %v625, %v615
      %v640 = vmul.f32 %v625, %v616
      %v641 = vmul.f32 %v625, %v617
      %v642 = vmul.f32 %v625, %v618
      %v643 = vadd.f32 %v586, %v627
      %v644 = vadd.f32 %v587, %v628
      %v645 = vadd.f32 %v588, %v629
      %v646 = vadd.f32 %v589, %v630
      %v647 = vadd.f32 %v590, %v631
      %v648 = vadd.f32 %v591, %v632
      %v649 = vadd.f32 %v592, %v633
      %v650 = vadd.f32 %v593, %v634
      %v651 = vadd.f32 %v594, %v635
      %v652 = vadd.f32 %v595, %v636
      %v653 = vadd.f32 %v596, %v637
      %v654 = vadd.f32 %v597, %v638
      %v655 = vadd.f32 %v598, %v639
      %v656 = vadd.f32 %v599, %v640
      %v657 = vadd.f32 %v600, %v641
      %v658 = vadd.f32 %v601, %v642
      %v659 = vld [vmem:[%s602 + $0x5] sm:$0xff]
      %v660 = vld [vmem:[%s602 + $0xd] sm:$0xff]
      %v661 = vld [vmem:[%s602 + $0x25] sm:$0xff]
      %v662 = vld [vmem:[%s602 + $0x2d] sm:$0xff]
      %v663 = vld [vmem:[%s602 + $0x45] sm:$0xff]
      %v664 = vld [vmem:[%s602 + $0x4d] sm:$0xff]
      %v665 = vld [vmem:[%s602 + $0x65] sm:$0xff]
      %v666 = vld [vmem:[%s602 + $0x6d] sm:$0xff]
      %v667 = vld [vmem:[%s602 + $0x85] sm:$0xff]
      %v668 = vld [vmem:[%s602 + $0x8d] sm:$0xff]
      %v669 = vld [vmem:[%s602 + $0xa5] sm:$0xff]
      %v670 = vld [vmem:[%s602 + $0xad] sm:$0xff]
      %v671 = vld [vmem:[%s602 + $0xc5] sm:$0xff]
      %v672 = vld [vmem:[%s602 + $0xcd] sm:$0xff]
      %v673 = vld [vmem:[%s602 + $0xe5] sm:$0xff]
      %v674 = vld [vmem:[%s602 + $0xed] sm:$0xff]
      %s675 = scalar_lea.vmem %s2, 4
      %v676 = vld [vmem:[%s675] sm:$0x1]
      %v678 = vlaneseq
      %v679 = vshrl.u32 %v678, 7
      %v680 = vsub.s32 0, %v679
      %v681 = vrot.slane %v676, %v680
      %v683 = vmul.f32 %v681, %v659
      %v684 = vmul.f32 %v681, %v660
      %v685 = vmul.f32 %v681, %v661
      %v686 = vmul.f32 %v681, %v662
      %v687 = vmul.f32 %v681, %v663
      %v688 = vmul.f32 %v681, %v664
      %v689 = vmul.f32 %v681, %v665
      %v690 = vmul.f32 %v681, %v666
      %v691 = vmul.f32 %v681, %v667
      %v692 = vmul.f32 %v681, %v668
      %v693 = vmul.f32 %v681, %v669
      %v694 = vmul.f32 %v681, %v670
      %v695 = vmul.f32 %v681, %v671
      %v696 = vmul.f32 %v681, %v672
      %v697 = vmul.f32 %v681, %v673
      %v698 = vmul.f32 %v681, %v674
      %v699 = vadd.f32 %v643, %v683
      %v700 = vadd.f32 %v644, %v684
      %v701 = vadd.f32 %v645, %v685
      %v702 = vadd.f32 %v646, %v686
      %v703 = vadd.f32 %v647, %v687
      %v704 = vadd.f32 %v648, %v688
      %v705 = vadd.f32 %v649, %v689
      %v706 = vadd.f32 %v650, %v690
      %v707 = vadd.f32 %v651, %v691
      %v708 = vadd.f32 %v652, %v692
      %v709 = vadd.f32 %v653, %v693
      %v710 = vadd.f32 %v654, %v694
      %v711 = vadd.f32 %v655, %v695
      %v712 = vadd.f32 %v656, %v696
      %v713 = vadd.f32 %v657, %v697
      %v714 = vadd.f32 %v658, %v698
      %v715 = vld [vmem:[%s602 + $0x6] sm:$0xff]
      %v716 = vld [vmem:[%s602 + $0xe] sm:$0xff]
      %v717 = vld [vmem:[%s602 + $0x26] sm:$0xff]
      %v718 = vld [vmem:[%s602 + $0x2e] sm:$0xff]
      %v719 = vld [vmem:[%s602 + $0x46] sm:$0xff]
      %v720 = vld [vmem:[%s602 + $0x4e] sm:$0xff]
      %v721 = vld [vmem:[%s602 + $0x66] sm:$0xff]
      %v722 = vld [vmem:[%s602 + $0x6e] sm:$0xff]
      %v723 = vld [vmem:[%s602 + $0x86] sm:$0xff]
      %v724 = vld [vmem:[%s602 + $0x8e] sm:$0xff]
      %v725 = vld [vmem:[%s602 + $0xa6] sm:$0xff]
      %v726 = vld [vmem:[%s602 + $0xae] sm:$0xff]
      %v727 = vld [vmem:[%s602 + $0xc6] sm:$0xff]
      %v728 = vld [vmem:[%s602 + $0xce] sm:$0xff]
      %v729 = vld [vmem:[%s602 + $0xe6] sm:$0xff]
      %v730 = vld [vmem:[%s602 + $0xee] sm:$0xff]
      %s731 = scalar_lea.vmem %s2, 5
      %v732 = vld [vmem:[%s731] sm:$0x1]
      %v734 = vlaneseq
      %v735 = vshrl.u32 %v734, 7
      %v736 = vsub.s32 0, %v735
      %v737 = vrot.slane %v732, %v736
      %v739 = vmul.f32 %v737, %v715
      %v740 = vmul.f32 %v737, %v716
      %v741 = vmul.f32 %v737, %v717
      %v742 = vmul.f32 %v737, %v718
      %v743 = vmul.f32 %v737, %v719
      %v744 = vmul.f32 %v737, %v720
      %v745 = vmul.f32 %v737, %v721
      %v746 = vmul.f32 %v737, %v722
      %v747 = vmul.f32 %v737, %v723
      %v748 = vmul.f32 %v737, %v724
      %v749 = vmul.f32 %v737, %v725
      %v750 = vmul.f32 %v737, %v726
      %v751 = vmul.f32 %v737, %v727
      %v752 = vmul.f32 %v737, %v728
      %v753 = vmul.f32 %v737, %v729
      %v754 = vmul.f32 %v737, %v730
      %v755 = vadd.f32 %v699, %v739
      %v756 = vadd.f32 %v700, %v740
      %v757 = vadd.f32 %v701, %v741
      %v758 = vadd.f32 %v702, %v742
      %v759 = vadd.f32 %v703, %v743
      %v760 = vadd.f32 %v704, %v744
      %v761 = vadd.f32 %v705, %v745
      %v762 = vadd.f32 %v706, %v746
      %v763 = vadd.f32 %v707, %v747
      %v764 = vadd.f32 %v708, %v748
      %v765 = vadd.f32 %v709, %v749
      %v766 = vadd.f32 %v710, %v750
      %v767 = vadd.f32 %v711, %v751
      %v768 = vadd.f32 %v712, %v752
      %v769 = vadd.f32 %v713, %v753
      %v770 = vadd.f32 %v714, %v754
      %s771 = scalar_lea.vmem %s420, 192
      %v772 = vld [vmem:[%s771 + $0x4] sm:$0xff]
      %v773 = vld [vmem:[%s771 + $0xc] sm:$0xff]
      %v774 = vld [vmem:[%s771 + $0x24] sm:$0xff]
      %v775 = vld [vmem:[%s771 + $0x2c] sm:$0xff]
      %v776 = vld [vmem:[%s771 + $0x44] sm:$0xff]
      %v777 = vld [vmem:[%s771 + $0x4c] sm:$0xff]
      %v778 = vld [vmem:[%s771 + $0x64] sm:$0xff]
      %v779 = vld [vmem:[%s771 + $0x6c] sm:$0xff]
      %v780 = vld [vmem:[%s771 + $0x84] sm:$0xff]
      %v781 = vld [vmem:[%s771 + $0x8c] sm:$0xff]
      %v782 = vld [vmem:[%s771 + $0xa4] sm:$0xff]
      %v783 = vld [vmem:[%s771 + $0xac] sm:$0xff]
      %v784 = vld [vmem:[%s771 + $0xc4] sm:$0xff]
      %v785 = vld [vmem:[%s771 + $0xcc] sm:$0xff]
      %v786 = vld [vmem:[%s771 + $0xe4] sm:$0xff]
      %v787 = vld [vmem:[%s771 + $0xec] sm:$0xff]
      %s788 = scalar_lea.vmem %s2, 6
      %v789 = vld [vmem:[%s788] sm:$0x1]
      %v791 = vlaneseq
      %v792 = vshrl.u32 %v791, 7
      %v793 = vsub.s32 0, %v792
      %v794 = vrot.slane %v789, %v793
      %v796 = vmul.f32 %v794, %v772
      %v797 = vmul.f32 %v794, %v773
      %v798 = vmul.f32 %v794, %v774
      %v799 = vmul.f32 %v794, %v775
      %v800 = vmul.f32 %v794, %v776
      %v801 = vmul.f32 %v794, %v777
      %v802 = vmul.f32 %v794, %v778
      %v803 = vmul.f32 %v794, %v779
      %v804 = vmul.f32 %v794, %v780
      %v805 = vmul.f32 %v794, %v781
      %v806 = vmul.f32 %v794, %v782
      %v807 = vmul.f32 %v794, %v783
      %v808 = vmul.f32 %v794, %v784
      %v809 = vmul.f32 %v794, %v785
      %v810 = vmul.f32 %v794, %v786
      %v811 = vmul.f32 %v794, %v787
      %v812 = vadd.f32 %v755, %v796
      %v813 = vadd.f32 %v756, %v797
      %v814 = vadd.f32 %v757, %v798
      %v815 = vadd.f32 %v758, %v799
      %v816 = vadd.f32 %v759, %v800
      %v817 = vadd.f32 %v760, %v801
      %v818 = vadd.f32 %v761, %v802
      %v819 = vadd.f32 %v762, %v803
      %v820 = vadd.f32 %v763, %v804
      %v821 = vadd.f32 %v764, %v805
      %v822 = vadd.f32 %v765, %v806
      %v823 = vadd.f32 %v766, %v807
      %v824 = vadd.f32 %v767, %v808
      %v825 = vadd.f32 %v768, %v809
      %v826 = vadd.f32 %v769, %v810
      %v827 = vadd.f32 %v770, %v811
      %v828 = vld [vmem:[%s771 + $0x5] sm:$0xff]
      %v829 = vld [vmem:[%s771 + $0xd] sm:$0xff]
      %v830 = vld [vmem:[%s771 + $0x25] sm:$0xff]
      %v831 = vld [vmem:[%s771 + $0x2d] sm:$0xff]
      %v832 = vld [vmem:[%s771 + $0x45] sm:$0xff]
      %v833 = vld [vmem:[%s771 + $0x4d] sm:$0xff]
      %v834 = vld [vmem:[%s771 + $0x65] sm:$0xff]
      %v835 = vld [vmem:[%s771 + $0x6d] sm:$0xff]
      %v836 = vld [vmem:[%s771 + $0x85] sm:$0xff]
      %v837 = vld [vmem:[%s771 + $0x8d] sm:$0xff]
      %v838 = vld [vmem:[%s771 + $0xa5] sm:$0xff]
      %v839 = vld [vmem:[%s771 + $0xad] sm:$0xff]
      %v840 = vld [vmem:[%s771 + $0xc5] sm:$0xff]
      %v841 = vld [vmem:[%s771 + $0xcd] sm:$0xff]
      %v842 = vld [vmem:[%s771 + $0xe5] sm:$0xff]
      %v843 = vld [vmem:[%s771 + $0xed] sm:$0xff]
      %s844 = scalar_lea.vmem %s2, 7
      %v845 = vld [vmem:[%s844] sm:$0x1]
      %v847 = vlaneseq
      %v848 = vshrl.u32 %v847, 7
      %v849 = vsub.s32 0, %v848
      %v850 = vrot.slane %v845, %v849
      %v852 = vmul.f32 %v850, %v828
      %v853 = vmul.f32 %v850, %v829
      %v854 = vmul.f32 %v850, %v830
      %v855 = vmul.f32 %v850, %v831
      %v856 = vmul.f32 %v850, %v832
      %v857 = vmul.f32 %v850, %v833
      %v858 = vmul.f32 %v850, %v834
      %v859 = vmul.f32 %v850, %v835
      %v860 = vmul.f32 %v850, %v836
      %v861 = vmul.f32 %v850, %v837
      %v862 = vmul.f32 %v850, %v838
      %v863 = vmul.f32 %v850, %v839
      %v864 = vmul.f32 %v850, %v840
      %v865 = vmul.f32 %v850, %v841
      %v866 = vmul.f32 %v850, %v842
      %v867 = vmul.f32 %v850, %v843
      %v868 = vadd.f32 %v812, %v852
      %v869 = vadd.f32 %v813, %v853
      %v870 = vadd.f32 %v814, %v854
      %v871 = vadd.f32 %v815, %v855
      %v872 = vadd.f32 %v816, %v856
      %v873 = vadd.f32 %v817, %v857
      %v874 = vadd.f32 %v818, %v858
      %v875 = vadd.f32 %v819, %v859
      %v876 = vadd.f32 %v820, %v860
      %v877 = vadd.f32 %v821, %v861
      %v878 = vadd.f32 %v822, %v862
      %v879 = vadd.f32 %v823, %v863
      %v880 = vadd.f32 %v824, %v864
      %v881 = vadd.f32 %v825, %v865
      %v882 = vadd.f32 %v826, %v866
      %v883 = vadd.f32 %v827, %v867
      %v884 = vld [vmem:[%s771 + $0x6] sm:$0xff]
      %v885 = vld [vmem:[%s771 + $0xe] sm:$0xff]
      %v886 = vld [vmem:[%s771 + $0x26] sm:$0xff]
      %v887 = vld [vmem:[%s771 + $0x2e] sm:$0xff]
      %v888 = vld [vmem:[%s771 + $0x46] sm:$0xff]
      %v889 = vld [vmem:[%s771 + $0x4e] sm:$0xff]
      %v890 = vld [vmem:[%s771 + $0x66] sm:$0xff]
      %v891 = vld [vmem:[%s771 + $0x6e] sm:$0xff]
      %v892 = vld [vmem:[%s771 + $0x86] sm:$0xff]
      %v893 = vld [vmem:[%s771 + $0x8e] sm:$0xff]
      %v894 = vld [vmem:[%s771 + $0xa6] sm:$0xff]
      %v895 = vld [vmem:[%s771 + $0xae] sm:$0xff]
      %v896 = vld [vmem:[%s771 + $0xc6] sm:$0xff]
      %v897 = vld [vmem:[%s771 + $0xce] sm:$0xff]
      %v898 = vld [vmem:[%s771 + $0xe6] sm:$0xff]
      %v899 = vld [vmem:[%s771 + $0xee] sm:$0xff]
      %s900 = scalar_lea.vmem %s2, 8
      %v901 = vld [vmem:[%s900] sm:$0x1]
      %v903 = vlaneseq
      %v904 = vshrl.u32 %v903, 7
      %v905 = vsub.s32 0, %v904
      %v906 = vrot.slane %v901, %v905
      %v908 = vmul.f32 %v906, %v884
      %v909 = vmul.f32 %v906, %v885
      %v910 = vmul.f32 %v906, %v886
      %v911 = vmul.f32 %v906, %v887
      %v912 = vmul.f32 %v906, %v888
      %v913 = vmul.f32 %v906, %v889
      %v914 = vmul.f32 %v906, %v890
      %v915 = vmul.f32 %v906, %v891
      %v916 = vmul.f32 %v906, %v892
      %v917 = vmul.f32 %v906, %v893
      %v918 = vmul.f32 %v906, %v894
      %v919 = vmul.f32 %v906, %v895
      %v920 = vmul.f32 %v906, %v896
      %v921 = vmul.f32 %v906, %v897
      %v922 = vmul.f32 %v906, %v898
      %v923 = vmul.f32 %v906, %v899
      %v924 = vadd.f32 %v868, %v908
      %v925 = vadd.f32 %v869, %v909
      %v926 = vadd.f32 %v870, %v910
      %v927 = vadd.f32 %v871, %v911
      %v928 = vadd.f32 %v872, %v912
      %v929 = vadd.f32 %v873, %v913
      %v930 = vadd.f32 %v874, %v914
      %v931 = vadd.f32 %v875, %v915
      %v932 = vadd.f32 %v876, %v916
      %v933 = vadd.f32 %v877, %v917
      %v934 = vadd.f32 %v878, %v918
      %v935 = vadd.f32 %v879, %v919
      %v936 = vadd.f32 %v880, %v920
      %v937 = vadd.f32 %v881, %v921
      %v938 = vadd.f32 %v882, %v922
      %v939 = vadd.f32 %v883, %v923
      %v940 = vld [vmem:[%s602] sm:$0xff]
      %v941 = vld [vmem:[%s602 + $0x8] sm:$0xff]
      %v942 = vld [vmem:[%s602 + $0x20] sm:$0xff]
      %v943 = vld [vmem:[%s602 + $0x28] sm:$0xff]
      %v944 = vld [vmem:[%s602 + $0x40] sm:$0xff]
      %v945 = vld [vmem:[%s602 + $0x48] sm:$0xff]
      %v946 = vld [vmem:[%s602 + $0x60] sm:$0xff]
      %v947 = vld [vmem:[%s602 + $0x68] sm:$0xff]
      %v948 = vld [vmem:[%s602 + $0x80] sm:$0xff]
      %v949 = vld [vmem:[%s602 + $0x88] sm:$0xff]
      %v950 = vld [vmem:[%s602 + $0xa0] sm:$0xff]
      %v951 = vld [vmem:[%s602 + $0xa8] sm:$0xff]
      %v952 = vld [vmem:[%s602 + $0xc0] sm:$0xff]
      %v953 = vld [vmem:[%s602 + $0xc8] sm:$0xff]
      %v954 = vld [vmem:[%s602 + $0xe0] sm:$0xff]
      %v955 = vld [vmem:[%s602 + $0xe8] sm:$0xff]
      %v956 = vld [vmem:[%s3] sm:$0x1]
      %v958 = vlaneseq
      %v959 = vshrl.u32 %v958, 7
      %v960 = vsub.s32 0, %v959
      %v961 = vrot.slane %v956, %v960
      %v963 = vmul.f32 %v961, %v940
      %v964 = vmul.f32 %v961, %v941
      %v965 = vmul.f32 %v961, %v942
      %v966 = vmul.f32 %v961, %v943
      %v967 = vmul.f32 %v961, %v944
      %v968 = vmul.f32 %v961, %v945
      %v969 = vmul.f32 %v961, %v946
      %v970 = vmul.f32 %v961, %v947
      %v971 = vmul.f32 %v961, %v948
      %v972 = vmul.f32 %v961, %v949
      %v973 = vmul.f32 %v961, %v950
      %v974 = vmul.f32 %v961, %v951
      %v975 = vmul.f32 %v961, %v952
      %v976 = vmul.f32 %v961, %v953
      %v977 = vmul.f32 %v961, %v954
      %v978 = vmul.f32 %v961, %v955
      %v979 = vadd.f32 %v924, %v963
      %v980 = vadd.f32 %v925, %v964
      %v981 = vadd.f32 %v926, %v965
      %v982 = vadd.f32 %v927, %v966
      %v983 = vadd.f32 %v928, %v967
      %v984 = vadd.f32 %v929, %v968
      %v985 = vadd.f32 %v930, %v969
      %v986 = vadd.f32 %v931, %v970
      %v987 = vadd.f32 %v932, %v971
      %v988 = vadd.f32 %v933, %v972
      %v989 = vadd.f32 %v934, %v973
      %v990 = vadd.f32 %v935, %v974
      %v991 = vadd.f32 %v936, %v975
      %v992 = vadd.f32 %v937, %v976
      %v993 = vadd.f32 %v938, %v977
      %v994 = vadd.f32 %v939, %v978
      %v995 = vld [vmem:[%s602 + $0x1] sm:$0xff]
      %v996 = vld [vmem:[%s602 + $0x9] sm:$0xff]
      %v997 = vld [vmem:[%s602 + $0x21] sm:$0xff]
      %v998 = vld [vmem:[%s602 + $0x29] sm:$0xff]
      %v999 = vld [vmem:[%s602 + $0x41] sm:$0xff]
      %v1000 = vld [vmem:[%s602 + $0x49] sm:$0xff]
      %v1001 = vld [vmem:[%s602 + $0x61] sm:$0xff]
      %v1002 = vld [vmem:[%s602 + $0x69] sm:$0xff]
      %v1003 = vld [vmem:[%s602 + $0x81] sm:$0xff]
      %v1004 = vld [vmem:[%s602 + $0x89] sm:$0xff]
      %v1005 = vld [vmem:[%s602 + $0xa1] sm:$0xff]
      %v1006 = vld [vmem:[%s602 + $0xa9] sm:$0xff]
      %v1007 = vld [vmem:[%s602 + $0xc1] sm:$0xff]
      %v1008 = vld [vmem:[%s602 + $0xc9] sm:$0xff]
      %v1009 = vld [vmem:[%s602 + $0xe1] sm:$0xff]
      %v1010 = vld [vmem:[%s602 + $0xe9] sm:$0xff]
      %s1011 = scalar_lea.vmem %s3, 1
      %v1012 = vld [vmem:[%s1011] sm:$0x1]
      %v1014 = vlaneseq
      %v1015 = vshrl.u32 %v1014, 7
      %v1016 = vsub.s32 0, %v1015
      %v1017 = vrot.slane %v1012, %v1016
      %v1019 = vmul.f32 %v1017, %v995
      %v1020 = vmul.f32 %v1017, %v996
      %v1021 = vmul.f32 %v1017, %v997
      %v1022 = vmul.f32 %v1017, %v998
      %v1023 = vmul.f32 %v1017, %v999
      %v1024 = vmul.f32 %v1017, %v1000
      %v1025 = vmul.f32 %v1017, %v1001
      %v1026 = vmul.f32 %v1017, %v1002
      %v1027 = vmul.f32 %v1017, %v1003
      %v1028 = vmul.f32 %v1017, %v1004
      %v1029 = vmul.f32 %v1017, %v1005
      %v1030 = vmul.f32 %v1017, %v1006
      %v1031 = vmul.f32 %v1017, %v1007
      %v1032 = vmul.f32 %v1017, %v1008
      %v1033 = vmul.f32 %v1017, %v1009
      %v1034 = vmul.f32 %v1017, %v1010
      %v1035 = vadd.f32 %v979, %v1019
      %v1036 = vadd.f32 %v980, %v1020
      %v1037 = vadd.f32 %v981, %v1021
      %v1038 = vadd.f32 %v982, %v1022
      %v1039 = vadd.f32 %v983, %v1023
      %v1040 = vadd.f32 %v984, %v1024
      %v1041 = vadd.f32 %v985, %v1025
      %v1042 = vadd.f32 %v986, %v1026
      %v1043 = vadd.f32 %v987, %v1027
      %v1044 = vadd.f32 %v988, %v1028
      %v1045 = vadd.f32 %v989, %v1029
      %v1046 = vadd.f32 %v990, %v1030
      %v1047 = vadd.f32 %v991, %v1031
      %v1048 = vadd.f32 %v992, %v1032
      %v1049 = vadd.f32 %v993, %v1033
      %v1050 = vadd.f32 %v994, %v1034
      %v1051 = vld [vmem:[%s602 + $0x2] sm:$0xff]
      %v1052 = vld [vmem:[%s602 + $0xa] sm:$0xff]
      %v1053 = vld [vmem:[%s602 + $0x22] sm:$0xff]
      %v1054 = vld [vmem:[%s602 + $0x2a] sm:$0xff]
      %v1055 = vld [vmem:[%s602 + $0x42] sm:$0xff]
      %v1056 = vld [vmem:[%s602 + $0x4a] sm:$0xff]
      %v1057 = vld [vmem:[%s602 + $0x62] sm:$0xff]
      %v1058 = vld [vmem:[%s602 + $0x6a] sm:$0xff]
      %v1059 = vld [vmem:[%s602 + $0x82] sm:$0xff]
      %v1060 = vld [vmem:[%s602 + $0x8a] sm:$0xff]
      %v1061 = vld [vmem:[%s602 + $0xa2] sm:$0xff]
      %v1062 = vld [vmem:[%s602 + $0xaa] sm:$0xff]
      %v1063 = vld [vmem:[%s602 + $0xc2] sm:$0xff]
      %v1064 = vld [vmem:[%s602 + $0xca] sm:$0xff]
      %v1065 = vld [vmem:[%s602 + $0xe2] sm:$0xff]
      %v1066 = vld [vmem:[%s602 + $0xea] sm:$0xff]
      %s1067 = scalar_lea.vmem %s3, 2
      %v1068 = vld [vmem:[%s1067] sm:$0x1]
      %v1070 = vlaneseq
      %v1071 = vshrl.u32 %v1070, 7
      %v1072 = vsub.s32 0, %v1071
      %v1073 = vrot.slane %v1068, %v1072
      %v1075 = vmul.f32 %v1073, %v1051
      %v1076 = vmul.f32 %v1073, %v1052
      %v1077 = vmul.f32 %v1073, %v1053
      %v1078 = vmul.f32 %v1073, %v1054
      %v1079 = vmul.f32 %v1073, %v1055
      %v1080 = vmul.f32 %v1073, %v1056
      %v1081 = vmul.f32 %v1073, %v1057
      %v1082 = vmul.f32 %v1073, %v1058
      %v1083 = vmul.f32 %v1073, %v1059
      %v1084 = vmul.f32 %v1073, %v1060
      %v1085 = vmul.f32 %v1073, %v1061
      %v1086 = vmul.f32 %v1073, %v1062
      %v1087 = vmul.f32 %v1073, %v1063
      %v1088 = vmul.f32 %v1073, %v1064
      %v1089 = vmul.f32 %v1073, %v1065
      %v1090 = vmul.f32 %v1073, %v1066
      %v1091 = vadd.f32 %v1035, %v1075
      %v1092 = vadd.f32 %v1036, %v1076
      %v1093 = vadd.f32 %v1037, %v1077
      %v1094 = vadd.f32 %v1038, %v1078
      %v1095 = vadd.f32 %v1039, %v1079
      %v1096 = vadd.f32 %v1040, %v1080
      %v1097 = vadd.f32 %v1041, %v1081
      %v1098 = vadd.f32 %v1042, %v1082
      %v1099 = vadd.f32 %v1043, %v1083
      %v1100 = vadd.f32 %v1044, %v1084
      %v1101 = vadd.f32 %v1045, %v1085
      %v1102 = vadd.f32 %v1046, %v1086
      %v1103 = vadd.f32 %v1047, %v1087
      %v1104 = vadd.f32 %v1048, %v1088
      %v1105 = vadd.f32 %v1049, %v1089
      %v1106 = vadd.f32 %v1050, %v1090
      %v1107 = vld [vmem:[%s602 + $0x3] sm:$0xff]
      %v1108 = vld [vmem:[%s602 + $0xb] sm:$0xff]
      %v1109 = vld [vmem:[%s602 + $0x23] sm:$0xff]
      %v1110 = vld [vmem:[%s602 + $0x2b] sm:$0xff]
      %v1111 = vld [vmem:[%s602 + $0x43] sm:$0xff]
      %v1112 = vld [vmem:[%s602 + $0x4b] sm:$0xff]
      %v1113 = vld [vmem:[%s602 + $0x63] sm:$0xff]
      %v1114 = vld [vmem:[%s602 + $0x6b] sm:$0xff]
      %v1115 = vld [vmem:[%s602 + $0x83] sm:$0xff]
      %v1116 = vld [vmem:[%s602 + $0x8b] sm:$0xff]
      %v1117 = vld [vmem:[%s602 + $0xa3] sm:$0xff]
      %v1118 = vld [vmem:[%s602 + $0xab] sm:$0xff]
      %v1119 = vld [vmem:[%s602 + $0xc3] sm:$0xff]
      %v1120 = vld [vmem:[%s602 + $0xcb] sm:$0xff]
      %v1121 = vld [vmem:[%s602 + $0xe3] sm:$0xff]
      %v1122 = vld [vmem:[%s602 + $0xeb] sm:$0xff]
      %s1123 = scalar_lea.vmem %s3, 3
      %v1124 = vld [vmem:[%s1123] sm:$0x1]
      %v1126 = vlaneseq
      %v1127 = vshrl.u32 %v1126, 7
      %v1128 = vsub.s32 0, %v1127
      %v1129 = vrot.slane %v1124, %v1128
      %v1131 = vmul.f32 %v1129, %v1107
      %v1132 = vmul.f32 %v1129, %v1108
      %v1133 = vmul.f32 %v1129, %v1109
      %v1134 = vmul.f32 %v1129, %v1110
      %v1135 = vmul.f32 %v1129, %v1111
      %v1136 = vmul.f32 %v1129, %v1112
      %v1137 = vmul.f32 %v1129, %v1113
      %v1138 = vmul.f32 %v1129, %v1114
      %v1139 = vmul.f32 %v1129, %v1115
      %v1140 = vmul.f32 %v1129, %v1116
      %v1141 = vmul.f32 %v1129, %v1117
      %v1142 = vmul.f32 %v1129, %v1118
      %v1143 = vmul.f32 %v1129, %v1119
      %v1144 = vmul.f32 %v1129, %v1120
      %v1145 = vmul.f32 %v1129, %v1121
      %v1146 = vmul.f32 %v1129, %v1122
      %v1147 = vadd.f32 %v1091, %v1131
      %v1148 = vadd.f32 %v1092, %v1132
      %v1149 = vadd.f32 %v1093, %v1133
      %v1150 = vadd.f32 %v1094, %v1134
      %v1151 = vadd.f32 %v1095, %v1135
      %v1152 = vadd.f32 %v1096, %v1136
      %v1153 = vadd.f32 %v1097, %v1137
      %v1154 = vadd.f32 %v1098, %v1138
      %v1155 = vadd.f32 %v1099, %v1139
      %v1156 = vadd.f32 %v1100, %v1140
      %v1157 = vadd.f32 %v1101, %v1141
      %v1158 = vadd.f32 %v1102, %v1142
      %v1159 = vadd.f32 %v1103, %v1143
      %v1160 = vadd.f32 %v1104, %v1144
      %v1161 = vadd.f32 %v1105, %v1145
      %v1162 = vadd.f32 %v1106, %v1146
      %s1163 = scalar_lea.vmem %s3, 4
      %v1164 = vld [vmem:[%s1163] sm:$0x1]
      %v1166 = vlaneseq
      %v1167 = vshrl.u32 %v1166, 7
      %v1168 = vsub.s32 0, %v1167
      %v1169 = vrot.slane %v1164, %v1168
      %v1171 = vmul.f32 %v1169, %v603
      %v1172 = vmul.f32 %v1169, %v604
      %v1173 = vmul.f32 %v1169, %v605
      %v1174 = vmul.f32 %v1169, %v606
      %v1175 = vmul.f32 %v1169, %v607
      %v1176 = vmul.f32 %v1169, %v608
      %v1177 = vmul.f32 %v1169, %v609
      %v1178 = vmul.f32 %v1169, %v610
      %v1179 = vmul.f32 %v1169, %v611
      %v1180 = vmul.f32 %v1169, %v612
      %v1181 = vmul.f32 %v1169, %v613
      %v1182 = vmul.f32 %v1169, %v614
      %v1183 = vmul.f32 %v1169, %v615
      %v1184 = vmul.f32 %v1169, %v616
      %v1185 = vmul.f32 %v1169, %v617
      %v1186 = vmul.f32 %v1169, %v618
      %v1187 = vadd.f32 %v1147, %v1171
      %v1188 = vadd.f32 %v1148, %v1172
      %v1189 = vadd.f32 %v1149, %v1173
      %v1190 = vadd.f32 %v1150, %v1174
      %v1191 = vadd.f32 %v1151, %v1175
      %v1192 = vadd.f32 %v1152, %v1176
      %v1193 = vadd.f32 %v1153, %v1177
      %v1194 = vadd.f32 %v1154, %v1178
      %v1195 = vadd.f32 %v1155, %v1179
      %v1196 = vadd.f32 %v1156, %v1180
      %v1197 = vadd.f32 %v1157, %v1181
      %v1198 = vadd.f32 %v1158, %v1182
      %v1199 = vadd.f32 %v1159, %v1183
      %v1200 = vadd.f32 %v1160, %v1184
      %v1201 = vadd.f32 %v1161, %v1185
      %v1202 = vadd.f32 %v1162, %v1186
      %s1203 = scalar_lea.vmem %s3, 5
      %v1204 = vld [vmem:[%s1203] sm:$0x1]
      %v1206 = vlaneseq
      %v1207 = vshrl.u32 %v1206, 7
      %v1208 = vsub.s32 0, %v1207
      %v1209 = vrot.slane %v1204, %v1208
      %v1211 = vmul.f32 %v1209, %v659
      %v1212 = vmul.f32 %v1209, %v660
      %v1213 = vmul.f32 %v1209, %v661
      %v1214 = vmul.f32 %v1209, %v662
      %v1215 = vmul.f32 %v1209, %v663
      %v1216 = vmul.f32 %v1209, %v664
      %v1217 = vmul.f32 %v1209, %v665
      %v1218 = vmul.f32 %v1209, %v666
      %v1219 = vmul.f32 %v1209, %v667
      %v1220 = vmul.f32 %v1209, %v668
      %v1221 = vmul.f32 %v1209, %v669
      %v1222 = vmul.f32 %v1209, %v670
      %v1223 = vmul.f32 %v1209, %v671
      %v1224 = vmul.f32 %v1209, %v672
      %v1225 = vmul.f32 %v1209, %v673
      %v1226 = vmul.f32 %v1209, %v674
      %v1227 = vadd.f32 %v1187, %v1211
      %v1228 = vadd.f32 %v1188, %v1212
      %v1229 = vadd.f32 %v1189, %v1213
      %v1230 = vadd.f32 %v1190, %v1214
      %v1231 = vadd.f32 %v1191, %v1215
      %v1232 = vadd.f32 %v1192, %v1216
      %v1233 = vadd.f32 %v1193, %v1217
      %v1234 = vadd.f32 %v1194, %v1218
      %v1235 = vadd.f32 %v1195, %v1219
      %v1236 = vadd.f32 %v1196, %v1220
      %v1237 = vadd.f32 %v1197, %v1221
      %v1238 = vadd.f32 %v1198, %v1222
      %v1239 = vadd.f32 %v1199, %v1223
      %v1240 = vadd.f32 %v1200, %v1224
      %v1241 = vadd.f32 %v1201, %v1225
      %v1242 = vadd.f32 %v1202, %v1226
      %s1243 = scalar_lea.vmem %s3, 6
      %v1244 = vld [vmem:[%s1243] sm:$0x1]
      %v1246 = vlaneseq
      %v1247 = vshrl.u32 %v1246, 7
      %v1248 = vsub.s32 0, %v1247
      %v1249 = vrot.slane %v1244, %v1248
      %v1251 = vmul.f32 %v1249, %v715
      %v1252 = vmul.f32 %v1249, %v716
      %v1253 = vmul.f32 %v1249, %v717
      %v1254 = vmul.f32 %v1249, %v718
      %v1255 = vmul.f32 %v1249, %v719
      %v1256 = vmul.f32 %v1249, %v720
      %v1257 = vmul.f32 %v1249, %v721
      %v1258 = vmul.f32 %v1249, %v722
      %v1259 = vmul.f32 %v1249, %v723
      %v1260 = vmul.f32 %v1249, %v724
      %v1261 = vmul.f32 %v1249, %v725
      %v1262 = vmul.f32 %v1249, %v726
      %v1263 = vmul.f32 %v1249, %v727
      %v1264 = vmul.f32 %v1249, %v728
      %v1265 = vmul.f32 %v1249, %v729
      %v1266 = vmul.f32 %v1249, %v730
      %v1267 = vadd.f32 %v1227, %v1251
      %v1268 = vadd.f32 %v1228, %v1252
      %v1269 = vadd.f32 %v1229, %v1253
      %v1270 = vadd.f32 %v1230, %v1254
      %v1271 = vadd.f32 %v1231, %v1255
      %v1272 = vadd.f32 %v1232, %v1256
      %v1273 = vadd.f32 %v1233, %v1257
      %v1274 = vadd.f32 %v1234, %v1258
      %v1275 = vadd.f32 %v1235, %v1259
      %v1276 = vadd.f32 %v1236, %v1260
      %v1277 = vadd.f32 %v1237, %v1261
      %v1278 = vadd.f32 %v1238, %v1262
      %v1279 = vadd.f32 %v1239, %v1263
      %v1280 = vadd.f32 %v1240, %v1264
      %v1281 = vadd.f32 %v1241, %v1265
      %v1282 = vadd.f32 %v1242, %v1266
      %v1283 = vld [vmem:[%s602 + $0x7] sm:$0xff]
      %v1284 = vld [vmem:[%s602 + $0xf] sm:$0xff]
      %v1285 = vld [vmem:[%s602 + $0x27] sm:$0xff]
      %v1286 = vld [vmem:[%s602 + $0x2f] sm:$0xff]
      %v1287 = vld [vmem:[%s602 + $0x47] sm:$0xff]
      %v1288 = vld [vmem:[%s602 + $0x4f] sm:$0xff]
      %v1289 = vld [vmem:[%s602 + $0x67] sm:$0xff]
      %v1290 = vld [vmem:[%s602 + $0x6f] sm:$0xff]
      %v1291 = vld [vmem:[%s602 + $0x87] sm:$0xff]
      %v1292 = vld [vmem:[%s602 + $0x8f] sm:$0xff]
      %v1293 = vld [vmem:[%s602 + $0xa7] sm:$0xff]
      %v1294 = vld [vmem:[%s602 + $0xaf] sm:$0xff]
      %v1295 = vld [vmem:[%s602 + $0xc7] sm:$0xff]
      %v1296 = vld [vmem:[%s602 + $0xcf] sm:$0xff]
      %v1297 = vld [vmem:[%s602 + $0xe7] sm:$0xff]
      %v1298 = vld [vmem:[%s602 + $0xef] sm:$0xff]
      %s1299 = scalar_lea.vmem %s3, 7
      %v1300 = vld [vmem:[%s1299] sm:$0x1]
      %v1302 = vlaneseq
      %v1303 = vshrl.u32 %v1302, 7
      %v1304 = vsub.s32 0, %v1303
      %v1305 = vrot.slane %v1300, %v1304
      %v1307 = vmul.f32 %v1305, %v1283
      %v1308 = vmul.f32 %v1305, %v1284
      %v1309 = vmul.f32 %v1305, %v1285
      %v1310 = vmul.f32 %v1305, %v1286
      %v1311 = vmul.f32 %v1305, %v1287
      %v1312 = vmul.f32 %v1305, %v1288
      %v1313 = vmul.f32 %v1305, %v1289
      %v1314 = vmul.f32 %v1305, %v1290
      %v1315 = vmul.f32 %v1305, %v1291
      %v1316 = vmul.f32 %v1305, %v1292
      %v1317 = vmul.f32 %v1305, %v1293
      %v1318 = vmul.f32 %v1305, %v1294
      %v1319 = vmul.f32 %v1305, %v1295
      %v1320 = vmul.f32 %v1305, %v1296
      %v1321 = vmul.f32 %v1305, %v1297
      %v1322 = vmul.f32 %v1305, %v1298
      %v1323 = vadd.f32 %v1267, %v1307
      %v1324 = vadd.f32 %v1268, %v1308
      %v1325 = vadd.f32 %v1269, %v1309
      %v1326 = vadd.f32 %v1270, %v1310
      %v1327 = vadd.f32 %v1271, %v1311
      %v1328 = vadd.f32 %v1272, %v1312
      %v1329 = vadd.f32 %v1273, %v1313
      %v1330 = vadd.f32 %v1274, %v1314
      %v1331 = vadd.f32 %v1275, %v1315
      %v1332 = vadd.f32 %v1276, %v1316
      %v1333 = vadd.f32 %v1277, %v1317
      %v1334 = vadd.f32 %v1278, %v1318
      %v1335 = vadd.f32 %v1279, %v1319
      %v1336 = vadd.f32 %v1280, %v1320
      %v1337 = vadd.f32 %v1281, %v1321
      %v1338 = vadd.f32 %v1282, %v1322
      %v1339 = vld [vmem:[%s602 + $0x10] sm:$0xff]
      %v1340 = vld [vmem:[%s602 + $0x30] sm:$0xff]
      %v1341 = vld [vmem:[%s602 + $0x50] sm:$0xff]
      %v1342 = vld [vmem:[%s602 + $0x70] sm:$0xff]
      %v1343 = vld [vmem:[%s602 + $0x90] sm:$0xff]
      %v1344 = vld [vmem:[%s602 + $0xb0] sm:$0xff]
      %v1345 = vld [vmem:[%s602 + $0xd0] sm:$0xff]
      %v1346 = vld [vmem:[%s602 + $0xf0] sm:$0xff]
      %s1347 = scalar_lea.vmem %s3, 8
      %v1348 = vld [vmem:[%s1347] sm:$0x1]
      %v1350 = vlaneseq
      %v1351 = vshrl.u32 %v1350, 7
      %v1352 = vsub.s32 0, %v1351
      %v1353 = vrot.slane %v1348, %v1352
      %v1355 = vmul.f32 %v1353, %v941
      %v1356 = vmul.f32 %v1353, %v1339
      %v1357 = vmul.f32 %v1353, %v943
      %v1358 = vmul.f32 %v1353, %v1340
      %v1359 = vmul.f32 %v1353, %v945
      %v1360 = vmul.f32 %v1353, %v1341
      %v1361 = vmul.f32 %v1353, %v947
      %v1362 = vmul.f32 %v1353, %v1342
      %v1363 = vmul.f32 %v1353, %v949
      %v1364 = vmul.f32 %v1353, %v1343
      %v1365 = vmul.f32 %v1353, %v951
      %v1366 = vmul.f32 %v1353, %v1344
      %v1367 = vmul.f32 %v1353, %v953
      %v1368 = vmul.f32 %v1353, %v1345
      %v1369 = vmul.f32 %v1353, %v955
      %v1370 = vmul.f32 %v1353, %v1346
      %v1371 = vadd.f32 %v1323, %v1355
      %v1372 = vadd.f32 %v1324, %v1356
      %v1373 = vadd.f32 %v1325, %v1357
      %v1374 = vadd.f32 %v1326, %v1358
      %v1375 = vadd.f32 %v1327, %v1359
      %v1376 = vadd.f32 %v1328, %v1360
      %v1377 = vadd.f32 %v1329, %v1361
      %v1378 = vadd.f32 %v1330, %v1362
      %v1379 = vadd.f32 %v1331, %v1363
      %v1380 = vadd.f32 %v1332, %v1364
      %v1381 = vadd.f32 %v1333, %v1365
      %v1382 = vadd.f32 %v1334, %v1366
      %v1383 = vadd.f32 %v1335, %v1367
      %v1384 = vadd.f32 %v1336, %v1368
      %v1385 = vadd.f32 %v1337, %v1369
      %v1386 = vadd.f32 %v1338, %v1370
      %v1387 = vld [vmem:[%s602 + $0x11] sm:$0xff]
      %v1388 = vld [vmem:[%s602 + $0x31] sm:$0xff]
      %v1389 = vld [vmem:[%s602 + $0x51] sm:$0xff]
      %v1390 = vld [vmem:[%s602 + $0x71] sm:$0xff]
      %v1391 = vld [vmem:[%s602 + $0x91] sm:$0xff]
      %v1392 = vld [vmem:[%s602 + $0xb1] sm:$0xff]
      %v1393 = vld [vmem:[%s602 + $0xd1] sm:$0xff]
      %v1394 = vld [vmem:[%s602 + $0xf1] sm:$0xff]
      %s1395 = scalar_lea.vmem %s3, 9
      %v1396 = vld [vmem:[%s1395] sm:$0x1]
      %v1398 = vlaneseq
      %v1399 = vshrl.u32 %v1398, 7
      %v1400 = vsub.s32 0, %v1399
      %v1401 = vrot.slane %v1396, %v1400
      %v1403 = vmul.f32 %v1401, %v996
      %v1404 = vmul.f32 %v1401, %v1387
      %v1405 = vmul.f32 %v1401, %v998
      %v1406 = vmul.f32 %v1401, %v1388
      %v1407 = vmul.f32 %v1401, %v1000
      %v1408 = vmul.f32 %v1401, %v1389
      %v1409 = vmul.f32 %v1401, %v1002
      %v1410 = vmul.f32 %v1401, %v1390
      %v1411 = vmul.f32 %v1401, %v1004
      %v1412 = vmul.f32 %v1401, %v1391
      %v1413 = vmul.f32 %v1401, %v1006
      %v1414 = vmul.f32 %v1401, %v1392
      %v1415 = vmul.f32 %v1401, %v1008
      %v1416 = vmul.f32 %v1401, %v1393
      %v1417 = vmul.f32 %v1401, %v1010
      %v1418 = vmul.f32 %v1401, %v1394
      %v1419 = vadd.f32 %v1371, %v1403
      %v1420 = vadd.f32 %v1372, %v1404
      %v1421 = vadd.f32 %v1373, %v1405
      %v1422 = vadd.f32 %v1374, %v1406
      %v1423 = vadd.f32 %v1375, %v1407
      %v1424 = vadd.f32 %v1376, %v1408
      %v1425 = vadd.f32 %v1377, %v1409
      %v1426 = vadd.f32 %v1378, %v1410
      %v1427 = vadd.f32 %v1379, %v1411
      %v1428 = vadd.f32 %v1380, %v1412
      %v1429 = vadd.f32 %v1381, %v1413
      %v1430 = vadd.f32 %v1382, %v1414
      %v1431 = vadd.f32 %v1383, %v1415
      %v1432 = vadd.f32 %v1384, %v1416
      %v1433 = vadd.f32 %v1385, %v1417
      %v1434 = vadd.f32 %v1386, %v1418
      %v1435 = vld [vmem:[%s602 + $0x12] sm:$0xff]
      %v1436 = vld [vmem:[%s602 + $0x32] sm:$0xff]
      %v1437 = vld [vmem:[%s602 + $0x52] sm:$0xff]
      %v1438 = vld [vmem:[%s602 + $0x72] sm:$0xff]
      %v1439 = vld [vmem:[%s602 + $0x92] sm:$0xff]
      %v1440 = vld [vmem:[%s602 + $0xb2] sm:$0xff]
      %v1441 = vld [vmem:[%s602 + $0xd2] sm:$0xff]
      %v1442 = vld [vmem:[%s602 + $0xf2] sm:$0xff]
      %s1443 = scalar_lea.vmem %s3, 10
      %v1444 = vld [vmem:[%s1443] sm:$0x1]
      %v1446 = vlaneseq
      %v1447 = vshrl.u32 %v1446, 7
      %v1448 = vsub.s32 0, %v1447
      %v1449 = vrot.slane %v1444, %v1448
      %v1451 = vmul.f32 %v1449, %v1052
      %v1452 = vmul.f32 %v1449, %v1435
      %v1453 = vmul.f32 %v1449, %v1054
      %v1454 = vmul.f32 %v1449, %v1436
      %v1455 = vmul.f32 %v1449, %v1056
      %v1456 = vmul.f32 %v1449, %v1437
      %v1457 = vmul.f32 %v1449, %v1058
      %v1458 = vmul.f32 %v1449, %v1438
      %v1459 = vmul.f32 %v1449, %v1060
      %v1460 = vmul.f32 %v1449, %v1439
      %v1461 = vmul.f32 %v1449, %v1062
      %v1462 = vmul.f32 %v1449, %v1440
      %v1463 = vmul.f32 %v1449, %v1064
      %v1464 = vmul.f32 %v1449, %v1441
      %v1465 = vmul.f32 %v1449, %v1066
      %v1466 = vmul.f32 %v1449, %v1442
      %v1467 = vadd.f32 %v1419, %v1451
      %v1468 = vadd.f32 %v1420, %v1452
      %v1469 = vadd.f32 %v1421, %v1453
      %v1470 = vadd.f32 %v1422, %v1454
      %v1471 = vadd.f32 %v1423, %v1455
      %v1472 = vadd.f32 %v1424, %v1456
      %v1473 = vadd.f32 %v1425, %v1457
      %v1474 = vadd.f32 %v1426, %v1458
      %v1475 = vadd.f32 %v1427, %v1459
      %v1476 = vadd.f32 %v1428, %v1460
      %v1477 = vadd.f32 %v1429, %v1461
      %v1478 = vadd.f32 %v1430, %v1462
      %v1479 = vadd.f32 %v1431, %v1463
      %v1480 = vadd.f32 %v1432, %v1464
      %v1481 = vadd.f32 %v1433, %v1465
      %v1482 = vadd.f32 %v1434, %v1466
      %v1483 = vld [vmem:[%s420 + $0x5] sm:$0xff]
      %v1484 = vld [vmem:[%s420 + $0xd] sm:$0xff]
      %v1485 = vld [vmem:[%s420 + $0x25] sm:$0xff]
      %v1486 = vld [vmem:[%s420 + $0x2d] sm:$0xff]
      %v1487 = vld [vmem:[%s420 + $0x45] sm:$0xff]
      %v1488 = vld [vmem:[%s420 + $0x4d] sm:$0xff]
      %v1489 = vld [vmem:[%s420 + $0x65] sm:$0xff]
      %v1490 = vld [vmem:[%s420 + $0x6d] sm:$0xff]
      %v1491 = vld [vmem:[%s420 + $0x85] sm:$0xff]
      %v1492 = vld [vmem:[%s420 + $0x8d] sm:$0xff]
      %v1493 = vld [vmem:[%s420 + $0xa5] sm:$0xff]
      %v1494 = vld [vmem:[%s420 + $0xad] sm:$0xff]
      %v1495 = vld [vmem:[%s420 + $0xc5] sm:$0xff]
      %v1496 = vld [vmem:[%s420 + $0xcd] sm:$0xff]
      %v1497 = vld [vmem:[%s420 + $0xe5] sm:$0xff]
      %v1498 = vld [vmem:[%s420 + $0xed] sm:$0xff]
      %v1499 = vld [vmem:[%s4] sm:$0x1]
      %v1501 = vlaneseq
      %v1502 = vshrl.u32 %v1501, 7
      %v1503 = vsub.s32 0, %v1502
      %v1504 = vrot.slane %v1499, %v1503
      %v1506 = vmul.f32 %v1504, %v1483
      %v1507 = vmul.f32 %v1504, %v1484
      %v1508 = vmul.f32 %v1504, %v1485
      %v1509 = vmul.f32 %v1504, %v1486
      %v1510 = vmul.f32 %v1504, %v1487
      %v1511 = vmul.f32 %v1504, %v1488
      %v1512 = vmul.f32 %v1504, %v1489
      %v1513 = vmul.f32 %v1504, %v1490
      %v1514 = vmul.f32 %v1504, %v1491
      %v1515 = vmul.f32 %v1504, %v1492
      %v1516 = vmul.f32 %v1504, %v1493
      %v1517 = vmul.f32 %v1504, %v1494
      %v1518 = vmul.f32 %v1504, %v1495
      %v1519 = vmul.f32 %v1504, %v1496
      %v1520 = vmul.f32 %v1504, %v1497
      %v1521 = vmul.f32 %v1504, %v1498
      %v1522 = vadd.f32 %v1467, %v1506
      %v1523 = vadd.f32 %v1468, %v1507
      %v1524 = vadd.f32 %v1469, %v1508
      %v1525 = vadd.f32 %v1470, %v1509
      %v1526 = vadd.f32 %v1471, %v1510
      %v1527 = vadd.f32 %v1472, %v1511
      %v1528 = vadd.f32 %v1473, %v1512
      %v1529 = vadd.f32 %v1474, %v1513
      %v1530 = vadd.f32 %v1475, %v1514
      %v1531 = vadd.f32 %v1476, %v1515
      %v1532 = vadd.f32 %v1477, %v1516
      %v1533 = vadd.f32 %v1478, %v1517
      %v1534 = vadd.f32 %v1479, %v1518
      %v1535 = vadd.f32 %v1480, %v1519
      %v1536 = vadd.f32 %v1481, %v1520
      %v1537 = vadd.f32 %v1482, %v1521
      %s1538 = scalar_lea.vmem %s420, 32
      %v1539 = vld [vmem:[%s1538 + $0x5] sm:$0xff]
      %v1540 = vld [vmem:[%s1538 + $0xd] sm:$0xff]
      %v1541 = vld [vmem:[%s1538 + $0x25] sm:$0xff]
      %v1542 = vld [vmem:[%s1538 + $0x2d] sm:$0xff]
      %v1543 = vld [vmem:[%s1538 + $0x45] sm:$0xff]
      %v1544 = vld [vmem:[%s1538 + $0x4d] sm:$0xff]
      %v1545 = vld [vmem:[%s1538 + $0x65] sm:$0xff]
      %v1546 = vld [vmem:[%s1538 + $0x6d] sm:$0xff]
      %v1547 = vld [vmem:[%s1538 + $0x85] sm:$0xff]
      %v1548 = vld [vmem:[%s1538 + $0x8d] sm:$0xff]
      %v1549 = vld [vmem:[%s1538 + $0xa5] sm:$0xff]
      %v1550 = vld [vmem:[%s1538 + $0xad] sm:$0xff]
      %v1551 = vld [vmem:[%s1538 + $0xc5] sm:$0xff]
      %v1552 = vld [vmem:[%s1538 + $0xcd] sm:$0xff]
      %v1553 = vld [vmem:[%s1538 + $0xe5] sm:$0xff]
      %v1554 = vld [vmem:[%s1538 + $0xed] sm:$0xff]
      %s1555 = scalar_lea.vmem %s4, 1
      %v1556 = vld [vmem:[%s1555] sm:$0x1]
      %v1558 = vlaneseq
      %v1559 = vshrl.u32 %v1558, 7
      %v1560 = vsub.s32 0, %v1559
      %v1561 = vrot.slane %v1556, %v1560
      %v1563 = vmul.f32 %v1561, %v1539
      %v1564 = vmul.f32 %v1561, %v1540
      %v1565 = vmul.f32 %v1561, %v1541
      %v1566 = vmul.f32 %v1561, %v1542
      %v1567 = vmul.f32 %v1561, %v1543
      %v1568 = vmul.f32 %v1561, %v1544
      %v1569 = vmul.f32 %v1561, %v1545
      %v1570 = vmul.f32 %v1561, %v1546
      %v1571 = vmul.f32 %v1561, %v1547
      %v1572 = vmul.f32 %v1561, %v1548
      %v1573 = vmul.f32 %v1561, %v1549
      %v1574 = vmul.f32 %v1561, %v1550
      %v1575 = vmul.f32 %v1561, %v1551
      %v1576 = vmul.f32 %v1561, %v1552
      %v1577 = vmul.f32 %v1561, %v1553
      %v1578 = vmul.f32 %v1561, %v1554
      %v1579 = vadd.f32 %v1522, %v1563
      %v1580 = vadd.f32 %v1523, %v1564
      %v1581 = vadd.f32 %v1524, %v1565
      %v1582 = vadd.f32 %v1525, %v1566
      %v1583 = vadd.f32 %v1526, %v1567
      %v1584 = vadd.f32 %v1527, %v1568
      %v1585 = vadd.f32 %v1528, %v1569
      %v1586 = vadd.f32 %v1529, %v1570
      %v1587 = vadd.f32 %v1530, %v1571
      %v1588 = vadd.f32 %v1531, %v1572
      %v1589 = vadd.f32 %v1532, %v1573
      %v1590 = vadd.f32 %v1533, %v1574
      %v1591 = vadd.f32 %v1534, %v1575
      %v1592 = vadd.f32 %v1535, %v1576
      %v1593 = vadd.f32 %v1536, %v1577
      %v1594 = vadd.f32 %v1537, %v1578
      %s1595 = scalar_lea.vmem %s420, 64
      %v1596 = vld [vmem:[%s1595 + $0x5] sm:$0xff]
      %v1597 = vld [vmem:[%s1595 + $0xd] sm:$0xff]
      %v1598 = vld [vmem:[%s1595 + $0x25] sm:$0xff]
      %v1599 = vld [vmem:[%s1595 + $0x2d] sm:$0xff]
      %v1600 = vld [vmem:[%s1595 + $0x45] sm:$0xff]
      %v1601 = vld [vmem:[%s1595 + $0x4d] sm:$0xff]
      %v1602 = vld [vmem:[%s1595 + $0x65] sm:$0xff]
      %v1603 = vld [vmem:[%s1595 + $0x6d] sm:$0xff]
      %v1604 = vld [vmem:[%s1595 + $0x85] sm:$0xff]
      %v1605 = vld [vmem:[%s1595 + $0x8d] sm:$0xff]
      %v1606 = vld [vmem:[%s1595 + $0xa5] sm:$0xff]
      %v1607 = vld [vmem:[%s1595 + $0xad] sm:$0xff]
      %v1608 = vld [vmem:[%s1595 + $0xc5] sm:$0xff]
      %v1609 = vld [vmem:[%s1595 + $0xcd] sm:$0xff]
      %v1610 = vld [vmem:[%s1595 + $0xe5] sm:$0xff]
      %v1611 = vld [vmem:[%s1595 + $0xed] sm:$0xff]
      %s1612 = scalar_lea.vmem %s4, 2
      %v1613 = vld [vmem:[%s1612] sm:$0x1]
      %v1615 = vlaneseq
      %v1616 = vshrl.u32 %v1615, 7
      %v1617 = vsub.s32 0, %v1616
      %v1618 = vrot.slane %v1613, %v1617
      %v1620 = vmul.f32 %v1618, %v1596
      %v1621 = vmul.f32 %v1618, %v1597
      %v1622 = vmul.f32 %v1618, %v1598
      %v1623 = vmul.f32 %v1618, %v1599
      %v1624 = vmul.f32 %v1618, %v1600
      %v1625 = vmul.f32 %v1618, %v1601
      %v1626 = vmul.f32 %v1618, %v1602
      %v1627 = vmul.f32 %v1618, %v1603
      %v1628 = vmul.f32 %v1618, %v1604
      %v1629 = vmul.f32 %v1618, %v1605
      %v1630 = vmul.f32 %v1618, %v1606
      %v1631 = vmul.f32 %v1618, %v1607
      %v1632 = vmul.f32 %v1618, %v1608
      %v1633 = vmul.f32 %v1618, %v1609
      %v1634 = vmul.f32 %v1618, %v1610
      %v1635 = vmul.f32 %v1618, %v1611
      %v1636 = vadd.f32 %v1579, %v1620
      %v1637 = vadd.f32 %v1580, %v1621
      %v1638 = vadd.f32 %v1581, %v1622
      %v1639 = vadd.f32 %v1582, %v1623
      %v1640 = vadd.f32 %v1583, %v1624
      %v1641 = vadd.f32 %v1584, %v1625
      %v1642 = vadd.f32 %v1585, %v1626
      %v1643 = vadd.f32 %v1586, %v1627
      %v1644 = vadd.f32 %v1587, %v1628
      %v1645 = vadd.f32 %v1588, %v1629
      %v1646 = vadd.f32 %v1589, %v1630
      %v1647 = vadd.f32 %v1590, %v1631
      %v1648 = vadd.f32 %v1591, %v1632
      %v1649 = vadd.f32 %v1592, %v1633
      %v1650 = vadd.f32 %v1593, %v1634
      %v1651 = vadd.f32 %v1594, %v1635
      %s1652 = scalar_lea.vmem %s420, 96
      %v1653 = vld [vmem:[%s1652 + $0x5] sm:$0xff]
      %v1654 = vld [vmem:[%s1652 + $0xd] sm:$0xff]
      %v1655 = vld [vmem:[%s1652 + $0x25] sm:$0xff]
      %v1656 = vld [vmem:[%s1652 + $0x2d] sm:$0xff]
      %v1657 = vld [vmem:[%s1652 + $0x45] sm:$0xff]
      %v1658 = vld [vmem:[%s1652 + $0x4d] sm:$0xff]
      %v1659 = vld [vmem:[%s1652 + $0x65] sm:$0xff]
      %v1660 = vld [vmem:[%s1652 + $0x6d] sm:$0xff]
      %v1661 = vld [vmem:[%s1652 + $0x85] sm:$0xff]
      %v1662 = vld [vmem:[%s1652 + $0x8d] sm:$0xff]
      %v1663 = vld [vmem:[%s1652 + $0xa5] sm:$0xff]
      %v1664 = vld [vmem:[%s1652 + $0xad] sm:$0xff]
      %v1665 = vld [vmem:[%s1652 + $0xc5] sm:$0xff]
      %v1666 = vld [vmem:[%s1652 + $0xcd] sm:$0xff]
      %v1667 = vld [vmem:[%s1652 + $0xe5] sm:$0xff]
      %v1668 = vld [vmem:[%s1652 + $0xed] sm:$0xff]
      %s1669 = scalar_lea.vmem %s4, 3
      %v1670 = vld [vmem:[%s1669] sm:$0x1]
      %v1672 = vlaneseq
      %v1673 = vshrl.u32 %v1672, 7
      %v1674 = vsub.s32 0, %v1673
      %v1675 = vrot.slane %v1670, %v1674
      %v1677 = vmul.f32 %v1675, %v1653
      %v1678 = vmul.f32 %v1675, %v1654
      %v1679 = vmul.f32 %v1675, %v1655
      %v1680 = vmul.f32 %v1675, %v1656
      %v1681 = vmul.f32 %v1675, %v1657
      %v1682 = vmul.f32 %v1675, %v1658
      %v1683 = vmul.f32 %v1675, %v1659
      %v1684 = vmul.f32 %v1675, %v1660
      %v1685 = vmul.f32 %v1675, %v1661
      %v1686 = vmul.f32 %v1675, %v1662
      %v1687 = vmul.f32 %v1675, %v1663
      %v1688 = vmul.f32 %v1675, %v1664
      %v1689 = vmul.f32 %v1675, %v1665
      %v1690 = vmul.f32 %v1675, %v1666
      %v1691 = vmul.f32 %v1675, %v1667
      %v1692 = vmul.f32 %v1675, %v1668
      %v1693 = vadd.f32 %v1636, %v1677
      %v1694 = vadd.f32 %v1637, %v1678
      %v1695 = vadd.f32 %v1638, %v1679
      %v1696 = vadd.f32 %v1639, %v1680
      %v1697 = vadd.f32 %v1640, %v1681
      %v1698 = vadd.f32 %v1641, %v1682
      %v1699 = vadd.f32 %v1642, %v1683
      %v1700 = vadd.f32 %v1643, %v1684
      %v1701 = vadd.f32 %v1644, %v1685
      %v1702 = vadd.f32 %v1645, %v1686
      %v1703 = vadd.f32 %v1646, %v1687
      %v1704 = vadd.f32 %v1647, %v1688
      %v1705 = vadd.f32 %v1648, %v1689
      %v1706 = vadd.f32 %v1649, %v1690
      %v1707 = vadd.f32 %v1650, %v1691
      %v1708 = vadd.f32 %v1651, %v1692
      %s1709 = scalar_lea.vmem %s4, 4
      %v1710 = vld [vmem:[%s1709] sm:$0x1]
      %v1712 = vlaneseq
      %v1713 = vshrl.u32 %v1712, 7
      %v1714 = vsub.s32 0, %v1713
      %v1715 = vrot.slane %v1710, %v1714
      %v1717 = vmul.f32 %v1715, %v490
      %v1718 = vmul.f32 %v1715, %v491
      %v1719 = vmul.f32 %v1715, %v492
      %v1720 = vmul.f32 %v1715, %v493
      %v1721 = vmul.f32 %v1715, %v494
      %v1722 = vmul.f32 %v1715, %v495
      %v1723 = vmul.f32 %v1715, %v496
      %v1724 = vmul.f32 %v1715, %v497
      %v1725 = vmul.f32 %v1715, %v498
      %v1726 = vmul.f32 %v1715, %v499
      %v1727 = vmul.f32 %v1715, %v500
      %v1728 = vmul.f32 %v1715, %v501
      %v1729 = vmul.f32 %v1715, %v502
      %v1730 = vmul.f32 %v1715, %v503
      %v1731 = vmul.f32 %v1715, %v504
      %v1732 = vmul.f32 %v1715, %v505
      %v1733 = vadd.f32 %v1693, %v1717
      %v1734 = vadd.f32 %v1694, %v1718
      %v1735 = vadd.f32 %v1695, %v1719
      %v1736 = vadd.f32 %v1696, %v1720
      %v1737 = vadd.f32 %v1697, %v1721
      %v1738 = vadd.f32 %v1698, %v1722
      %v1739 = vadd.f32 %v1699, %v1723
      %v1740 = vadd.f32 %v1700, %v1724
      %v1741 = vadd.f32 %v1701, %v1725
      %v1742 = vadd.f32 %v1702, %v1726
      %v1743 = vadd.f32 %v1703, %v1727
      %v1744 = vadd.f32 %v1704, %v1728
      %v1745 = vadd.f32 %v1705, %v1729
      %v1746 = vadd.f32 %v1706, %v1730
      %v1747 = vadd.f32 %v1707, %v1731
      %v1748 = vadd.f32 %v1708, %v1732
      %s1749 = scalar_lea.vmem %s4, 5
      %v1750 = vld [vmem:[%s1749] sm:$0x1]
      %v1752 = vlaneseq
      %v1753 = vshrl.u32 %v1752, 7
      %v1754 = vsub.s32 0, %v1753
      %v1755 = vrot.slane %v1750, %v1754
      %v1757 = vmul.f32 %v1755, %v659
      %v1758 = vmul.f32 %v1755, %v660
      %v1759 = vmul.f32 %v1755, %v661
      %v1760 = vmul.f32 %v1755, %v662
      %v1761 = vmul.f32 %v1755, %v663
      %v1762 = vmul.f32 %v1755, %v664
      %v1763 = vmul.f32 %v1755, %v665
      %v1764 = vmul.f32 %v1755, %v666
      %v1765 = vmul.f32 %v1755, %v667
      %v1766 = vmul.f32 %v1755, %v668
      %v1767 = vmul.f32 %v1755, %v669
      %v1768 = vmul.f32 %v1755, %v670
      %v1769 = vmul.f32 %v1755, %v671
      %v1770 = vmul.f32 %v1755, %v672
      %v1771 = vmul.f32 %v1755, %v673
      %v1772 = vmul.f32 %v1755, %v674
      %v1773 = vadd.f32 %v1733, %v1757
      %v1774 = vadd.f32 %v1734, %v1758
      %v1775 = vadd.f32 %v1735, %v1759
      %v1776 = vadd.f32 %v1736, %v1760
      %v1777 = vadd.f32 %v1737, %v1761
      %v1778 = vadd.f32 %v1738, %v1762
      %v1779 = vadd.f32 %v1739, %v1763
      %v1780 = vadd.f32 %v1740, %v1764
      %v1781 = vadd.f32 %v1741, %v1765
      %v1782 = vadd.f32 %v1742, %v1766
      %v1783 = vadd.f32 %v1743, %v1767
      %v1784 = vadd.f32 %v1744, %v1768
      %v1785 = vadd.f32 %v1745, %v1769
      %v1786 = vadd.f32 %v1746, %v1770
      %v1787 = vadd.f32 %v1747, %v1771
      %v1788 = vadd.f32 %v1748, %v1772
      %s1789 = scalar_lea.vmem %s4, 6
      %v1790 = vld [vmem:[%s1789] sm:$0x1]
      %v1792 = vlaneseq
      %v1793 = vshrl.u32 %v1792, 7
      %v1794 = vsub.s32 0, %v1793
      %v1795 = vrot.slane %v1790, %v1794
      %v1797 = vmul.f32 %v1795, %v828
      %v1798 = vmul.f32 %v1795, %v829
      %v1799 = vmul.f32 %v1795, %v830
      %v1800 = vmul.f32 %v1795, %v831
      %v1801 = vmul.f32 %v1795, %v832
      %v1802 = vmul.f32 %v1795, %v833
      %v1803 = vmul.f32 %v1795, %v834
      %v1804 = vmul.f32 %v1795, %v835
      %v1805 = vmul.f32 %v1795, %v836
      %v1806 = vmul.f32 %v1795, %v837
      %v1807 = vmul.f32 %v1795, %v838
      %v1808 = vmul.f32 %v1795, %v839
      %v1809 = vmul.f32 %v1795, %v840
      %v1810 = vmul.f32 %v1795, %v841
      %v1811 = vmul.f32 %v1795, %v842
      %v1812 = vmul.f32 %v1795, %v843
      %v1813 = vadd.f32 %v1773, %v1797
      %v1814 = vadd.f32 %v1774, %v1798
      %v1815 = vadd.f32 %v1775, %v1799
      %v1816 = vadd.f32 %v1776, %v1800
      %v1817 = vadd.f32 %v1777, %v1801
      %v1818 = vadd.f32 %v1778, %v1802
      %v1819 = vadd.f32 %v1779, %v1803
      %v1820 = vadd.f32 %v1780, %v1804
      %v1821 = vadd.f32 %v1781, %v1805
      %v1822 = vadd.f32 %v1782, %v1806
      %v1823 = vadd.f32 %v1783, %v1807
      %v1824 = vadd.f32 %v1784, %v1808
      %v1825 = vadd.f32 %v1785, %v1809
      %v1826 = vadd.f32 %v1786, %v1810
      %v1827 = vadd.f32 %v1787, %v1811
      %v1828 = vadd.f32 %v1788, %v1812
      %s1829 = scalar_lea.vmem %s420, 224
      %v1830 = vld [vmem:[%s1829 + $0x5] sm:$0xff]
      %v1831 = vld [vmem:[%s1829 + $0xd] sm:$0xff]
      %v1832 = vld [vmem:[%s1829 + $0x25] sm:$0xff]
      %v1833 = vld [vmem:[%s1829 + $0x2d] sm:$0xff]
      %v1834 = vld [vmem:[%s1829 + $0x45] sm:$0xff]
      %v1835 = vld [vmem:[%s1829 + $0x4d] sm:$0xff]
      %v1836 = vld [vmem:[%s1829 + $0x65] sm:$0xff]
      %v1837 = vld [vmem:[%s1829 + $0x6d] sm:$0xff]
      %v1838 = vld [vmem:[%s1829 + $0x85] sm:$0xff]
      %v1839 = vld [vmem:[%s1829 + $0x8d] sm:$0xff]
      %v1840 = vld [vmem:[%s1829 + $0xa5] sm:$0xff]
      %v1841 = vld [vmem:[%s1829 + $0xad] sm:$0xff]
      %v1842 = vld [vmem:[%s1829 + $0xc5] sm:$0xff]
      %v1843 = vld [vmem:[%s1829 + $0xcd] sm:$0xff]
      %v1844 = vld [vmem:[%s1829 + $0xe5] sm:$0xff]
      %v1845 = vld [vmem:[%s1829 + $0xed] sm:$0xff]
      %s1846 = scalar_lea.vmem %s4, 7
      %v1847 = vld [vmem:[%s1846] sm:$0x1]
      %v1849 = vlaneseq
      %v1850 = vshrl.u32 %v1849, 7
      %v1851 = vsub.s32 0, %v1850
      %v1852 = vrot.slane %v1847, %v1851
      %v1854 = vmul.f32 %v1852, %v1830
      %v1855 = vmul.f32 %v1852, %v1831
      %v1856 = vmul.f32 %v1852, %v1832
      %v1857 = vmul.f32 %v1852, %v1833
      %v1858 = vmul.f32 %v1852, %v1834
      %v1859 = vmul.f32 %v1852, %v1835
      %v1860 = vmul.f32 %v1852, %v1836
      %v1861 = vmul.f32 %v1852, %v1837
      %v1862 = vmul.f32 %v1852, %v1838
      %v1863 = vmul.f32 %v1852, %v1839
      %v1864 = vmul.f32 %v1852, %v1840
      %v1865 = vmul.f32 %v1852, %v1841
      %v1866 = vmul.f32 %v1852, %v1842
      %v1867 = vmul.f32 %v1852, %v1843
      %v1868 = vmul.f32 %v1852, %v1844
      %v1869 = vmul.f32 %v1852, %v1845
      %v1870 = vadd.f32 %v1813, %v1854
      %v1871 = vadd.f32 %v1814, %v1855
      %v1872 = vadd.f32 %v1815, %v1856
      %v1873 = vadd.f32 %v1816, %v1857
      %v1874 = vadd.f32 %v1817, %v1858
      %v1875 = vadd.f32 %v1818, %v1859
      %v1876 = vadd.f32 %v1819, %v1860
      %v1877 = vadd.f32 %v1820, %v1861
      %v1878 = vadd.f32 %v1821, %v1862
      %v1879 = vadd.f32 %v1822, %v1863
      %v1880 = vadd.f32 %v1823, %v1864
      %v1881 = vadd.f32 %v1824, %v1865
      %v1882 = vadd.f32 %v1825, %v1866
      %v1883 = vadd.f32 %v1826, %v1867
      %v1884 = vadd.f32 %v1827, %v1868
      %v1885 = vadd.f32 %v1828, %v1869
      %s1886 = scalar_lea.vmem %s420, 256
      %v1887 = vld [vmem:[%s1886 + $0x5] sm:$0xff]
      %v1888 = vld [vmem:[%s1886 + $0xd] sm:$0xff]
      %v1889 = vld [vmem:[%s1886 + $0x25] sm:$0xff]
      %v1890 = vld [vmem:[%s1886 + $0x2d] sm:$0xff]
      %v1891 = vld [vmem:[%s1886 + $0x45] sm:$0xff]
      %v1892 = vld [vmem:[%s1886 + $0x4d] sm:$0xff]
      %v1893 = vld [vmem:[%s1886 + $0x65] sm:$0xff]
      %v1894 = vld [vmem:[%s1886 + $0x6d] sm:$0xff]
      %v1895 = vld [vmem:[%s1886 + $0x85] sm:$0xff]
      %v1896 = vld [vmem:[%s1886 + $0x8d] sm:$0xff]
      %v1897 = vld [vmem:[%s1886 + $0xa5] sm:$0xff]
      %v1898 = vld [vmem:[%s1886 + $0xad] sm:$0xff]
      %v1899 = vld [vmem:[%s1886 + $0xc5] sm:$0xff]
      %v1900 = vld [vmem:[%s1886 + $0xcd] sm:$0xff]
      %v1901 = vld [vmem:[%s1886 + $0xe5] sm:$0xff]
      %v1902 = vld [vmem:[%s1886 + $0xed] sm:$0xff]
      %s1903 = scalar_lea.vmem %s4, 8
      %v1904 = vld [vmem:[%s1903] sm:$0x1]
      %v1906 = vlaneseq
      %v1907 = vshrl.u32 %v1906, 7
      %v1908 = vsub.s32 0, %v1907
      %v1909 = vrot.slane %v1904, %v1908
      %v1911 = vmul.f32 %v1909, %v1887
      %v1912 = vmul.f32 %v1909, %v1888
      %v1913 = vmul.f32 %v1909, %v1889
      %v1914 = vmul.f32 %v1909, %v1890
      %v1915 = vmul.f32 %v1909, %v1891
      %v1916 = vmul.f32 %v1909, %v1892
      %v1917 = vmul.f32 %v1909, %v1893
      %v1918 = vmul.f32 %v1909, %v1894
      %v1919 = vmul.f32 %v1909, %v1895
      %v1920 = vmul.f32 %v1909, %v1896
      %v1921 = vmul.f32 %v1909, %v1897
      %v1922 = vmul.f32 %v1909, %v1898
      %v1923 = vmul.f32 %v1909, %v1899
      %v1924 = vmul.f32 %v1909, %v1900
      %v1925 = vmul.f32 %v1909, %v1901
      %v1926 = vmul.f32 %v1909, %v1902
      %v1927 = vadd.f32 %v1870, %v1911
      %v1928 = vadd.f32 %v1871, %v1912
      %v1929 = vadd.f32 %v1872, %v1913
      %v1930 = vadd.f32 %v1873, %v1914
      %v1931 = vadd.f32 %v1874, %v1915
      %v1932 = vadd.f32 %v1875, %v1916
      %v1933 = vadd.f32 %v1876, %v1917
      %v1934 = vadd.f32 %v1877, %v1918
      %v1935 = vadd.f32 %v1878, %v1919
      %v1936 = vadd.f32 %v1879, %v1920
      %v1937 = vadd.f32 %v1880, %v1921
      %v1938 = vadd.f32 %v1881, %v1922
      %v1939 = vadd.f32 %v1882, %v1923
      %v1940 = vadd.f32 %v1883, %v1924
      %v1941 = vadd.f32 %v1884, %v1925
      %v1942 = vadd.f32 %v1885, %v1926
      %s1943 = scalar_lea.vmem %s420, 288
      %v1944 = vld [vmem:[%s1943 + $0x5] sm:$0xff]
      %v1945 = vld [vmem:[%s1943 + $0xd] sm:$0xff]
      %v1946 = vld [vmem:[%s1943 + $0x25] sm:$0xff]
      %v1947 = vld [vmem:[%s1943 + $0x2d] sm:$0xff]
      %v1948 = vld [vmem:[%s1943 + $0x45] sm:$0xff]
      %v1949 = vld [vmem:[%s1943 + $0x4d] sm:$0xff]
      %v1950 = vld [vmem:[%s1943 + $0x65] sm:$0xff]
      %v1951 = vld [vmem:[%s1943 + $0x6d] sm:$0xff]
      %v1952 = vld [vmem:[%s1943 + $0x85] sm:$0xff]
      %v1953 = vld [vmem:[%s1943 + $0x8d] sm:$0xff]
      %v1954 = vld [vmem:[%s1943 + $0xa5] sm:$0xff]
      %v1955 = vld [vmem:[%s1943 + $0xad] sm:$0xff]
      %v1956 = vld [vmem:[%s1943 + $0xc5] sm:$0xff]
      %v1957 = vld [vmem:[%s1943 + $0xcd] sm:$0xff]
      %v1958 = vld [vmem:[%s1943 + $0xe5] sm:$0xff]
      %v1959 = vld [vmem:[%s1943 + $0xed] sm:$0xff]
      %s1960 = scalar_lea.vmem %s4, 9
      %v1961 = vld [vmem:[%s1960] sm:$0x1]
      %v1963 = vlaneseq
      %v1964 = vshrl.u32 %v1963, 7
      %v1965 = vsub.s32 0, %v1964
      %v1966 = vrot.slane %v1961, %v1965
      %v1968 = vmul.f32 %v1966, %v1944
      %v1969 = vmul.f32 %v1966, %v1945
      %v1970 = vmul.f32 %v1966, %v1946
      %v1971 = vmul.f32 %v1966, %v1947
      %v1972 = vmul.f32 %v1966, %v1948
      %v1973 = vmul.f32 %v1966, %v1949
      %v1974 = vmul.f32 %v1966, %v1950
      %v1975 = vmul.f32 %v1966, %v1951
      %v1976 = vmul.f32 %v1966, %v1952
      %v1977 = vmul.f32 %v1966, %v1953
      %v1978 = vmul.f32 %v1966, %v1954
      %v1979 = vmul.f32 %v1966, %v1955
      %v1980 = vmul.f32 %v1966, %v1956
      %v1981 = vmul.f32 %v1966, %v1957
      %v1982 = vmul.f32 %v1966, %v1958
      %v1983 = vmul.f32 %v1966, %v1959
      %v1984 = vadd.f32 %v1927, %v1968
      %v1985 = vadd.f32 %v1928, %v1969
      %v1986 = vadd.f32 %v1929, %v1970
      %v1987 = vadd.f32 %v1930, %v1971
      %v1988 = vadd.f32 %v1931, %v1972
      %v1989 = vadd.f32 %v1932, %v1973
      %v1990 = vadd.f32 %v1933, %v1974
      %v1991 = vadd.f32 %v1934, %v1975
      %v1992 = vadd.f32 %v1935, %v1976
      %v1993 = vadd.f32 %v1936, %v1977
      %v1994 = vadd.f32 %v1937, %v1978
      %v1995 = vadd.f32 %v1938, %v1979
      %v1996 = vadd.f32 %v1939, %v1980
      %v1997 = vadd.f32 %v1940, %v1981
      %v1998 = vadd.f32 %v1941, %v1982
      %v1999 = vadd.f32 %v1942, %v1983
      %s2000 = scalar_lea.vmem %s420, 320
      %v2001 = vld [vmem:[%s2000 + $0x5] sm:$0xff]
      %v2002 = vld [vmem:[%s2000 + $0xd] sm:$0xff]
      %v2003 = vld [vmem:[%s2000 + $0x25] sm:$0xff]
      %v2004 = vld [vmem:[%s2000 + $0x2d] sm:$0xff]
      %v2005 = vld [vmem:[%s2000 + $0x45] sm:$0xff]
      %v2006 = vld [vmem:[%s2000 + $0x4d] sm:$0xff]
      %v2007 = vld [vmem:[%s2000 + $0x65] sm:$0xff]
      %v2008 = vld [vmem:[%s2000 + $0x6d] sm:$0xff]
      %v2009 = vld [vmem:[%s2000 + $0x85] sm:$0xff]
      %v2010 = vld [vmem:[%s2000 + $0x8d] sm:$0xff]
      %v2011 = vld [vmem:[%s2000 + $0xa5] sm:$0xff]
      %v2012 = vld [vmem:[%s2000 + $0xad] sm:$0xff]
      %v2013 = vld [vmem:[%s2000 + $0xc5] sm:$0xff]
      %v2014 = vld [vmem:[%s2000 + $0xcd] sm:$0xff]
      %v2015 = vld [vmem:[%s2000 + $0xe5] sm:$0xff]
      %v2016 = vld [vmem:[%s2000 + $0xed] sm:$0xff]
      %s2017 = scalar_lea.vmem %s4, 10
      %v2018 = vld [vmem:[%s2017] sm:$0x1]
      %v2020 = vlaneseq
      %v2021 = vshrl.u32 %v2020, 7
      %v2022 = vsub.s32 0, %v2021
      %v2023 = vrot.slane %v2018, %v2022
      %v2025 = vmul.f32 %v2023, %v2001
      %v2026 = vmul.f32 %v2023, %v2002
      %v2027 = vmul.f32 %v2023, %v2003
      %v2028 = vmul.f32 %v2023, %v2004
      %v2029 = vmul.f32 %v2023, %v2005
      %v2030 = vmul.f32 %v2023, %v2006
      %v2031 = vmul.f32 %v2023, %v2007
      %v2032 = vmul.f32 %v2023, %v2008
      %v2033 = vmul.f32 %v2023, %v2009
      %v2034 = vmul.f32 %v2023, %v2010
      %v2035 = vmul.f32 %v2023, %v2011
      %v2036 = vmul.f32 %v2023, %v2012
      %v2037 = vmul.f32 %v2023, %v2013
      %v2038 = vmul.f32 %v2023, %v2014
      %v2039 = vmul.f32 %v2023, %v2015
      %v2040 = vmul.f32 %v2023, %v2016
      %v2041 = vadd.f32 %v1984, %v2025
      %v2042 = vadd.f32 %v1985, %v2026
      %v2043 = vadd.f32 %v1986, %v2027
      %v2044 = vadd.f32 %v1987, %v2028
      %v2045 = vadd.f32 %v1988, %v2029
      %v2046 = vadd.f32 %v1989, %v2030
      %v2047 = vadd.f32 %v1990, %v2031
      %v2048 = vadd.f32 %v1991, %v2032
      %v2049 = vadd.f32 %v1992, %v2033
      %v2050 = vadd.f32 %v1993, %v2034
      %v2051 = vadd.f32 %v1994, %v2035
      %v2052 = vadd.f32 %v1995, %v2036
      %v2053 = vadd.f32 %v1996, %v2037
      %v2054 = vadd.f32 %v1997, %v2038
      %v2055 = vadd.f32 %v1998, %v2039
      %v2056 = vadd.f32 %v1999, %v2040
      %v2057 = vld [vmem:[%s412] sm:$0xff]
      %v2058 = vld [vmem:[%s412 + $0x8] sm:$0xff]
      %v2059 = vld [vmem:[%s412 + $0x10] sm:$0xff]
      %v2060 = vld [vmem:[%s412 + $0x18] sm:$0xff]
      %v2061 = vld [vmem:[%s412 + $0x20] sm:$0xff]
      %v2062 = vld [vmem:[%s412 + $0x28] sm:$0xff]
      %v2063 = vld [vmem:[%s412 + $0x30] sm:$0xff]
      %v2064 = vld [vmem:[%s412 + $0x38] sm:$0xff]
      %v2065 = vld [vmem:[%s412 + $0x40] sm:$0xff]
      %v2066 = vld [vmem:[%s412 + $0x48] sm:$0xff]
      %v2067 = vld [vmem:[%s412 + $0x50] sm:$0xff]
      %v2068 = vld [vmem:[%s412 + $0x58] sm:$0xff]
      %v2069 = vld [vmem:[%s412 + $0x60] sm:$0xff]
      %v2070 = vld [vmem:[%s412 + $0x68] sm:$0xff]
      %v2071 = vld [vmem:[%s412 + $0x70] sm:$0xff]
      %v2072 = vld [vmem:[%s412 + $0x78] sm:$0xff]
      %v2073 = vpack.c.bf16 %v2058, %v2057
      %v2074 = vpack.c.bf16 %v2060, %v2059
      %v2075 = vpack.c.bf16 %v2062, %v2061
      %v2076 = vpack.c.bf16 %v2064, %v2063
      %v2077 = vpack.c.bf16 %v2066, %v2065
      %v2078 = vpack.c.bf16 %v2068, %v2067
      %v2079 = vpack.c.bf16 %v2070, %v2069
      %v2080 = vpack.c.bf16 %v2072, %v2071
      %v2081 = vld [vmem:[%s5] sm:$0xf]
      %v2082 = vld [vmem:[%s5 + $0x4] sm:$0x1]
      %v2083 = vpack.c.bf16 %v2042, %v2041
      %v2084 = vpack.c.bf16 %v2044, %v2043
      %v2085 = vpack.c.bf16 %v2046, %v2045
      %v2086 = vpack.c.bf16 %v2048, %v2047
      %v2087 = vpack.c.bf16 %v2050, %v2049
      %v2088 = vpack.c.bf16 %v2052, %v2051
      %v2089 = vpack.c.bf16 %v2054, %v2053
      %v2090 = vpack.c.bf16 %v2056, %v2055
      %v2091 = vld [vmem:[%s6] sm:$0x7]
      %vm2092 = vcmask 48128
      %v2094 = vsel %vm2092, %v2083, 0
      %v2097 = vsel %vm2092, %v2084, 0
      %v2100 = vsel %vm2092, %v2085, 0
      %v2103 = vsel %vm2092, %v2086, 0
      %v2106 = vsel %vm2092, %v2087, 0
      %v2109 = vsel %vm2092, %v2088, 0
      %v2112 = vsel %vm2092, %v2089, 0
      %v2115 = vsel %vm2092, %v2090, 0
      %vm2117 = vcmask 1042432
      %v2119 = vsel %vm2117, %v2091, 0
      %2121 = vmatprep.subr.bf16.mxu0 0
      %2122 = vmatpush1.bf16.msra.mxu0 %v2119
      %2123 = vmatprep.subr.bf16.mxu0 0
      %2124 = vmatpush1.bf16.msra.mxu0 0
      %2125 = vmatprep.subr.bf16.mxu0 0
      %2126 = vmatpush1.bf16.msra.mxu0 0
      %2127 = vmatprep.subr.bf16.mxu0 0
      %2128 = vmatpush1.bf16.msra.mxu0 0
      %2129 = vmatprep.subr.bf16.mxu0 0
      %2130 = vmatpush1.bf16.msra.mxu0 0
      %2131 = vmatprep.subr.bf16.mxu0 0
      %2132 = vmatpush1.bf16.msra.mxu0 0
      %2133 = vmatprep.subr.bf16.mxu0 0
      %2134 = vmatpush1.bf16.msra.mxu0 0
      %2135 = vmatprep.subr.bf16.mxu0 0
      %2136 = vmatpush1.bf16.msra.mxu0 0
      %2137 = vmatprep.subr.bf16.mxu0 0
      %2138 = vmatpush1.bf16.msra.mxu0 0
      %2139 = vmatprep.subr.bf16.mxu0 0
      %2140 = vmatpush1.bf16.msra.mxu0 0
      %2141 = vmatprep.subr.bf16.mxu0 0
      %2142 = vmatpush1.bf16.msra.mxu0 0
      %2143 = vmatprep.subr.bf16.mxu0 0
      %2144 = vmatpush1.bf16.msra.mxu0 0
      %2145 = vmatprep.subr.bf16.mxu0 0
      %2146 = vmatpush1.bf16.msra.mxu0 0
      %2147 = vmatprep.subr.bf16.mxu0 0
      %2148 = vmatpush1.bf16.msra.mxu0 0
      %2149 = vmatprep.subr.bf16.mxu0 0
      %2150 = vmatpush1.bf16.msra.mxu0 0
      %2151 = vmatprep.subr.bf16.mxu0 0
      %2152 = vmatpush1.bf16.msra.mxu0 0
      %2153 = vmatprep.mubr.bf16.mxu0 0
      %2154 = vmatmul.mubr.bf16.gmra.mrb[0].mxu0 %v2094
      %v2155 = vpop.f32.mrb[0].mxu0
      %v2156 = vadd.f32 0.0, %v2155
      %v2157 = vpop.f32.mrb[0].mxu0
      %v2158 = vpop.f32.mrb[0].mxu0
      %v2159 = vadd.f32 0.0, %v2158
      %v2160 = vpop.f32.mrb[0].mxu0
      %2161 = vmatprep.mubr.bf16.mxu0 0
      %2162 = vmatmul.mubr.bf16.gmra.mrb[0].mxu0 %v2097
      %v2163 = vpop.f32.mrb[0].mxu0
      %v2164 = vadd.f32 0.0, %v2163
      %v2165 = vpop.f32.mrb[0].mxu0
      %v2166 = vpop.f32.mrb[0].mxu0
      %v2167 = vadd.f32 0.0, %v2166
      %v2168 = vpop.f32.mrb[0].mxu0
      %2169 = vmatprep.mubr.bf16.mxu0 0
      %2170 = vmatmul.mubr.bf16.gmra.mrb[0].mxu0 %v2100
      %v2171 = vpop.f32.mrb[0].mxu0
      %v2172 = vadd.f32 0.0, %v2171
      %v2173 = vpop.f32.mrb[0].mxu0
      %v2174 = vpop.f32.mrb[0].mxu0
      %v2175 = vadd.f32 0.0, %v2174
      %v2176 = vpop.f32.mrb[0].mxu0
      %2177 = vmatprep.mubr.bf16.mxu0 0
      %2178 = vmatmul.mubr.bf16.gmra.mrb[0].mxu0 %v2103
      %v2179 = vpop.f32.mrb[0].mxu0
      %v2180 = vadd.f32 0.0, %v2179
      %v2181 = vpop.f32.mrb[0].mxu0
      %v2182 = vpop.f32.mrb[0].mxu0
      %v2183 = vadd.f32 0.0, %v2182
      %v2184 = vpop.f32.mrb[0].mxu0
      %2185 = vmatprep.mubr.bf16.mxu0 0
      %2186 = vmatmul.mubr.bf16.gmra.mrb[0].mxu0 %v2106
      %v2187 = vpop.f32.mrb[0].mxu0
      %v2188 = vadd.f32 0.0, %v2187
      %v2189 = vpop.f32.mrb[0].mxu0
      %v2190 = vpop.f32.mrb[0].mxu0
      %v2191 = vadd.f32 0.0, %v2190
      %v2192 = vpop.f32.mrb[0].mxu0
      %2193 = vmatprep.mubr.bf16.mxu0 0
      %2194 = vmatmul.mubr.bf16.gmra.mrb[0].mxu0 %v2109
      %v2195 = vpop.f32.mrb[0].mxu0
      %v2196 = vadd.f32 0.0, %v2195
      %v2197 = vpop.f32.mrb[0].mxu0
      %v2198 = vpop.f32.mrb[0].mxu0
      %v2199 = vadd.f32 0.0, %v2198
      %v2200 = vpop.f32.mrb[0].mxu0
      %2201 = vmatprep.mubr.bf16.mxu0 0
      %2202 = vmatmul.mubr.bf16.gmra.mrb[0].mxu0 %v2112
      %v2203 = vpop.f32.mrb[0].mxu0
      %v2204 = vadd.f32 0.0, %v2203
      %v2205 = vpop.f32.mrb[0].mxu0
      %v2206 = vpop.f32.mrb[0].mxu0
      %v2207 = vadd.f32 0.0, %v2206
      %v2208 = vpop.f32.mrb[0].mxu0
      %2209 = vmatprep.mubr.bf16.mxu0 0
      %2210 = vmatmul.mubr.bf16.gmra.mrb[0].mxu0 %v2115
      %v2211 = vpop.f32.mrb[0].mxu0
      %v2212 = vadd.f32 0.0, %v2211
      %v2213 = vpop.f32.mrb[0].mxu0
      %v2214 = vpop.f32.mrb[0].mxu0
      %v2215 = vadd.f32 0.0, %v2214
      %v2216 = vpop.f32.mrb[0].mxu0
      %2217 = vdwg.mxu0
      %v2220 = vunpack.c.l.b16 %v2081
      %v2221 = vunpack.c.l.b16 %v2082
      %v2222 = vpack.c.b16 %v2221, %v2220
      %vm2223 = vcmask 80896
      %v2225 = vsel %vm2223, %v2073, 0
      %v2228 = vsel %vm2223, %v2074, 0
      %v2231 = vsel %vm2223, %v2075, 0
      %v2234 = vsel %vm2223, %v2076, 0
      %v2237 = vsel %vm2223, %v2077, 0
      %v2240 = vsel %vm2223, %v2078, 0
      %v2243 = vsel %vm2223, %v2079, 0
      %v2246 = vsel %vm2223, %v2080, 0
      %vm2248 = vcmask 1044480
      %v2250 = vsel %vm2248, %v2222, 0
      %2252 = vmatprep.subr.bf16.mxu0 0
      %2253 = vmatpush1.bf16.msra.mxu0 %v2250
      %2254 = vmatprep.subr.bf16.mxu0 0
      %2255 = vmatpush1.bf16.msra.mxu0 0
      %2256 = vmatprep.subr.bf16.mxu0 0
      %2257 = vmatpush1.bf16.msra.mxu0 0
      %2258 = vmatprep.subr.bf16.mxu0 0
      %2259 = vmatpush1.bf16.msra.mxu0 0
      %2260 = vmatprep.subr.bf16.mxu0 0
      %2261 = vmatpush1.bf16.msra.mxu0 0
      %2262 = vmatprep.subr.bf16.mxu0 0
      %2263 = vmatpush1.bf16.msra.mxu0 0
      %2264 = vmatprep.subr.bf16.mxu0 0
      %2265 = vmatpush1.bf16.msra.mxu0 0
      %2266 = vmatprep.subr.bf16.mxu0 0
      %2267 = vmatpush1.bf16.msra.mxu0 0
      %2268 = vmatprep.subr.bf16.mxu0 0
      %2269 = vmatpush1.bf16.msra.mxu0 0
      %2270 = vmatprep.subr.bf16.mxu0 0
      %2271 = vmatpush1.bf16.msra.mxu0 0
      %2272 = vmatprep.subr.bf16.mxu0 0
      %2273 = vmatpush1.bf16.msra.mxu0 0
      %2274 = vmatprep.subr.bf16.mxu0 0
      %2275 = vmatpush1.bf16.msra.mxu0 0
      %2276 = vmatprep.subr.bf16.mxu0 0
      %2277 = vmatpush1.bf16.msra.mxu0 0
      %2278 = vmatprep.subr.bf16.mxu0 0
      %2279 = vmatpush1.bf16.msra.mxu0 0
      %2280 = vmatprep.subr.bf16.mxu0 0
      %2281 = vmatpush1.bf16.msra.mxu0 0
      %2282 = vmatprep.subr.bf16.mxu0 0
      %2283 = vmatpush1.bf16.msra.mxu0 0
      %2284 = vmatprep.mubr.bf16.mxu0 0
      %2285 = vmatmul.mubr.bf16.gmra.mrb[0].mxu0 %v2225
      %v2286 = vpop.f32.mrb[0].mxu0
      %v2287 = vadd.f32 %v2156, %v2286
      %v2288 = vpop.f32.mrb[0].mxu0
      %v2289 = vpop.f32.mrb[0].mxu0
      %v2290 = vadd.f32 %v2159, %v2289
      %v2291 = vpop.f32.mrb[0].mxu0
      %2292 = vmatprep.mubr.bf16.mxu0 0
      %2293 = vmatmul.mubr.bf16.gmra.mrb[0].mxu0 %v2228
      %v2294 = vpop.f32.mrb[0].mxu0
      %v2295 = vadd.f32 %v2164, %v2294
      %v2296 = vpop.f32.mrb[0].mxu0
      %v2297 = vpop.f32.mrb[0].mxu0
      %v2298 = vadd.f32 %v2167, %v2297
      %v2299 = vpop.f32.mrb[0].mxu0
      %2300 = vmatprep.mubr.bf16.mxu0 0
      %2301 = vmatmul.mubr.bf16.gmra.mrb[0].mxu0 %v2231
      %v2302 = vpop.f32.mrb[0].mxu0
      %v2303 = vadd.f32 %v2172, %v2302
      %v2304 = vpop.f32.mrb[0].mxu0
      %v2305 = vpop.f32.mrb[0].mxu0
      %v2306 = vadd.f32 %v2175, %v2305
      %v2307 = vpop.f32.mrb[0].mxu0
      %2308 = vmatprep.mubr.bf16.mxu0 0
      %2309 = vmatmul.mubr.bf16.gmra.mrb[0].mxu0 %v2234
      %v2310 = vpop.f32.mrb[0].mxu0
      %v2311 = vadd.f32 %v2180, %v2310
      %v2312 = vpop.f32.mrb[0].mxu0
      %v2313 = vpop.f32.mrb[0].mxu0
      %v2314 = vadd.f32 %v2183, %v2313
      %v2315 = vpop.f32.mrb[0].mxu0
      %2316 = vmatprep.mubr.bf16.mxu0 0
      %2317 = vmatmul.mubr.bf16.gmra.mrb[0].mxu0 %v2237
      %v2318 = vpop.f32.mrb[0].mxu0
      %v2319 = vadd.f32 %v2188, %v2318
      %v2320 = vpop.f32.mrb[0].mxu0
      %v2321 = vpop.f32.mrb[0].mxu0
      %v2322 = vadd.f32 %v2191, %v2321
      %v2323 = vpop.f32.mrb[0].mxu0
      %2324 = vmatprep.mubr.bf16.mxu0 0
      %2325 = vmatmul.mubr.bf16.gmra.mrb[0].mxu0 %v2240
      %v2326 = vpop.f32.mrb[0].mxu0
      %v2327 = vadd.f32 %v2196, %v2326
      %v2328 = vpop.f32.mrb[0].mxu0
      %v2329 = vpop.f32.mrb[0].mxu0
      %v2330 = vadd.f32 %v2199, %v2329
      %v2331 = vpop.f32.mrb[0].mxu0
      %2332 = vmatprep.mubr.bf16.mxu0 0
      %2333 = vmatmul.mubr.bf16.gmra.mrb[0].mxu0 %v2243
      %v2334 = vpop.f32.mrb[0].mxu0
      %v2335 = vadd.f32 %v2204, %v2334
      %v2336 = vpop.f32.mrb[0].mxu0
      %v2337 = vpop.f32.mrb[0].mxu0
      %v2338 = vadd.f32 %v2207, %v2337
      %v2339 = vpop.f32.mrb[0].mxu0
      %2340 = vmatprep.mubr.bf16.mxu0 0
      %2341 = vmatmul.mubr.bf16.gmra.mrb[0].mxu0 %v2246
      %v2342 = vpop.f32.mrb[0].mxu0
      %v2343 = vadd.f32 %v2212, %v2342
      %v2344 = vpop.f32.mrb[0].mxu0
      %v2345 = vpop.f32.mrb[0].mxu0
      %v2346 = vadd.f32 %v2215, %v2345
      %v2347 = vpop.f32.mrb[0].mxu0
      %2348 = vdwg.mxu0
      %v2349 = vld [vmem:[%s7] sm:$0x1]
      %v2351 = vlaneseq
      %v2352 = vshrl.u32 %v2351, 7
      %v2353 = vsub.s32 0, %v2352
      %v2354 = vrot.slane %v2349, %v2353
      %v2356 = vadd.f32 %v2287, %v2354
      %v2357 = vadd.f32 %v2290, %v2354
      %v2358 = vadd.f32 %v2295, %v2354
      %v2359 = vadd.f32 %v2298, %v2354
      %v2360 = vadd.f32 %v2303, %v2354
      %v2361 = vadd.f32 %v2306, %v2354
      %v2362 = vadd.f32 %v2311, %v2354
      %v2363 = vadd.f32 %v2314, %v2354
      %v2364 = vadd.f32 %v2319, %v2354
      %v2365 = vadd.f32 %v2322, %v2354
      %v2366 = vadd.f32 %v2327, %v2354
      %v2367 = vadd.f32 %v2330, %v2354
      %v2368 = vadd.f32 %v2335, %v2354
      %v2369 = vadd.f32 %v2338, %v2354
      %v2370 = vadd.f32 %v2343, %v2354
      %v2371 = vadd.f32 %v2346, %v2354
      %v2372 = vmul.f32 %v2356, 0.5
      %v2373 = vmul.f32 %v2357, 0.5
      %v2374 = vmul.f32 %v2358, 0.5
      %v2375 = vmul.f32 %v2359, 0.5
      %v2376 = vmul.f32 %v2360, 0.5
      %v2377 = vmul.f32 %v2361, 0.5
      %v2378 = vmul.f32 %v2362, 0.5
      %v2379 = vmul.f32 %v2363, 0.5
      %v2380 = vmul.f32 %v2364, 0.5
      %v2381 = vmul.f32 %v2365, 0.5
      %v2382 = vmul.f32 %v2366, 0.5
      %v2383 = vmul.f32 %v2367, 0.5
      %v2384 = vmul.f32 %v2368, 0.5
      %v2385 = vmul.f32 %v2369, 0.5
      %v2386 = vmul.f32 %v2370, 0.5
      %v2387 = vmul.f32 %v2371, 0.5
      %v2388 = vmul.f32 %v2356, 0.70710677
      %v2389 = vmul.f32 %v2357, 0.70710677
      %v2390 = vmul.f32 %v2358, 0.70710677
      %v2391 = vmul.f32 %v2359, 0.70710677
      %v2392 = vmul.f32 %v2360, 0.70710677
      %v2393 = vmul.f32 %v2361, 0.70710677
      %v2394 = vmul.f32 %v2362, 0.70710677
      %v2395 = vmul.f32 %v2363, 0.70710677
      %v2396 = vmul.f32 %v2364, 0.70710677
      %v2397 = vmul.f32 %v2365, 0.70710677
      %v2398 = vmul.f32 %v2366, 0.70710677
      %v2399 = vmul.f32 %v2367, 0.70710677
      %v2400 = vmul.f32 %v2368, 0.70710677
      %v2401 = vmul.f32 %v2369, 0.70710677
      %v2402 = vmul.f32 %v2370, 0.70710677
      %v2403 = vmul.f32 %v2371, 0.70710677
      %v2404 = verf.f32.pop %v2388
      %v2405 = verf.f32.pop %v2389
      %v2406 = verf.f32.pop %v2390
      %v2407 = verf.f32.pop %v2391
      %v2408 = verf.f32.pop %v2392
      %v2409 = verf.f32.pop %v2393
      %v2410 = verf.f32.pop %v2394
      %v2411 = verf.f32.pop %v2395
      %v2412 = verf.f32.pop %v2396
      %v2413 = verf.f32.pop %v2397
      %v2414 = verf.f32.pop %v2398
      %v2415 = verf.f32.pop %v2399
      %v2416 = verf.f32.pop %v2400
      %v2417 = verf.f32.pop %v2401
      %v2418 = verf.f32.pop %v2402
      %v2419 = verf.f32.pop %v2403
      %v2420 = vadd.f32 %v2404, 1.0
      %v2421 = vadd.f32 %v2405, 1.0
      %v2422 = vadd.f32 %v2406, 1.0
      %v2423 = vadd.f32 %v2407, 1.0
      %v2424 = vadd.f32 %v2408, 1.0
      %v2425 = vadd.f32 %v2409, 1.0
      %v2426 = vadd.f32 %v2410, 1.0
      %v2427 = vadd.f32 %v2411, 1.0
      %v2428 = vadd.f32 %v2412, 1.0
      %v2429 = vadd.f32 %v2413, 1.0
      %v2430 = vadd.f32 %v2414, 1.0
      %v2431 = vadd.f32 %v2415, 1.0
      %v2432 = vadd.f32 %v2416, 1.0
      %v2433 = vadd.f32 %v2417, 1.0
      %v2434 = vadd.f32 %v2418, 1.0
      %v2435 = vadd.f32 %v2419, 1.0
      %v2436 = vmul.f32 %v2372, %v2420
      %v2437 = vmul.f32 %v2373, %v2421
      %v2438 = vmul.f32 %v2374, %v2422
      %v2439 = vmul.f32 %v2375, %v2423
      %v2440 = vmul.f32 %v2376, %v2424
      %v2441 = vmul.f32 %v2377, %v2425
      %v2442 = vmul.f32 %v2378, %v2426
      %v2443 = vmul.f32 %v2379, %v2427
      %v2444 = vmul.f32 %v2380, %v2428
      %v2445 = vmul.f32 %v2381, %v2429
      %v2446 = vmul.f32 %v2382, %v2430
      %v2447 = vmul.f32 %v2383, %v2431
      %v2448 = vmul.f32 %v2384, %v2432
      %v2449 = vmul.f32 %v2385, %v2433
      %v2450 = vmul.f32 %v2386, %v2434
      %v2451 = vmul.f32 %v2387, %v2435
      %v2452 = vpack.c.bf16 %v2437, %v2436
      %v2453 = vpack.c.bf16 %v2439, %v2438
      %v2454 = vpack.c.bf16 %v2441, %v2440
      %v2455 = vpack.c.bf16 %v2443, %v2442
      %v2456 = vpack.c.bf16 %v2445, %v2444
      %v2457 = vpack.c.bf16 %v2447, %v2446
      %v2458 = vpack.c.bf16 %v2449, %v2448
      %v2459 = vpack.c.bf16 %v2451, %v2450
      %v2460 = vld [vmem:[%s8] sm:$0xf]
      %v2461 = vld [vmem:[%s8 + $0x4] sm:$0xf]
      %v2462 = vld [vmem:[%s8 + $0x8] sm:$0xf]
      %v2463 = vld [vmem:[%s8 + $0xc] sm:$0xf]
      %v2464 = vld [vmem:[%s8 + $0x10] sm:$0xf]
      %v2465 = vld [vmem:[%s8 + $0x14] sm:$0xf]
      %v2466 = vld [vmem:[%s8 + $0x18] sm:$0xf]
      %v2467 = vld [vmem:[%s8 + $0x1c] sm:$0xf]
      %v2468 = vld [vmem:[%s9] sm:$0x1]
      %v2470 = vlaneseq
      %v2471 = vshrl.u32 %v2470, 7
      %v2472 = vsub.s32 0, %v2471
      %v2473 = vrot.slane %v2468, %v2472
      %v2483 = vunpack.c.l.b16 %v2460
      %v2484 = vunpack.c.l.b16 %v2461
      %v2485 = vunpack.c.l.b16 %v2462
      %v2486 = vunpack.c.l.b16 %v2463
      %v2487 = vunpack.c.l.b16 %v2464
      %v2488 = vunpack.c.l.b16 %v2465
      %v2489 = vunpack.c.l.b16 %v2466
      %v2490 = vunpack.c.l.b16 %v2467
      %v2491 = vpack.c.b16 %v2484, %v2483
      %v2492 = vpack.c.b16 %v2486, %v2485
      %v2493 = vpack.c.b16 %v2488, %v2487
      %v2494 = vpack.c.b16 %v2490, %v2489
      %vm2499 = vcmask 523264
      %v2501 = vsel %vm2499, %v2452, 0
      %v2504 = vsel %vm2499, %v2453, 0
      %v2507 = vsel %vm2499, %v2454, 0
      %v2510 = vsel %vm2499, %v2455, 0
      %v2513 = vsel %vm2499, %v2456, 0
      %v2516 = vsel %vm2499, %v2457, 0
      %v2519 = vsel %vm2499, %v2458, 0
      %v2522 = vsel %vm2499, %v2459, 0
      %2524 = vmatprep.subr.bf16.mxu0 0
      %2525 = vmatpush1.bf16.msra.mxu0 %v2491
      %2526 = vmatprep.subr.bf16.mxu0 0
      %2527 = vmatpush1.bf16.msra.mxu0 %v2492
      %2528 = vmatprep.subr.bf16.mxu0 0
      %2529 = vmatpush1.bf16.msra.mxu0 %v2493
      %2530 = vmatprep.subr.bf16.mxu0 0
      %2531 = vmatpush1.bf16.msra.mxu0 %v2494
      %2532 = vmatprep.subr.bf16.mxu0 0
      %2533 = vmatpush1.bf16.msra.mxu0 0
      %2534 = vmatprep.subr.bf16.mxu0 0
      %2535 = vmatpush1.bf16.msra.mxu0 0
      %2536 = vmatprep.subr.bf16.mxu0 0
      %2537 = vmatpush1.bf16.msra.mxu0 0
      %2538 = vmatprep.subr.bf16.mxu0 0
      %2539 = vmatpush1.bf16.msra.mxu0 0
      %2540 = vmatprep.subr.bf16.mxu0 0
      %2541 = vmatpush1.bf16.msra.mxu0 0
      %2542 = vmatprep.subr.bf16.mxu0 0
      %2543 = vmatpush1.bf16.msra.mxu0 0
      %2544 = vmatprep.subr.bf16.mxu0 0
      %2545 = vmatpush1.bf16.msra.mxu0 0
      %2546 = vmatprep.subr.bf16.mxu0 0
      %2547 = vmatpush1.bf16.msra.mxu0 0
      %2548 = vmatprep.subr.bf16.mxu0 0
      %2549 = vmatpush1.bf16.msra.mxu0 0
      %2550 = vmatprep.subr.bf16.mxu0 0
      %2551 = vmatpush1.bf16.msra.mxu0 0
      %2552 = vmatprep.subr.bf16.mxu0 0
      %2553 = vmatpush1.bf16.msra.mxu0 0
      %2554 = vmatprep.subr.bf16.mxu0 0
      %2555 = vmatpush1.bf16.msra.mxu0 0
      %2556 = vmatprep.mubr.bf16.mxu0 0
      %2557 = vmatmul.mubr.bf16.gmra.mrb[0].mxu0 %v2501
      %v2558 = vpop.f32.mrb[0].mxu0
      %v2559 = vadd.f32 %v2473, %v2558
      %v2560 = vpop.f32.mrb[0].mxu0
      %v2561 = vpop.f32.mrb[0].mxu0
      %v2562 = vadd.f32 %v2473, %v2561
      %v2563 = vpop.f32.mrb[0].mxu0
      %2564 = vmatprep.mubr.bf16.mxu0 0
      %2565 = vmatmul.mubr.bf16.gmra.mrb[0].mxu0 %v2504
      %v2566 = vpop.f32.mrb[0].mxu0
      %v2567 = vadd.f32 %v2473, %v2566
      %v2568 = vpop.f32.mrb[0].mxu0
      %v2569 = vpop.f32.mrb[0].mxu0
      %v2570 = vadd.f32 %v2473, %v2569
      %v2571 = vpop.f32.mrb[0].mxu0
      %2572 = vmatprep.mubr.bf16.mxu0 0
      %2573 = vmatmul.mubr.bf16.gmra.mrb[0].mxu0 %v2507
      %v2574 = vpop.f32.mrb[0].mxu0
      %v2575 = vadd.f32 %v2473, %v2574
      %v2576 = vpop.f32.mrb[0].mxu0
      %v2577 = vpop.f32.mrb[0].mxu0
      %v2578 = vadd.f32 %v2473, %v2577
      %v2579 = vpop.f32.mrb[0].mxu0
      %2580 = vmatprep.mubr.bf16.mxu0 0
      %2581 = vmatmul.mubr.bf16.gmra.mrb[0].mxu0 %v2510
      %v2582 = vpop.f32.mrb[0].mxu0
      %v2583 = vadd.f32 %v2473, %v2582
      %v2584 = vpop.f32.mrb[0].mxu0
      %v2585 = vpop.f32.mrb[0].mxu0
      %v2586 = vadd.f32 %v2473, %v2585
      %v2587 = vpop.f32.mrb[0].mxu0
      %2588 = vmatprep.mubr.bf16.mxu0 0
      %2589 = vmatmul.mubr.bf16.gmra.mrb[0].mxu0 %v2513
      %v2590 = vpop.f32.mrb[0].mxu0
      %v2591 = vadd.f32 %v2473, %v2590
      %v2592 = vpop.f32.mrb[0].mxu0
      %v2593 = vpop.f32.mrb[0].mxu0
      %v2594 = vadd.f32 %v2473, %v2593
      %v2595 = vpop.f32.mrb[0].mxu0
      %2596 = vmatprep.mubr.bf16.mxu0 0
      %2597 = vmatmul.mubr.bf16.gmra.mrb[0].mxu0 %v2516
      %v2598 = vpop.f32.mrb[0].mxu0
      %v2599 = vadd.f32 %v2473, %v2598
      %v2600 = vpop.f32.mrb[0].mxu0
      %v2601 = vpop.f32.mrb[0].mxu0
      %v2602 = vadd.f32 %v2473, %v2601
      %v2603 = vpop.f32.mrb[0].mxu0
      %2604 = vmatprep.mubr.bf16.mxu0 0
      %2605 = vmatmul.mubr.bf16.gmra.mrb[0].mxu0 %v2519
      %v2606 = vpop.f32.mrb[0].mxu0
      %v2607 = vadd.f32 %v2473, %v2606
      %v2608 = vpop.f32.mrb[0].mxu0
      %v2609 = vpop.f32.mrb[0].mxu0
      %v2610 = vadd.f32 %v2473, %v2609
      %v2611 = vpop.f32.mrb[0].mxu0
      %2612 = vmatprep.mubr.bf16.mxu0 0
      %2613 = vmatmul.mubr.bf16.gmra.mrb[0].mxu0 %v2522
      %v2614 = vpop.f32.mrb[0].mxu0
      %v2615 = vadd.f32 %v2473, %v2614
      %v2616 = vpop.f32.mrb[0].mxu0
      %v2617 = vpop.f32.mrb[0].mxu0
      %v2618 = vadd.f32 %v2473, %v2617
      %v2619 = vpop.f32.mrb[0].mxu0
      %2620 = vdwg.mxu0
      %v2621 = vadd.f32 %v2559, %v2057
      %v2622 = vadd.f32 %v2562, %v2058
      %v2623 = vadd.f32 %v2567, %v2059
      %v2624 = vadd.f32 %v2570, %v2060
      %v2625 = vadd.f32 %v2575, %v2061
      %v2626 = vadd.f32 %v2578, %v2062
      %v2627 = vadd.f32 %v2583, %v2063
      %v2628 = vadd.f32 %v2586, %v2064
      %v2629 = vadd.f32 %v2591, %v2065
      %v2630 = vadd.f32 %v2594, %v2066
      %v2631 = vadd.f32 %v2599, %v2067
      %v2632 = vadd.f32 %v2602, %v2068
      %v2633 = vadd.f32 %v2607, %v2069
      %v2634 = vadd.f32 %v2610, %v2070
      %v2635 = vadd.f32 %v2615, %v2071
      %v2636 = vadd.f32 %v2618, %v2072
      %vm2637 = vcmask 130048
      %2638 = vst.msk [vmem:[%s431] sm:$0xff] %vm2637, %v2621
      %2639 = vst.msk [vmem:[%s431 + $0x8] sm:$0xff] %vm2637, %v2622
      %2640 = vst.msk [vmem:[%s431 + $0x10] sm:$0xff] %vm2637, %v2623
      %2641 = vst.msk [vmem:[%s431 + $0x18] sm:$0xff] %vm2637, %v2624
      %2642 = vst.msk [vmem:[%s431 + $0x20] sm:$0xff] %vm2637, %v2625
      %2643 = vst.msk [vmem:[%s431 + $0x28] sm:$0xff] %vm2637, %v2626
      %2644 = vst.msk [vmem:[%s431 + $0x30] sm:$0xff] %vm2637, %v2627
      %2645 = vst.msk [vmem:[%s431 + $0x38] sm:$0xff] %vm2637, %v2628
      %2646 = vst.msk [vmem:[%s431 + $0x40] sm:$0xff] %vm2637, %v2629
      %2647 = vst.msk [vmem:[%s431 + $0x48] sm:$0xff] %vm2637, %v2630
      %2648 = vst.msk [vmem:[%s431 + $0x50] sm:$0xff] %vm2637, %v2631
      %2649 = vst.msk [vmem:[%s431 + $0x58] sm:$0xff] %vm2637, %v2632
      %2650 = vst.msk [vmem:[%s431 + $0x60] sm:$0xff] %vm2637, %v2633
      %2651 = vst.msk [vmem:[%s431 + $0x68] sm:$0xff] %vm2637, %v2634
      %2652 = vst.msk [vmem:[%s431 + $0x70] sm:$0xff] %vm2637, %v2635
      %2653 = vst.msk [vmem:[%s431 + $0x78] sm:$0xff] %vm2637, %v2636
      %s2654 = smul.u32 16, %s26
      %p2655 = scmp.lt.s32.totalorder %s25, 1
      %s2656 = scalar_select %p2655, %s25, 1
      %p2657 = scmp.lt.s32.totalorder %s2654, 31
      %s2658 = scalar_select %p2657, %s2654, 31
      %s2659 = smul.addr %s2656, 32
      %s2660 = sadd.s32 %s2658, %s2659
      %s2661 = smul.addr %s2660, 8
      %s2662 = scalar_lea.vmem %s10, %s2661
      // Predicated region
      $region61: #{tpu_custom_call.1} parent=59 // pred_check
        %p2663 = pneg %p279
      $region62: #{tpu_custom_call.1} parent=59 // pred_check_branch
        %2665 = sbr.rel (%p2663) target = $region64
      $region63: #{tpu_custom_call.1} parent=59 // pred_region
        %s2666 = smul.u32 16, %s26
      $region64: #{tpu_custom_call.1} parent=59 // pred_fallthru
        _
    $region60: #{tpu_custom_call.1} parent=5 // pred_fallthru
      _
    %p2667 = scmp.le.s32.totalorder 2, %s16
    // Predicated region
    $region65: #{tpu_custom_call.1} parent=5 // pred_check
      %p2668 = pneg %p2667
    $region66: #{tpu_custom_call.1} parent=5 // pred_check_branch
      %2670 = sbr.rel (%p2668) target = $region68
    $region67: #{tpu_custom_call.1} parent=5 // pred_region
      %s2671 = ssub.s32 %s16, 2
      // Predicated region
      $region69: #{tpu_custom_call.1} parent=67 // pred_check
        %p2672 = pneg %p285
      $region70: #{tpu_custom_call.1} parent=67 // pred_check_branch
        %2674 = sbr.rel (%p2672) target = $region72
      $region71: #{tpu_custom_call.1} parent=67 // pred_region
        %s2675 = smul.u32 16, %s28
        %p2676 = scmp.lt.s32.totalorder %s27, 1
        %s2677 = scalar_select %p2676, %s27, 1
        %p2678 = scmp.lt.s32.totalorder %s2675, 31
        %s2679 = scalar_select %p2678, %s2675, 31
        %s2680 = smul.addr %s2677, 32
        %s2681 = sadd.s32 %s2679, %s2680
        %s2682 = smul.addr %s2681, 8
        %s2683 = scalar_lea.vmem %s10, %s2682
      $region72: #{tpu_custom_call.1} parent=67 // pred_fallthru
        _
    $region68: #{tpu_custom_call.1} parent=5 // pred_fallthru
      _
  $region6: #{tpu_custom_call.1} parent=0 // loop_footer
    %s20 = sadd.s32 1, %s16
  $region7: #{tpu_custom_call.1} parent=0 // loop_footer_branch
    %15 = sbr.rel target = $region3
  $region8: #{tpu_custom_call.1} parent=0 // loop_exit
    _

</llo_original>
